<compile_context>
chip_gen: v5e
topology: v5e:2x2
jax: 0.10.0
libtpu: 0.0.40
codegen_flags: <defaults>
</compile_context>

<pallas_src>
import numpy as np
import jax
import jax.numpy as jnp
from jax.experimental import pallas as pl
from jax.experimental.pallas import tpu as pltpu

EPS = 1e-6               # timm ConvNeXt LayerNorm eps
NUM_CLASSES = 206
NUM_CLASSES_PAD = 256    # lane-dense classifier width (sliced back to 206)
DIMS = (16, 32)          # scaled-down stage dims (convnext_base: 128..1024)
H_IN = W_IN = 32         # input spatial size (divisible by 4*2)
T_PAD = 128              # token axis is always kept 128-lane dense

# ---- packed-parameter layout constants -------------------------------------
# cvec slab: (128, N_CVEC) f32, one per-channel column vector per column
_CV = dict(stem_b=0, stem_g=1, stem_be=2,
           dwb1=3, ln1g=4, ln1b=5, b1b=6, gam1=7,
           dsg=8, dsbe=9, dsb=10,
           dwb2=11, ln2g=12, ln2b=13, b2b=14, gam2=15,
           b1a=16, b2a=17)
_N_CVEC = 18

# const slab: (120, 128) f32 -> dwconv masks + head LN rows + fc bias (split in two rows)
_MASK1_R0, _MASK2_R0 = 0, 56
_HLN_G_R, _HLN_B_R, _FCB_R0 = 112, 113, 114
_CONST_ROWS = 120

# bf16 weight slab: (464, 256); all row offsets are multiples of 16 (bf16 sublane packing)
_R_STEM, _R_W1A, _R_W1B, _R_DSW, _R_SEL, _R_W2A, _R_W2B, _R_POOL, _R_FCW = (
    0, 16, 80, 96, 128, 256, 384, 416, 432)
_W_ROWS = 464


# ----------------------------- in-kernel helpers -----------------------------

def _gelu(x):
    # TODO(synk): PyTorch nn.GELU() is erf-exact; tanh approximation used here.
    c = 0.7978845608028654  # sqrt(2/pi)
    return 0.5 * x * (1.0 + jnp.tanh(c * (x + 0.044715 * x * x * x)))


def _sigmoid(x):
    # numerically stable, routes through the EUP tanh: sigmoid(x) == 0.5*(tanh(x/2)+1)
    return 0.5 * (jnp.tanh(0.5 * x) + 1.0)


def _layernorm(x, g, b):
    """LayerNorm over the last (lane) axis; g/b are (1, C) rows."""
    mu = jnp.mean(x, axis=-1, keepdims=True)
    var = jnp.mean((x - mu) ** 2, axis=-1, keepdims=True)
    return (x - mu) * jax.lax.rsqrt(var + EPS) * g + b


def _layernorm_fm(x, g, b):
    """LayerNorm over the feature (sublane) axis for feature-major (C, T) tiles; g/b (C, 1)."""
    mu = jnp.mean(x, axis=0, keepdims=True)
    var = jnp.mean((x - mu) ** 2, axis=0, keepdims=True)
    return (x - mu) * jax.lax.rsqrt(var + EPS) * g + b


# --------------------------- host-side constant prep --------------------------

def _dw_masks(H, W, t_real, t_pad):
    """(49, t_pad) 0/1 masks: tap (di,dj) valid at token t (real token, in-bounds)."""
    tok = np.arange(t_pad)
    hh = (tok // W) % H
    ww = tok % W
    real = tok < t_real
    m = np.zeros((49, t_pad), np.float32)
    s = 0
    for di in range(-3, 4):
        for dj in range(-3, 4):
            valid = real & (hh + di >= 0) & (hh + di < H) & (ww + dj >= 0) & (ww + dj < W)
            m[s] = valid.astype(np.float32)
            s += 1
    return m


def _subsample_onehot(N, H1, W1, t1_pad, t2_pad):
    """(t1_pad, t2_pad) one-hot: stage-2 token q picks its 2x2-patch top-left corner token."""
    H2, W2 = H1 // 2, W1 // 2
    sel = np.zeros((t1_pad, t2_pad), np.float32)
    for n in range(N):
        for h2 in range(H2):
            for w2 in range(W2):
                q = n * H2 * W2 + h2 * W2 + w2
                t = n * H1 * W1 + (2 * h2) * W1 + (2 * w2)
                sel[t, q] = 1.0
    return sel


def _avgpool_matrix(N, t_img, t_pad):
    """(N, t_pad) per-image mean-pool matrix over the real (un-padded) tokens."""
    m = np.zeros((N, t_pad), np.float32)
    for n in range(N):
        m[n, n * t_img:(n + 1) * t_img] = 1.0 / t_img
    return m


# --------------------------------- fused kernel -------------------------------

def _make_fused_kernel(N, D0, D1, H1, W1, H2, W2, K_PAD):
    HID1, HID2 = 4 * D0, 4 * D1
    bf = jnp.bfloat16

    def kernel(p_ref, cvec_ref, const_ref, dwk_ref, w_ref, o_ref):

        def col(j, c):                      # per-channel column vector (c, 1), f32
            return cvec_ref[0:c, j:j + 1]

        def mm(a, b):                       # bf16 MXU matmul, f32 accumulate
            return jnp.dot(a.astype(bf), b.astype(bf),
                           preferred_element_type=jnp.float32)

        def block(x, C, HID, dwk_r0, mask_r0, w1_r0, w2_r0,
                  dwb_c, lng_c, lnb_c, b1_c, b2_c, gam_c, W):
            """One ConvNeXt block, feature-major (C, 128) layout (tokens on lanes)."""
            # depthwise 7x7 conv (padding=3): 48 lane rolls + precomputed boundary masks
            acc = jnp.zeros_like(x)
            s = 0
            for di in range(-3, 4):
                for dj in range(-3, 4):
                    delta = di * W + dj
                    src = x if delta == 0 else pltpu.roll(x, (-delta) % T_PAD, axis=1)
                    k = dwk_ref[dwk_r0:dwk_r0 + C, s:s + 1]          # (C, 1) tap weight
                    m = const_ref[mask_r0 + s:mask_r0 + s + 1, :]    # (1, T) 0/1 mask
                    acc = acc + src * k * m
                    s += 1
            acc = acc + col(dwb_c, C)
            # channel LN + inverted-bottleneck MLP + layer scale + residual
            xn = _layernorm_fm(acc, col(lng_c, C), col(lnb_c, C))
            hid = _gelu(mm(w_ref[w1_r0:w1_r0 + HID, 0:C], xn) + col(b1_c, HID))
            y = mm(w_ref[w2_r0:w2_r0 + C, 0:HID], hid) + col(b2_c, C)
            return x + col(gam_c, C) * y

        # ---- stem: 4x4/4 patchify conv (one matmul over all tokens) + channel LN
        f = mm(w_ref[_R_STEM:_R_STEM + D0, 0:16], p_ref[...]) + col(_CV["stem_b"], D0)
        f = _layernorm_fm(f, col(_CV["stem_g"], D0), col(_CV["stem_be"], D0))   # (D0, 128)

        # ---- stage 1 ConvNeXt block
        f = block(f, D0, HID1, 0, _MASK1_R0, _R_W1A, _R_W1B,
                  _CV["dwb1"], _CV["ln1g"], _CV["ln1b"], _CV["b1a"], _CV["b1b"],
                  _CV["gam1"], W1)

        # ---- downsample: LN + 2x2/2 conv = 3 rolls + 1 matmul + one-hot stride-2 pick
        fl = _layernorm_fm(f, col(_CV["dsg"], D0), col(_CV["dsbe"], D0))
        stacked = jnp.concatenate(
            [fl] + [pltpu.roll(fl, (T_PAD - d) % T_PAD, axis=1) for d in (1, W1, W1 + 1)],
            axis=0)                                                      # (4*D0, 128)
        conv_all = mm(w_ref[_R_DSW:_R_DSW + D1, 0:4 * D0], stacked)      # (D1, 128)
        x2 = mm(conv_all, w_ref[_R_SEL:_R_SEL + T_PAD, 0:T_PAD]) + col(_CV["dsb"], D1)

        # ---- stage 2 ConvNeXt block (real tokens in lanes [0, N*H2*W2); rest masked)
        x2 = block(x2, D1, HID2, D0, _MASK2_R0, _R_W2A, _R_W2B,
                   _CV["dwb2"], _CV["ln2g"], _CV["ln2b"], _CV["b2a"], _CV["b2b"],
                   _CV["gam2"], W2)

        # ---- head: per-image global average pool + LN + Linear + Sigmoid
        pooled = jax.lax.dot_general(
            w_ref[_R_POOL:_R_POOL + N, 0:T_PAD], x2.astype(bf),
            (((1,), (1,)), ((), ())), preferred_element_type=jnp.float32)   # (N, D1)
        pooled = _layernorm(pooled,
                            const_ref[_HLN_G_R:_HLN_G_R + 1, 0:D1],
                            const_ref[_HLN_B_R:_HLN_B_R + 1, 0:D1])
        fcb = jnp.concatenate([const_ref[_FCB_R0:_FCB_R0 + 1, :],
                               const_ref[_FCB_R0 + 1:_FCB_R0 + 2, :]], axis=1)  # (1, 256)
        logits = mm(pooled, w_ref[_R_FCW:_R_FCW + D1, 0:K_PAD]) + fcb
        o_ref[...] = _sigmoid(logits)                                       # (N, 256)

    return kernel


# ------------------------------- parameters ----------------------------------

def init_params(key):
    keys = iter(jax.random.split(key, 16))

    def nrm(shape, scale=0.02):
        return (scale * jax.random.normal(next(keys), shape)).astype(jnp.float32)

    def block_params(C):
        return dict(
            dwk=nrm((7, 7, C)), dwb=jnp.zeros((C,), jnp.float32),
            ln_g=jnp.ones((C,), jnp.float32), ln_b=jnp.zeros((C,), jnp.float32),
            w1=nrm((C, 4 * C)), b1=jnp.zeros((4 * C,), jnp.float32),
            w2=nrm((4 * C, C)), b2=jnp.zeros((C,), jnp.float32),
            gamma=jnp.full((C,), 1e-6, jnp.float32),   # timm layer-scale init
        )

    D0, D1 = DIMS
    return dict(
        stem_w=nrm((4 * 4 * 1, D0)), stem_b=jnp.zeros((D0,), jnp.float32),
        stem_ln_g=jnp.ones((D0,), jnp.float32), stem_ln_b=jnp.zeros((D0,), jnp.float32),
        blk1=block_params(D0),
        ds_ln_g=jnp.ones((D0,), jnp.float32), ds_ln_b=jnp.zeros((D0,), jnp.float32),
        ds_w=nrm((2 * 2 * D0, D1)), ds_b=jnp.zeros((D1,), jnp.float32),
        blk2=block_params(D1),
        head_ln_g=jnp.ones((D1,), jnp.float32), head_ln_b=jnp.zeros((D1,), jnp.float32),
        fc_w=nrm((D1, NUM_CLASSES)), fc_b=jnp.zeros((NUM_CLASSES,), jnp.float32),
    )


# --------------------------------- forward -----------------------------------

def convnext_bird_forward(x, params):
    # x: (N, 1, 32, 32) NCHW, like the PyTorch module input.
    N = x.shape[0]
    D0, D1 = DIMS
    HID1, HID2 = 4 * D0, 4 * D1
    H1, W1 = H_IN // 4, W_IN // 4            # 8 x 8 after stem
    H2, W2 = H1 // 2, W1 // 2                # 4 x 4 after downsample
    T1 = N * H1 * W1
    T2 = N * H2 * W2
    K_PAD = NUM_CLASSES_PAD
    assert T1 <= T_PAD and T2 <= T_PAD, "batch too large for the fixed 128-lane token layout"

    b1p, b2p = params["blk1"], params["blk2"]

    # ---- wrapper-side layout plumbing only: patchify to feature-major (16, 128)
    p = (x.reshape(N, 1, H1, 4, W1, 4)
           .transpose(0, 2, 4, 3, 5, 1)       # (N, H1, W1, ph, pw, cin)
           .reshape(T1, 16).T)                # (16, T1)
    p = jnp.pad(p, ((0, 0), (0, T_PAD - T1)))

    # ---- packed column-vector slab (every per-channel bias/scale/gamma), f32
    cols = [
        params["stem_b"], params["stem_ln_g"], params["stem_ln_b"],
        b1p["dwb"], b1p["ln_g"], b1p["ln_b"], b1p["b2"], b1p["gamma"],
        params["ds_ln_g"], params["ds_ln_b"], params["ds_b"],
        b2p["dwb"], b2p["ln_g"], b2p["ln_b"], b2p["b2"], b2p["gamma"],
        b1p["b1"], b2p["b1"],
    ]
    assert len(cols) == _N_CVEC
    cvec = jnp.zeros((T_PAD, _N_CVEC), jnp.float32)
    for j, v in enumerate(cols):
        cvec = cvec.at[0:v.shape[0], j].set(v)

    # ---- const slab: precomputed dwconv boundary masks + head LN rows + fc bias
    cs = np.zeros((_CONST_ROWS, T_PAD), np.float32)
    cs[_MASK1_R0:_MASK1_R0 + 49] = _dw_masks(H1, W1, T1, T_PAD)
    cs[_MASK2_R0:_MASK2_R0 + 49] = _dw_masks(H2, W2, T2, T_PAD)
    const_slab = jnp.asarray(cs)
    const_slab = const_slab.at[_HLN_G_R, 0:D1].set(params["head_ln_g"])
    const_slab = const_slab.at[_HLN_B_R, 0:D1].set(params["head_ln_b"])
    fcb = jnp.pad(params["fc_b"], (0, K_PAD - NUM_CLASSES))
    const_slab = const_slab.at[_FCB_R0, :].set(fcb[0:T_PAD])
    const_slab = const_slab.at[_FCB_R0 + 1, :].set(fcb[T_PAD:])

    # ---- depthwise kernels: (C, 49) layout — taps on lanes, channels on sublanes
    dwk = jnp.zeros((D0 + D1, 49), jnp.float32)
    dwk = dwk.at[0:D0, :].set(b1p["dwk"].reshape(49, D0).T)
    dwk = dwk.at[D0:, :].set(b2p["dwk"].reshape(49, D1).T)

    # ---- single bf16 weight slab for every matmul operand
    wsl = jnp.zeros((_W_ROWS, K_PAD), jnp.float32)
    wsl = wsl.at[_R_STEM:_R_STEM + D0, 0:16].set(params["stem_w"].T)
    wsl = wsl.at[_R_W1A:_R_W1A + HID1, 0:D0].set(b1p["w1"].T)
    wsl = wsl.at[_R_W1B:_R_W1B + D0, 0:HID1].set(b1p["w2"].T)
    wsl = wsl.at[_R_DSW:_R_DSW + D1, 0:4 * D0].set(params["ds_w"].T)
    wsl = wsl.at[_R_SEL:_R_SEL + T_PAD, 0:T_PAD].set(
        jnp.asarray(_subsample_onehot(N, H1, W1, T_PAD, T_PAD)))
    wsl = wsl.at[_R_W2A:_R_W2A + HID2, 0:D1].set(b2p["w1"].T)
    wsl = wsl.at[_R_W2B:_R_W2B + D1, 0:HID2].set(b2p["w2"].T)
    wsl = wsl.at[_R_POOL:_R_POOL + N, 0:T_PAD].set(
        jnp.asarray(_avgpool_matrix(N, H2 * W2, T_PAD)))
    wsl = wsl.at[_R_FCW:_R_FCW + D1, 0:NUM_CLASSES].set(params["fc_w"])
    w_slab = wsl.astype(jnp.bfloat16)

    kernel = _make_fused_kernel(N, D0, D1, H1, W1, H2, W2, K_PAD)

    # Single grid-less call: every packed input lives whole in VMEM (no double-buffering).
    out = pl.pallas_call(
        kernel,
        out_shape=jax.ShapeDtypeStruct((N, K_PAD), jnp.float32),
    )(p, cvec, const_slab, dwk, w_slab)

    return out[:, :NUM_CLASSES]                # (N, 206) in [0, 1]


# ----------------------------------- main -------------------------------------

if __name__ == "__main__":
    key = jax.random.PRNGKey(0)
    kx, kp = jax.random.split(key)
    x = jax.random.normal(kx, (2, 1, H_IN, W_IN), dtype=jnp.float32)
    params = init_params(kp)

    out = jax.jit(convnext_bird_forward)(x, params)
    out = jax.block_until_ready(out)

    assert out.shape == (2, NUM_CLASSES), out.shape
    assert bool(jnp.all(jnp.isfinite(out)))
    assert bool(jnp.all((out >= 0.0) & (out <= 1.0)))
    print("KERNEL_OK")
</pallas_src>

<mosaic_0001>
module attributes {stable_mosaic.version = 11 : i64} {
  func.func @kernel(%arg0: memref<16x128xf32, #tpu.memory_space<vmem>>, %arg1: memref<128x18xf32, #tpu.memory_space<vmem>>, %arg2: memref<120x128xf32, #tpu.memory_space<vmem>>, %arg3: memref<48x49xf32, #tpu.memory_space<vmem>>, %arg4: memref<464x256xbf16, #tpu.memory_space<vmem>>, %arg5: memref<2x256xf32, #tpu.memory_space<vmem>>) attributes {dimension_semantics = [], scalar_prefetch = 0 : i64, scratch_operands = 0 : i64, tpu.core_type = #tpu.core_type<tc>} {
    %c0 = arith.constant 0 : index
    %c0_0 = arith.constant 0 : index
    %0 = vector.load %arg4[%c0, %c0_0] : memref<464x256xbf16, #tpu.memory_space<vmem>>, vector<16x16xbf16>
    %c0_1 = arith.constant 0 : index
    %c0_2 = arith.constant 0 : index
    %1 = vector.load %arg0[%c0_1, %c0_2] : memref<16x128xf32, #tpu.memory_space<vmem>>, vector<16x128xf32>
    %2 = arith.truncf %1 : vector<16x128xf32> to vector<16x128xbf16>
    %cst = arith.constant dense<0.000000e+00> : vector<16x128xf32>
    %3 = tpu.matmul %0, %2, %cst {dimension_numbers = #tpu.dot_dimension_numbers<[1], [0], [0], [1], [0, 0, 1, 1], [], []>} : vector<16x16xbf16>, vector<16x128xbf16>, vector<16x128xf32> -> vector<16x128xf32>
    %c0_3 = arith.constant 0 : index
    %c0_4 = arith.constant 0 : index
    %4 = vector.load %arg1[%c0_3, %c0_4] : memref<128x18xf32, #tpu.memory_space<vmem>>, vector<16x1xf32>
    %5 = vector.broadcast %4 : vector<16x1xf32> to vector<16x128xf32>
    %6 = arith.addf %3, %5 : vector<16x128xf32>
    %c0_5 = arith.constant 0 : index
    %c1 = arith.constant 1 : index
    %7 = vector.load %arg1[%c0_5, %c1] : memref<128x18xf32, #tpu.memory_space<vmem>>, vector<16x1xf32>
    %c0_6 = arith.constant 0 : index
    %c2 = arith.constant 2 : index
    %8 = vector.load %arg1[%c0_6, %c2] : memref<128x18xf32, #tpu.memory_space<vmem>>, vector<16x1xf32>
    %cst_7 = arith.constant dense<0.000000e+00> : vector<128xf32>
    %9 = vector.multi_reduction <add>, %6, %cst_7 [0] : vector<16x128xf32> to vector<128xf32>
    %10 = vector.shape_cast %9 : vector<128xf32> to vector<1x128xf32>
    %cst_8 = arith.constant 1.600000e+01 : f32
    %11 = vector.broadcast %cst_8 : f32 to vector<1x128xf32>
    %12 = arith.divf %10, %11 : vector<1x128xf32>
    %13 = vector.broadcast %12 : vector<1x128xf32> to vector<16x128xf32>
    %14 = arith.subf %6, %13 : vector<16x128xf32>
    %15 = arith.mulf %14, %14 : vector<16x128xf32>
    %cst_9 = arith.constant dense<0.000000e+00> : vector<128xf32>
    %16 = vector.multi_reduction <add>, %15, %cst_9 [0] : vector<16x128xf32> to vector<128xf32>
    %17 = vector.shape_cast %16 : vector<128xf32> to vector<1x128xf32>
    %cst_10 = arith.constant 1.600000e+01 : f32
    %18 = vector.broadcast %cst_10 : f32 to vector<1x128xf32>
    %19 = arith.divf %17, %18 : vector<1x128xf32>
    %20 = vector.broadcast %12 : vector<1x128xf32> to vector<16x128xf32>
    %21 = arith.subf %6, %20 : vector<16x128xf32>
    %cst_11 = arith.constant 9.99999997E-7 : f32
    %22 = vector.broadcast %cst_11 : f32 to vector<1x128xf32>
    %23 = arith.addf %19, %22 : vector<1x128xf32>
    %24 = math.rsqrt %23 : vector<1x128xf32>
    %25 = vector.broadcast %24 : vector<1x128xf32> to vector<16x128xf32>
    %26 = arith.mulf %21, %25 : vector<16x128xf32>
    %27 = vector.broadcast %7 : vector<16x1xf32> to vector<16x128xf32>
    %28 = arith.mulf %26, %27 : vector<16x128xf32>
    %29 = vector.broadcast %8 : vector<16x1xf32> to vector<16x128xf32>
    %30 = arith.addf %28, %29 : vector<16x128xf32>
    %cst_12 = arith.constant 0.000000e+00 : f32
    %31 = vector.broadcast %cst_12 : f32 to vector<16x128xf32>
    %c27_i32 = arith.constant 27 : i32
    %32 = tpu.dynamic_rotate %30 by %c27_i32 dim 1 : vector<16x128xf32>, i32 -> vector<16x128xf32>
    %c0_13 = arith.constant 0 : index
    %c0_14 = arith.constant 0 : index
    %33 = vector.load %arg3[%c0_13, %c0_14] : memref<48x49xf32, #tpu.memory_space<vmem>>, vector<16x1xf32>
    %c0_15 = arith.constant 0 : index
    %c0_16 = arith.constant 0 : index
    %34 = vector.load %arg2[%c0_15, %c0_16] : memref<120x128xf32, #tpu.memory_space<vmem>>, vector<1x128xf32>
    %35 = vector.broadcast %33 : vector<16x1xf32> to vector<16x128xf32>
    %36 = arith.mulf %32, %35 : vector<16x128xf32>
    %37 = vector.broadcast %34 : vector<1x128xf32> to vector<16x128xf32>
    %38 = arith.mulf %36, %37 : vector<16x128xf32>
    %39 = arith.addf %31, %38 : vector<16x128xf32>
    %c26_i32 = arith.constant 26 : i32
    %40 = tpu.dynamic_rotate %30 by %c26_i32 dim 1 : vector<16x128xf32>, i32 -> vector<16x128xf32>
    %c0_17 = arith.constant 0 : index
    %c1_18 = arith.constant 1 : index
    %41 = vector.load %arg3[%c0_17, %c1_18] : memref<48x49xf32, #tpu.memory_space<vmem>>, vector<16x1xf32>
    %c1_19 = arith.constant 1 : index
    %c0_20 = arith.constant 0 : index
    %42 = vector.load %arg2[%c1_19, %c0_20] : memref<120x128xf32, #tpu.memory_space<vmem>>, vector<1x128xf32>
    %43 = vector.broadcast %41 : vector<16x1xf32> to vector<16x128xf32>
    %44 = arith.mulf %40, %43 : vector<16x128xf32>
    %45 = vector.broadcast %42 : vector<1x128xf32> to vector<16x128xf32>
    %46 = arith.mulf %44, %45 : vector<16x128xf32>
    %47 = arith.addf %39, %46 : vector<16x128xf32>
    %c25_i32 = arith.constant 25 : i32
    %48 = tpu.dynamic_rotate %30 by %c25_i32 dim 1 : vector<16x128xf32>, i32 -> vector<16x128xf32>
    %c0_21 = arith.constant 0 : index
    %c2_22 = arith.constant 2 : index
    %49 = vector.load %arg3[%c0_21, %c2_22] : memref<48x49xf32, #tpu.memory_space<vmem>>, vector<16x1xf32>
    %c2_23 = arith.constant 2 : index
    %c0_24 = arith.constant 0 : index
    %50 = vector.load %arg2[%c2_23, %c0_24] : memref<120x128xf32, #tpu.memory_space<vmem>>, vector<1x128xf32>
    %51 = vector.broadcast %49 : vector<16x1xf32> to vector<16x128xf32>
    %52 = arith.mulf %48, %51 : vector<16x128xf32>
    %53 = vector.broadcast %50 : vector<1x128xf32> to vector<16x128xf32>
    %54 = arith.mulf %52, %53 : vector<16x128xf32>
    %55 = arith.addf %47, %54 : vector<16x128xf32>
    %c24_i32 = arith.constant 24 : i32
    %56 = tpu.dynamic_rotate %30 by %c24_i32 dim 1 : vector<16x128xf32>, i32 -> vector<16x128xf32>
    %c0_25 = arith.constant 0 : index
    %c3 = arith.constant 3 : index
    %57 = vector.load %arg3[%c0_25, %c3] : memref<48x49xf32, #tpu.memory_space<vmem>>, vector<16x1xf32>
    %c3_26 = arith.constant 3 : index
    %c0_27 = arith.constant 0 : index
    %58 = vector.load %arg2[%c3_26, %c0_27] : memref<120x128xf32, #tpu.memory_space<vmem>>, vector<1x128xf32>
    %59 = vector.broadcast %57 : vector<16x1xf32> to vector<16x128xf32>
    %60 = arith.mulf %56, %59 : vector<16x128xf32>
    %61 = vector.broadcast %58 : vector<1x128xf32> to vector<16x128xf32>
    %62 = arith.mulf %60, %61 : vector<16x128xf32>
    %63 = arith.addf %55, %62 : vector<16x128xf32>
    %c23_i32 = arith.constant 23 : i32
    %64 = tpu.dynamic_rotate %30 by %c23_i32 dim 1 : vector<16x128xf32>, i32 -> vector<16x128xf32>
    %c0_28 = arith.constant 0 : index
    %c4 = arith.constant 4 : index
    %65 = vector.load %arg3[%c0_28, %c4] : memref<48x49xf32, #tpu.memory_space<vmem>>, vector<16x1xf32>
    %c4_29 = arith.constant 4 : index
    %c0_30 = arith.constant 0 : index
    %66 = vector.load %arg2[%c4_29, %c0_30] : memref<120x128xf32, #tpu.memory_space<vmem>>, vector<1x128xf32>
    %67 = vector.broadcast %65 : vector<16x1xf32> to vector<16x128xf32>
    %68 = arith.mulf %64, %67 : vector<16x128xf32>
    %69 = vector.broadcast %66 : vector<1x128xf32> to vector<16x128xf32>
    %70 = arith.mulf %68, %69 : vector<16x128xf32>
    %71 = arith.addf %63, %70 : vector<16x128xf32>
    %c22_i32 = arith.constant 22 : i32
    %72 = tpu.dynamic_rotate %30 by %c22_i32 dim 1 : vector<16x128xf32>, i32 -> vector<16x128xf32>
    %c0_31 = arith.constant 0 : index
    %c5 = arith.constant 5 : index
    %73 = vector.load %arg3[%c0_31, %c5] : memref<48x49xf32, #tpu.memory_space<vmem>>, vector<16x1xf32>
    %c5_32 = arith.constant 5 : index
    %c0_33 = arith.constant 0 : index
    %74 = vector.load %arg2[%c5_32, %c0_33] : memref<120x128xf32, #tpu.memory_space<vmem>>, vector<1x128xf32>
    %75 = vector.broadcast %73 : vector<16x1xf32> to vector<16x128xf32>
    %76 = arith.mulf %72, %75 : vector<16x128xf32>
    %77 = vector.broadcast %74 : vector<1x128xf32> to vector<16x128xf32>
    %78 = arith.mulf %76, %77 : vector<16x128xf32>
    %79 = arith.addf %71, %78 : vector<16x128xf32>
    %c21_i32 = arith.constant 21 : i32
    %80 = tpu.dynamic_rotate %30 by %c21_i32 dim 1 : vector<16x128xf32>, i32 -> vector<16x128xf32>
    %c0_34 = arith.constant 0 : index
    %c6 = arith.constant 6 : index
    %81 = vector.load %arg3[%c0_34, %c6] : memref<48x49xf32, #tpu.memory_space<vmem>>, vector<16x1xf32>
    %c6_35 = arith.constant 6 : index
    %c0_36 = arith.constant 0 : index
    %82 = vector.load %arg2[%c6_35, %c0_36] : memref<120x128xf32, #tpu.memory_space<vmem>>, vector<1x128xf32>
    %83 = vector.broadcast %81 : vector<16x1xf32> to vector<16x128xf32>
    %84 = arith.mulf %80, %83 : vector<16x128xf32>
    %85 = vector.broadcast %82 : vector<1x128xf32> to vector<16x128xf32>
    %86 = arith.mulf %84, %85 : vector<16x128xf32>
    %87 = arith.addf %79, %86 : vector<16x128xf32>
    %c19_i32 = arith.constant 19 : i32
    %88 = tpu.dynamic_rotate %30 by %c19_i32 dim 1 : vector<16x128xf32>, i32 -> vector<16x128xf32>
    %c0_37 = arith.constant 0 : index
    %c7 = arith.constant 7 : index
    %89 = vector.load %arg3[%c0_37, %c7] : memref<48x49xf32, #tpu.memory_space<vmem>>, vector<16x1xf32>
    %c7_38 = arith.constant 7 : index
    %c0_39 = arith.constant 0 : index
    %90 = vector.load %arg2[%c7_38, %c0_39] : memref<120x128xf32, #tpu.memory_space<vmem>>, vector<1x128xf32>
    %91 = vector.broadcast %89 : vector<16x1xf32> to vector<16x128xf32>
    %92 = arith.mulf %88, %91 : vector<16x128xf32>
    %93 = vector.broadcast %90 : vector<1x128xf32> to vector<16x128xf32>
    %94 = arith.mulf %92, %93 : vector<16x128xf32>
    %95 = arith.addf %87, %94 : vector<16x128xf32>
    %c18_i32 = arith.constant 18 : i32
    %96 = tpu.dynamic_rotate %30 by %c18_i32 dim 1 : vector<16x128xf32>, i32 -> vector<16x128xf32>
    %c0_40 = arith.constant 0 : index
    %c8 = arith.constant 8 : index
    %97 = vector.load %arg3[%c0_40, %c8] : memref<48x49xf32, #tpu.memory_space<vmem>>, vector<16x1xf32>
    %c8_41 = arith.constant 8 : index
    %c0_42 = arith.constant 0 : index
    %98 = vector.load %arg2[%c8_41, %c0_42] : memref<120x128xf32, #tpu.memory_space<vmem>>, vector<1x128xf32>
    %99 = vector.broadcast %97 : vector<16x1xf32> to vector<16x128xf32>
    %100 = arith.mulf %96, %99 : vector<16x128xf32>
    %101 = vector.broadcast %98 : vector<1x128xf32> to vector<16x128xf32>
    %102 = arith.mulf %100, %101 : vector<16x128xf32>
    %103 = arith.addf %95, %102 : vector<16x128xf32>
    %c17_i32 = arith.constant 17 : i32
    %104 = tpu.dynamic_rotate %30 by %c17_i32 dim 1 : vector<16x128xf32>, i32 -> vector<16x128xf32>
    %c0_43 = arith.constant 0 : index
    %c9 = arith.constant 9 : index
    %105 = vector.load %arg3[%c0_43, %c9] : memref<48x49xf32, #tpu.memory_space<vmem>>, vector<16x1xf32>
    %c9_44 = arith.constant 9 : index
    %c0_45 = arith.constant 0 : index
    %106 = vector.load %arg2[%c9_44, %c0_45] : memref<120x128xf32, #tpu.memory_space<vmem>>, vector<1x128xf32>
    %107 = vector.broadcast %105 : vector<16x1xf32> to vector<16x128xf32>
    %108 = arith.mulf %104, %107 : vector<16x128xf32>
    %109 = vector.broadcast %106 : vector<1x128xf32> to vector<16x128xf32>
    %110 = arith.mulf %108, %109 : vector<16x128xf32>
    %111 = arith.addf %103, %110 : vector<16x128xf32>
    %c16_i32 = arith.constant 16 : i32
    %112 = tpu.dynamic_rotate %30 by %c16_i32 dim 1 : vector<16x128xf32>, i32 -> vector<16x128xf32>
    %c0_46 = arith.constant 0 : index
    %c10 = arith.constant 10 : index
    %113 = vector.load %arg3[%c0_46, %c10] : memref<48x49xf32, #tpu.memory_space<vmem>>, vector<16x1xf32>
    %c10_47 = arith.constant 10 : index
    %c0_48 = arith.constant 0 : index
    %114 = vector.load %arg2[%c10_47, %c0_48] : memref<120x128xf32, #tpu.memory_space<vmem>>, vector<1x128xf32>
    %115 = vector.broadcast %113 : vector<16x1xf32> to vector<16x128xf32>
    %116 = arith.mulf %112, %115 : vector<16x128xf32>
    %117 = vector.broadcast %114 : vector<1x128xf32> to vector<16x128xf32>
    %118 = arith.mulf %116, %117 : vector<16x128xf32>
    %119 = arith.addf %111, %118 : vector<16x128xf32>
    %c15_i32 = arith.constant 15 : i32
    %120 = tpu.dynamic_rotate %30 by %c15_i32 dim 1 : vector<16x128xf32>, i32 -> vector<16x128xf32>
    %c0_49 = arith.constant 0 : index
    %c11 = arith.constant 11 : index
    %121 = vector.load %arg3[%c0_49, %c11] : memref<48x49xf32, #tpu.memory_space<vmem>>, vector<16x1xf32>
    %c11_50 = arith.constant 11 : index
    %c0_51 = arith.constant 0 : index
    %122 = vector.load %arg2[%c11_50, %c0_51] : memref<120x128xf32, #tpu.memory_space<vmem>>, vector<1x128xf32>
    %123 = vector.broadcast %121 : vector<16x1xf32> to vector<16x128xf32>
    %124 = arith.mulf %120, %123 : vector<16x128xf32>
    %125 = vector.broadcast %122 : vector<1x128xf32> to vector<16x128xf32>
    %126 = arith.mulf %124, %125 : vector<16x128xf32>
    %127 = arith.addf %119, %126 : vector<16x128xf32>
    %c14_i32 = arith.constant 14 : i32
    %128 = tpu.dynamic_rotate %30 by %c14_i32 dim 1 : vector<16x128xf32>, i32 -> vector<16x128xf32>
    %c0_52 = arith.constant 0 : index
    %c12 = arith.constant 12 : index
    %129 = vector.load %arg3[%c0_52, %c12] : memref<48x49xf32, #tpu.memory_space<vmem>>, vector<16x1xf32>
    %c12_53 = arith.constant 12 : index
    %c0_54 = arith.constant 0 : index
    %130 = vector.load %arg2[%c12_53, %c0_54] : memref<120x128xf32, #tpu.memory_space<vmem>>, vector<1x128xf32>
    %131 = vector.broadcast %129 : vector<16x1xf32> to vector<16x128xf32>
    %132 = arith.mulf %128, %131 : vector<16x128xf32>
    %133 = vector.broadcast %130 : vector<1x128xf32> to vector<16x128xf32>
    %134 = arith.mulf %132, %133 : vector<16x128xf32>
    %135 = arith.addf %127, %134 : vector<16x128xf32>
    %c13_i32 = arith.constant 13 : i32
    %136 = tpu.dynamic_rotate %30 by %c13_i32 dim 1 : vector<16x128xf32>, i32 -> vector<16x128xf32>
    %c0_55 = arith.constant 0 : index
    %c13 = arith.constant 13 : index
    %137 = vector.load %arg3[%c0_55, %c13] : memref<48x49xf32, #tpu.memory_space<vmem>>, vector<16x1xf32>
    %c13_56 = arith.constant 13 : index
    %c0_57 = arith.constant 0 : index
    %138 = vector.load %arg2[%c13_56, %c0_57] : memref<120x128xf32, #tpu.memory_space<vmem>>, vector<1x128xf32>
    %139 = vector.broadcast %137 : vector<16x1xf32> to vector<16x128xf32>
    %140 = arith.mulf %136, %139 : vector<16x128xf32>
    %141 = vector.broadcast %138 : vector<1x128xf32> to vector<16x128xf32>
    %142 = arith.mulf %140, %141 : vector<16x128xf32>
    %143 = arith.addf %135, %142 : vector<16x128xf32>
    %c11_i32 = arith.constant 11 : i32
    %144 = tpu.dynamic_rotate %30 by %c11_i32 dim 1 : vector<16x128xf32>, i32 -> vector<16x128xf32>
    %c0_58 = arith.constant 0 : index
    %c14 = arith.constant 14 : index
    %145 = vector.load %arg3[%c0_58, %c14] : memref<48x49xf32, #tpu.memory_space<vmem>>, vector<16x1xf32>
    %c14_59 = arith.constant 14 : index
    %c0_60 = arith.constant 0 : index
    %146 = vector.load %arg2[%c14_59, %c0_60] : memref<120x128xf32, #tpu.memory_space<vmem>>, vector<1x128xf32>
    %147 = vector.broadcast %145 : vector<16x1xf32> to vector<16x128xf32>
    %148 = arith.mulf %144, %147 : vector<16x128xf32>
    %149 = vector.broadcast %146 : vector<1x128xf32> to vector<16x128xf32>
    %150 = arith.mulf %148, %149 : vector<16x128xf32>
    %151 = arith.addf %143, %150 : vector<16x128xf32>
    %c10_i32 = arith.constant 10 : i32
    %152 = tpu.dynamic_rotate %30 by %c10_i32 dim 1 : vector<16x128xf32>, i32 -> vector<16x128xf32>
    %c0_61 = arith.constant 0 : index
    %c15 = arith.constant 15 : index
    %153 = vector.load %arg3[%c0_61, %c15] : memref<48x49xf32, #tpu.memory_space<vmem>>, vector<16x1xf32>
    %c15_62 = arith.constant 15 : index
    %c0_63 = arith.constant 0 : index
    %154 = vector.load %arg2[%c15_62, %c0_63] : memref<120x128xf32, #tpu.memory_space<vmem>>, vector<1x128xf32>
    %155 = vector.broadcast %153 : vector<16x1xf32> to vector<16x128xf32>
    %156 = arith.mulf %152, %155 : vector<16x128xf32>
    %157 = vector.broadcast %154 : vector<1x128xf32> to vector<16x128xf32>
    %158 = arith.mulf %156, %157 : vector<16x128xf32>
    %159 = arith.addf %151, %158 : vector<16x128xf32>
    %c9_i32 = arith.constant 9 : i32
    %160 = tpu.dynamic_rotate %30 by %c9_i32 dim 1 : vector<16x128xf32>, i32 -> vector<16x128xf32>
    %c0_64 = arith.constant 0 : index
    %c16 = arith.constant 16 : index
    %161 = vector.load %arg3[%c0_64, %c16] : memref<48x49xf32, #tpu.memory_space<vmem>>, vector<16x1xf32>
    %c16_65 = arith.constant 16 : index
    %c0_66 = arith.constant 0 : index
    %162 = vector.load %arg2[%c16_65, %c0_66] : memref<120x128xf32, #tpu.memory_space<vmem>>, vector<1x128xf32>
    %163 = vector.broadcast %161 : vector<16x1xf32> to vector<16x128xf32>
    %164 = arith.mulf %160, %163 : vector<16x128xf32>
    %165 = vector.broadcast %162 : vector<1x128xf32> to vector<16x128xf32>
    %166 = arith.mulf %164, %165 : vector<16x128xf32>
    %167 = arith.addf %159, %166 : vector<16x128xf32>
    %c8_i32 = arith.constant 8 : i32
    %168 = tpu.dynamic_rotate %30 by %c8_i32 dim 1 : vector<16x128xf32>, i32 -> vector<16x128xf32>
    %c0_67 = arith.constant 0 : index
    %c17 = arith.constant 17 : index
    %169 = vector.load %arg3[%c0_67, %c17] : memref<48x49xf32, #tpu.memory_space<vmem>>, vector<16x1xf32>
    %c17_68 = arith.constant 17 : index
    %c0_69 = arith.constant 0 : index
    %170 = vector.load %arg2[%c17_68, %c0_69] : memref<120x128xf32, #tpu.memory_space<vmem>>, vector<1x128xf32>
    %171 = vector.broadcast %169 : vector<16x1xf32> to vector<16x128xf32>
    %172 = arith.mulf %168, %171 : vector<16x128xf32>
    %173 = vector.broadcast %170 : vector<1x128xf32> to vector<16x128xf32>
    %174 = arith.mulf %172, %173 : vector<16x128xf32>
    %175 = arith.addf %167, %174 : vector<16x128xf32>
    %c7_i32 = arith.constant 7 : i32
    %176 = tpu.dynamic_rotate %30 by %c7_i32 dim 1 : vector<16x128xf32>, i32 -> vector<16x128xf32>
    %c0_70 = arith.constant 0 : index
    %c18 = arith.constant 18 : index
    %177 = vector.load %arg3[%c0_70, %c18] : memref<48x49xf32, #tpu.memory_space<vmem>>, vector<16x1xf32>
    %c18_71 = arith.constant 18 : index
    %c0_72 = arith.constant 0 : index
    %178 = vector.load %arg2[%c18_71, %c0_72] : memref<120x128xf32, #tpu.memory_space<vmem>>, vector<1x128xf32>
    %179 = vector.broadcast %177 : vector<16x1xf32> to vector<16x128xf32>
    %180 = arith.mulf %176, %179 : vector<16x128xf32>
    %181 = vector.broadcast %178 : vector<1x128xf32> to vector<16x128xf32>
    %182 = arith.mulf %180, %181 : vector<16x128xf32>
    %183 = arith.addf %175, %182 : vector<16x128xf32>
    %c6_i32 = arith.constant 6 : i32
    %184 = tpu.dynamic_rotate %30 by %c6_i32 dim 1 : vector<16x128xf32>, i32 -> vector<16x128xf32>
    %c0_73 = arith.constant 0 : index
    %c19 = arith.constant 19 : index
    %185 = vector.load %arg3[%c0_73, %c19] : memref<48x49xf32, #tpu.memory_space<vmem>>, vector<16x1xf32>
    %c19_74 = arith.constant 19 : index
    %c0_75 = arith.constant 0 : index
    %186 = vector.load %arg2[%c19_74, %c0_75] : memref<120x128xf32, #tpu.memory_space<vmem>>, vector<1x128xf32>
    %187 = vector.broadcast %185 : vector<16x1xf32> to vector<16x128xf32>
    %188 = arith.mulf %184, %187 : vector<16x128xf32>
    %189 = vector.broadcast %186 : vector<1x128xf32> to vector<16x128xf32>
    %190 = arith.mulf %188, %189 : vector<16x128xf32>
    %191 = arith.addf %183, %190 : vector<16x128xf32>
    %c5_i32 = arith.constant 5 : i32
    %192 = tpu.dynamic_rotate %30 by %c5_i32 dim 1 : vector<16x128xf32>, i32 -> vector<16x128xf32>
    %c0_76 = arith.constant 0 : index
    %c20 = arith.constant 20 : index
    %193 = vector.load %arg3[%c0_76, %c20] : memref<48x49xf32, #tpu.memory_space<vmem>>, vector<16x1xf32>
    %c20_77 = arith.constant 20 : index
    %c0_78 = arith.constant 0 : index
    %194 = vector.load %arg2[%c20_77, %c0_78] : memref<120x128xf32, #tpu.memory_space<vmem>>, vector<1x128xf32>
    %195 = vector.broadcast %193 : vector<16x1xf32> to vector<16x128xf32>
    %196 = arith.mulf %192, %195 : vector<16x128xf32>
    %197 = vector.broadcast %194 : vector<1x128xf32> to vector<16x128xf32>
    %198 = arith.mulf %196, %197 : vector<16x128xf32>
    %199 = arith.addf %191, %198 : vector<16x128xf32>
    %c3_i32 = arith.constant 3 : i32
    %200 = tpu.dynamic_rotate %30 by %c3_i32 dim 1 : vector<16x128xf32>, i32 -> vector<16x128xf32>
    %c0_79 = arith.constant 0 : index
    %c21 = arith.constant 21 : index
    %201 = vector.load %arg3[%c0_79, %c21] : memref<48x49xf32, #tpu.memory_space<vmem>>, vector<16x1xf32>
    %c21_80 = arith.constant 21 : index
    %c0_81 = arith.constant 0 : index
    %202 = vector.load %arg2[%c21_80, %c0_81] : memref<120x128xf32, #tpu.memory_space<vmem>>, vector<1x128xf32>
    %203 = vector.broadcast %201 : vector<16x1xf32> to vector<16x128xf32>
    %204 = arith.mulf %200, %203 : vector<16x128xf32>
    %205 = vector.broadcast %202 : vector<1x128xf32> to vector<16x128xf32>
    %206 = arith.mulf %204, %205 : vector<16x128xf32>
    %207 = arith.addf %199, %206 : vector<16x128xf32>
    %c2_i32 = arith.constant 2 : i32
    %208 = tpu.dynamic_rotate %30 by %c2_i32 dim 1 : vector<16x128xf32>, i32 -> vector<16x128xf32>
    %c0_82 = arith.constant 0 : index
    %c22 = arith.constant 22 : index
    %209 = vector.load %arg3[%c0_82, %c22] : memref<48x49xf32, #tpu.memory_space<vmem>>, vector<16x1xf32>
    %c22_83 = arith.constant 22 : index
    %c0_84 = arith.constant 0 : index
    %210 = vector.load %arg2[%c22_83, %c0_84] : memref<120x128xf32, #tpu.memory_space<vmem>>, vector<1x128xf32>
    %211 = vector.broadcast %209 : vector<16x1xf32> to vector<16x128xf32>
    %212 = arith.mulf %208, %211 : vector<16x128xf32>
    %213 = vector.broadcast %210 : vector<1x128xf32> to vector<16x128xf32>
    %214 = arith.mulf %212, %213 : vector<16x128xf32>
    %215 = arith.addf %207, %214 : vector<16x128xf32>
    %c1_i32 = arith.constant 1 : i32
    %216 = tpu.dynamic_rotate %30 by %c1_i32 dim 1 : vector<16x128xf32>, i32 -> vector<16x128xf32>
    %c0_85 = arith.constant 0 : index
    %c23 = arith.constant 23 : index
    %217 = vector.load %arg3[%c0_85, %c23] : memref<48x49xf32, #tpu.memory_space<vmem>>, vector<16x1xf32>
    %c23_86 = arith.constant 23 : index
    %c0_87 = arith.constant 0 : index
    %218 = vector.load %arg2[%c23_86, %c0_87] : memref<120x128xf32, #tpu.memory_space<vmem>>, vector<1x128xf32>
    %219 = vector.broadcast %217 : vector<16x1xf32> to vector<16x128xf32>
    %220 = arith.mulf %216, %219 : vector<16x128xf32>
    %221 = vector.broadcast %218 : vector<1x128xf32> to vector<16x128xf32>
    %222 = arith.mulf %220, %221 : vector<16x128xf32>
    %223 = arith.addf %215, %222 : vector<16x128xf32>
    %c0_88 = arith.constant 0 : index
    %c24 = arith.constant 24 : index
    %224 = vector.load %arg3[%c0_88, %c24] : memref<48x49xf32, #tpu.memory_space<vmem>>, vector<16x1xf32>
    %c24_89 = arith.constant 24 : index
    %c0_90 = arith.constant 0 : index
    %225 = vector.load %arg2[%c24_89, %c0_90] : memref<120x128xf32, #tpu.memory_space<vmem>>, vector<1x128xf32>
    %226 = vector.broadcast %224 : vector<16x1xf32> to vector<16x128xf32>
    %227 = arith.mulf %30, %226 : vector<16x128xf32>
    %228 = vector.broadcast %225 : vector<1x128xf32> to vector<16x128xf32>
    %229 = arith.mulf %227, %228 : vector<16x128xf32>
    %230 = arith.addf %223, %229 : vector<16x128xf32>
    %c127_i32 = arith.constant 127 : i32
    %231 = tpu.dynamic_rotate %30 by %c127_i32 dim 1 : vector<16x128xf32>, i32 -> vector<16x128xf32>
    %c0_91 = arith.constant 0 : index
    %c25 = arith.constant 25 : index
    %232 = vector.load %arg3[%c0_91, %c25] : memref<48x49xf32, #tpu.memory_space<vmem>>, vector<16x1xf32>
    %c25_92 = arith.constant 25 : index
    %c0_93 = arith.constant 0 : index
    %233 = vector.load %arg2[%c25_92, %c0_93] : memref<120x128xf32, #tpu.memory_space<vmem>>, vector<1x128xf32>
    %234 = vector.broadcast %232 : vector<16x1xf32> to vector<16x128xf32>
    %235 = arith.mulf %231, %234 : vector<16x128xf32>
    %236 = vector.broadcast %233 : vector<1x128xf32> to vector<16x128xf32>
    %237 = arith.mulf %235, %236 : vector<16x128xf32>
    %238 = arith.addf %230, %237 : vector<16x128xf32>
    %c126_i32 = arith.constant 126 : i32
    %239 = tpu.dynamic_rotate %30 by %c126_i32 dim 1 : vector<16x128xf32>, i32 -> vector<16x128xf32>
    %c0_94 = arith.constant 0 : index
    %c26 = arith.constant 26 : index
    %240 = vector.load %arg3[%c0_94, %c26] : memref<48x49xf32, #tpu.memory_space<vmem>>, vector<16x1xf32>
    %c26_95 = arith.constant 26 : index
    %c0_96 = arith.constant 0 : index
    %241 = vector.load %arg2[%c26_95, %c0_96] : memref<120x128xf32, #tpu.memory_space<vmem>>, vector<1x128xf32>
    %242 = vector.broadcast %240 : vector<16x1xf32> to vector<16x128xf32>
    %243 = arith.mulf %239, %242 : vector<16x128xf32>
    %244 = vector.broadcast %241 : vector<1x128xf32> to vector<16x128xf32>
    %245 = arith.mulf %243, %244 : vector<16x128xf32>
    %246 = arith.addf %238, %245 : vector<16x128xf32>
    %c125_i32 = arith.constant 125 : i32
    %247 = tpu.dynamic_rotate %30 by %c125_i32 dim 1 : vector<16x128xf32>, i32 -> vector<16x128xf32>
    %c0_97 = arith.constant 0 : index
    %c27 = arith.constant 27 : index
    %248 = vector.load %arg3[%c0_97, %c27] : memref<48x49xf32, #tpu.memory_space<vmem>>, vector<16x1xf32>
    %c27_98 = arith.constant 27 : index
    %c0_99 = arith.constant 0 : index
    %249 = vector.load %arg2[%c27_98, %c0_99] : memref<120x128xf32, #tpu.memory_space<vmem>>, vector<1x128xf32>
    %250 = vector.broadcast %248 : vector<16x1xf32> to vector<16x128xf32>
    %251 = arith.mulf %247, %250 : vector<16x128xf32>
    %252 = vector.broadcast %249 : vector<1x128xf32> to vector<16x128xf32>
    %253 = arith.mulf %251, %252 : vector<16x128xf32>
    %254 = arith.addf %246, %253 : vector<16x128xf32>
    %c123_i32 = arith.constant 123 : i32
    %255 = tpu.dynamic_rotate %30 by %c123_i32 dim 1 : vector<16x128xf32>, i32 -> vector<16x128xf32>
    %c0_100 = arith.constant 0 : index
    %c28 = arith.constant 28 : index
    %256 = vector.load %arg3[%c0_100, %c28] : memref<48x49xf32, #tpu.memory_space<vmem>>, vector<16x1xf32>
    %c28_101 = arith.constant 28 : index
    %c0_102 = arith.constant 0 : index
    %257 = vector.load %arg2[%c28_101, %c0_102] : memref<120x128xf32, #tpu.memory_space<vmem>>, vector<1x128xf32>
    %258 = vector.broadcast %256 : vector<16x1xf32> to vector<16x128xf32>
    %259 = arith.mulf %255, %258 : vector<16x128xf32>
    %260 = vector.broadcast %257 : vector<1x128xf32> to vector<16x128xf32>
    %261 = arith.mulf %259, %260 : vector<16x128xf32>
    %262 = arith.addf %254, %261 : vector<16x128xf32>
    %c122_i32 = arith.constant 122 : i32
    %263 = tpu.dynamic_rotate %30 by %c122_i32 dim 1 : vector<16x128xf32>, i32 -> vector<16x128xf32>
    %c0_103 = arith.constant 0 : index
    %c29 = arith.constant 29 : index
    %264 = vector.load %arg3[%c0_103, %c29] : memref<48x49xf32, #tpu.memory_space<vmem>>, vector<16x1xf32>
    %c29_104 = arith.constant 29 : index
    %c0_105 = arith.constant 0 : index
    %265 = vector.load %arg2[%c29_104, %c0_105] : memref<120x128xf32, #tpu.memory_space<vmem>>, vector<1x128xf32>
    %266 = vector.broadcast %264 : vector<16x1xf32> to vector<16x128xf32>
    %267 = arith.mulf %263, %266 : vector<16x128xf32>
    %268 = vector.broadcast %265 : vector<1x128xf32> to vector<16x128xf32>
    %269 = arith.mulf %267, %268 : vector<16x128xf32>
    %270 = arith.addf %262, %269 : vector<16x128xf32>
    %c121_i32 = arith.constant 121 : i32
    %271 = tpu.dynamic_rotate %30 by %c121_i32 dim 1 : vector<16x128xf32>, i32 -> vector<16x128xf32>
    %c0_106 = arith.constant 0 : index
    %c30 = arith.constant 30 : index
    %272 = vector.load %arg3[%c0_106, %c30] : memref<48x49xf32, #tpu.memory_space<vmem>>, vector<16x1xf32>
    %c30_107 = arith.constant 30 : index
    %c0_108 = arith.constant 0 : index
    %273 = vector.load %arg2[%c30_107, %c0_108] : memref<120x128xf32, #tpu.memory_space<vmem>>, vector<1x128xf32>
    %274 = vector.broadcast %272 : vector<16x1xf32> to vector<16x128xf32>
    %275 = arith.mulf %271, %274 : vector<16x128xf32>
    %276 = vector.broadcast %273 : vector<1x128xf32> to vector<16x128xf32>
    %277 = arith.mulf %275, %276 : vector<16x128xf32>
    %278 = arith.addf %270, %277 : vector<16x128xf32>
    %c120_i32 = arith.constant 120 : i32
    %279 = tpu.dynamic_rotate %30 by %c120_i32 dim 1 : vector<16x128xf32>, i32 -> vector<16x128xf32>
    %c0_109 = arith.constant 0 : index
    %c31 = arith.constant 31 : index
    %280 = vector.load %arg3[%c0_109, %c31] : memref<48x49xf32, #tpu.memory_space<vmem>>, vector<16x1xf32>
    %c31_110 = arith.constant 31 : index
    %c0_111 = arith.constant 0 : index
    %281 = vector.load %arg2[%c31_110, %c0_111] : memref<120x128xf32, #tpu.memory_space<vmem>>, vector<1x128xf32>
    %282 = vector.broadcast %280 : vector<16x1xf32> to vector<16x128xf32>
    %283 = arith.mulf %279, %282 : vector<16x128xf32>
    %284 = vector.broadcast %281 : vector<1x128xf32> to vector<16x128xf32>
    %285 = arith.mulf %283, %284 : vector<16x128xf32>
    %286 = arith.addf %278, %285 : vector<16x128xf32>
    %c119_i32 = arith.constant 119 : i32
    %287 = tpu.dynamic_rotate %30 by %c119_i32 dim 1 : vector<16x128xf32>, i32 -> vector<16x128xf32>
    %c0_112 = arith.constant 0 : index
    %c32 = arith.constant 32 : index
    %288 = vector.load %arg3[%c0_112, %c32] : memref<48x49xf32, #tpu.memory_space<vmem>>, vector<16x1xf32>
    %c32_113 = arith.constant 32 : index
    %c0_114 = arith.constant 0 : index
    %289 = vector.load %arg2[%c32_113, %c0_114] : memref<120x128xf32, #tpu.memory_space<vmem>>, vector<1x128xf32>
    %290 = vector.broadcast %288 : vector<16x1xf32> to vector<16x128xf32>
    %291 = arith.mulf %287, %290 : vector<16x128xf32>
    %292 = vector.broadcast %289 : vector<1x128xf32> to vector<16x128xf32>
    %293 = arith.mulf %291, %292 : vector<16x128xf32>
    %294 = arith.addf %286, %293 : vector<16x128xf32>
    %c118_i32 = arith.constant 118 : i32
    %295 = tpu.dynamic_rotate %30 by %c118_i32 dim 1 : vector<16x128xf32>, i32 -> vector<16x128xf32>
    %c0_115 = arith.constant 0 : index
    %c33 = arith.constant 33 : index
    %296 = vector.load %arg3[%c0_115, %c33] : memref<48x49xf32, #tpu.memory_space<vmem>>, vector<16x1xf32>
    %c33_116 = arith.constant 33 : index
    %c0_117 = arith.constant 0 : index
    %297 = vector.load %arg2[%c33_116, %c0_117] : memref<120x128xf32, #tpu.memory_space<vmem>>, vector<1x128xf32>
    %298 = vector.broadcast %296 : vector<16x1xf32> to vector<16x128xf32>
    %299 = arith.mulf %295, %298 : vector<16x128xf32>
    %300 = vector.broadcast %297 : vector<1x128xf32> to vector<16x128xf32>
    %301 = arith.mulf %299, %300 : vector<16x128xf32>
    %302 = arith.addf %294, %301 : vector<16x128xf32>
    %c117_i32 = arith.constant 117 : i32
    %303 = tpu.dynamic_rotate %30 by %c117_i32 dim 1 : vector<16x128xf32>, i32 -> vector<16x128xf32>
    %c0_118 = arith.constant 0 : index
    %c34 = arith.constant 34 : index
    %304 = vector.load %arg3[%c0_118, %c34] : memref<48x49xf32, #tpu.memory_space<vmem>>, vector<16x1xf32>
    %c34_119 = arith.constant 34 : index
    %c0_120 = arith.constant 0 : index
    %305 = vector.load %arg2[%c34_119, %c0_120] : memref<120x128xf32, #tpu.memory_space<vmem>>, vector<1x128xf32>
    %306 = vector.broadcast %304 : vector<16x1xf32> to vector<16x128xf32>
    %307 = arith.mulf %303, %306 : vector<16x128xf32>
    %308 = vector.broadcast %305 : vector<1x128xf32> to vector<16x128xf32>
    %309 = arith.mulf %307, %308 : vector<16x128xf32>
    %310 = arith.addf %302, %309 : vector<16x128xf32>
    %c115_i32 = arith.constant 115 : i32
    %311 = tpu.dynamic_rotate %30 by %c115_i32 dim 1 : vector<16x128xf32>, i32 -> vector<16x128xf32>
    %c0_121 = arith.constant 0 : index
    %c35 = arith.constant 35 : index
    %312 = vector.load %arg3[%c0_121, %c35] : memref<48x49xf32, #tpu.memory_space<vmem>>, vector<16x1xf32>
    %c35_122 = arith.constant 35 : index
    %c0_123 = arith.constant 0 : index
    %313 = vector.load %arg2[%c35_122, %c0_123] : memref<120x128xf32, #tpu.memory_space<vmem>>, vector<1x128xf32>
    %314 = vector.broadcast %312 : vector<16x1xf32> to vector<16x128xf32>
    %315 = arith.mulf %311, %314 : vector<16x128xf32>
    %316 = vector.broadcast %313 : vector<1x128xf32> to vector<16x128xf32>
    %317 = arith.mulf %315, %316 : vector<16x128xf32>
    %318 = arith.addf %310, %317 : vector<16x128xf32>
    %c114_i32 = arith.constant 114 : i32
    %319 = tpu.dynamic_rotate %30 by %c114_i32 dim 1 : vector<16x128xf32>, i32 -> vector<16x128xf32>
    %c0_124 = arith.constant 0 : index
    %c36 = arith.constant 36 : index
    %320 = vector.load %arg3[%c0_124, %c36] : memref<48x49xf32, #tpu.memory_space<vmem>>, vector<16x1xf32>
    %c36_125 = arith.constant 36 : index
    %c0_126 = arith.constant 0 : index
    %321 = vector.load %arg2[%c36_125, %c0_126] : memref<120x128xf32, #tpu.memory_space<vmem>>, vector<1x128xf32>
    %322 = vector.broadcast %320 : vector<16x1xf32> to vector<16x128xf32>
    %323 = arith.mulf %319, %322 : vector<16x128xf32>
    %324 = vector.broadcast %321 : vector<1x128xf32> to vector<16x128xf32>
    %325 = arith.mulf %323, %324 : vector<16x128xf32>
    %326 = arith.addf %318, %325 : vector<16x128xf32>
    %c113_i32 = arith.constant 113 : i32
    %327 = tpu.dynamic_rotate %30 by %c113_i32 dim 1 : vector<16x128xf32>, i32 -> vector<16x128xf32>
    %c0_127 = arith.constant 0 : index
    %c37 = arith.constant 37 : index
    %328 = vector.load %arg3[%c0_127, %c37] : memref<48x49xf32, #tpu.memory_space<vmem>>, vector<16x1xf32>
    %c37_128 = arith.constant 37 : index
    %c0_129 = arith.constant 0 : index
    %329 = vector.load %arg2[%c37_128, %c0_129] : memref<120x128xf32, #tpu.memory_space<vmem>>, vector<1x128xf32>
    %330 = vector.broadcast %328 : vector<16x1xf32> to vector<16x128xf32>
    %331 = arith.mulf %327, %330 : vector<16x128xf32>
    %332 = vector.broadcast %329 : vector<1x128xf32> to vector<16x128xf32>
    %333 = arith.mulf %331, %332 : vector<16x128xf32>
    %334 = arith.addf %326, %333 : vector<16x128xf32>
    %c112_i32 = arith.constant 112 : i32
    %335 = tpu.dynamic_rotate %30 by %c112_i32 dim 1 : vector<16x128xf32>, i32 -> vector<16x128xf32>
    %c0_130 = arith.constant 0 : index
    %c38 = arith.constant 38 : index
    %336 = vector.load %arg3[%c0_130, %c38] : memref<48x49xf32, #tpu.memory_space<vmem>>, vector<16x1xf32>
    %c38_131 = arith.constant 38 : index
    %c0_132 = arith.constant 0 : index
    %337 = vector.load %arg2[%c38_131, %c0_132] : memref<120x128xf32, #tpu.memory_space<vmem>>, vector<1x128xf32>
    %338 = vector.broadcast %336 : vector<16x1xf32> to vector<16x128xf32>
    %339 = arith.mulf %335, %338 : vector<16x128xf32>
    %340 = vector.broadcast %337 : vector<1x128xf32> to vector<16x128xf32>
    %341 = arith.mulf %339, %340 : vector<16x128xf32>
    %342 = arith.addf %334, %341 : vector<16x128xf32>
    %c111_i32 = arith.constant 111 : i32
    %343 = tpu.dynamic_rotate %30 by %c111_i32 dim 1 : vector<16x128xf32>, i32 -> vector<16x128xf32>
    %c0_133 = arith.constant 0 : index
    %c39 = arith.constant 39 : index
    %344 = vector.load %arg3[%c0_133, %c39] : memref<48x49xf32, #tpu.memory_space<vmem>>, vector<16x1xf32>
    %c39_134 = arith.constant 39 : index
    %c0_135 = arith.constant 0 : index
    %345 = vector.load %arg2[%c39_134, %c0_135] : memref<120x128xf32, #tpu.memory_space<vmem>>, vector<1x128xf32>
    %346 = vector.broadcast %344 : vector<16x1xf32> to vector<16x128xf32>
    %347 = arith.mulf %343, %346 : vector<16x128xf32>
    %348 = vector.broadcast %345 : vector<1x128xf32> to vector<16x128xf32>
    %349 = arith.mulf %347, %348 : vector<16x128xf32>
    %350 = arith.addf %342, %349 : vector<16x128xf32>
    %c110_i32 = arith.constant 110 : i32
    %351 = tpu.dynamic_rotate %30 by %c110_i32 dim 1 : vector<16x128xf32>, i32 -> vector<16x128xf32>
    %c0_136 = arith.constant 0 : index
    %c40 = arith.constant 40 : index
    %352 = vector.load %arg3[%c0_136, %c40] : memref<48x49xf32, #tpu.memory_space<vmem>>, vector<16x1xf32>
    %c40_137 = arith.constant 40 : index
    %c0_138 = arith.constant 0 : index
    %353 = vector.load %arg2[%c40_137, %c0_138] : memref<120x128xf32, #tpu.memory_space<vmem>>, vector<1x128xf32>
    %354 = vector.broadcast %352 : vector<16x1xf32> to vector<16x128xf32>
    %355 = arith.mulf %351, %354 : vector<16x128xf32>
    %356 = vector.broadcast %353 : vector<1x128xf32> to vector<16x128xf32>
    %357 = arith.mulf %355, %356 : vector<16x128xf32>
    %358 = arith.addf %350, %357 : vector<16x128xf32>
    %c109_i32 = arith.constant 109 : i32
    %359 = tpu.dynamic_rotate %30 by %c109_i32 dim 1 : vector<16x128xf32>, i32 -> vector<16x128xf32>
    %c0_139 = arith.constant 0 : index
    %c41 = arith.constant 41 : index
    %360 = vector.load %arg3[%c0_139, %c41] : memref<48x49xf32, #tpu.memory_space<vmem>>, vector<16x1xf32>
    %c41_140 = arith.constant 41 : index
    %c0_141 = arith.constant 0 : index
    %361 = vector.load %arg2[%c41_140, %c0_141] : memref<120x128xf32, #tpu.memory_space<vmem>>, vector<1x128xf32>
    %362 = vector.broadcast %360 : vector<16x1xf32> to vector<16x128xf32>
    %363 = arith.mulf %359, %362 : vector<16x128xf32>
    %364 = vector.broadcast %361 : vector<1x128xf32> to vector<16x128xf32>
    %365 = arith.mulf %363, %364 : vector<16x128xf32>
    %366 = arith.addf %358, %365 : vector<16x128xf32>
    %c107_i32 = arith.constant 107 : i32
    %367 = tpu.dynamic_rotate %30 by %c107_i32 dim 1 : vector<16x128xf32>, i32 -> vector<16x128xf32>
    %c0_142 = arith.constant 0 : index
    %c42 = arith.constant 42 : index
    %368 = vector.load %arg3[%c0_142, %c42] : memref<48x49xf32, #tpu.memory_space<vmem>>, vector<16x1xf32>
    %c42_143 = arith.constant 42 : index
    %c0_144 = arith.constant 0 : index
    %369 = vector.load %arg2[%c42_143, %c0_144] : memref<120x128xf32, #tpu.memory_space<vmem>>, vector<1x128xf32>
    %370 = vector.broadcast %368 : vector<16x1xf32> to vector<16x128xf32>
    %371 = arith.mulf %367, %370 : vector<16x128xf32>
    %372 = vector.broadcast %369 : vector<1x128xf32> to vector<16x128xf32>
    %373 = arith.mulf %371, %372 : vector<16x128xf32>
    %374 = arith.addf %366, %373 : vector<16x128xf32>
    %c106_i32 = arith.constant 106 : i32
    %375 = tpu.dynamic_rotate %30 by %c106_i32 dim 1 : vector<16x128xf32>, i32 -> vector<16x128xf32>
    %c0_145 = arith.constant 0 : index
    %c43 = arith.constant 43 : index
    %376 = vector.load %arg3[%c0_145, %c43] : memref<48x49xf32, #tpu.memory_space<vmem>>, vector<16x1xf32>
    %c43_146 = arith.constant 43 : index
    %c0_147 = arith.constant 0 : index
    %377 = vector.load %arg2[%c43_146, %c0_147] : memref<120x128xf32, #tpu.memory_space<vmem>>, vector<1x128xf32>
    %378 = vector.broadcast %376 : vector<16x1xf32> to vector<16x128xf32>
    %379 = arith.mulf %375, %378 : vector<16x128xf32>
    %380 = vector.broadcast %377 : vector<1x128xf32> to vector<16x128xf32>
    %381 = arith.mulf %379, %380 : vector<16x128xf32>
    %382 = arith.addf %374, %381 : vector<16x128xf32>
    %c105_i32 = arith.constant 105 : i32
    %383 = tpu.dynamic_rotate %30 by %c105_i32 dim 1 : vector<16x128xf32>, i32 -> vector<16x128xf32>
    %c0_148 = arith.constant 0 : index
    %c44 = arith.constant 44 : index
    %384 = vector.load %arg3[%c0_148, %c44] : memref<48x49xf32, #tpu.memory_space<vmem>>, vector<16x1xf32>
    %c44_149 = arith.constant 44 : index
    %c0_150 = arith.constant 0 : index
    %385 = vector.load %arg2[%c44_149, %c0_150] : memref<120x128xf32, #tpu.memory_space<vmem>>, vector<1x128xf32>
    %386 = vector.broadcast %384 : vector<16x1xf32> to vector<16x128xf32>
    %387 = arith.mulf %383, %386 : vector<16x128xf32>
    %388 = vector.broadcast %385 : vector<1x128xf32> to vector<16x128xf32>
    %389 = arith.mulf %387, %388 : vector<16x128xf32>
    %390 = arith.addf %382, %389 : vector<16x128xf32>
    %c104_i32 = arith.constant 104 : i32
    %391 = tpu.dynamic_rotate %30 by %c104_i32 dim 1 : vector<16x128xf32>, i32 -> vector<16x128xf32>
    %c0_151 = arith.constant 0 : index
    %c45 = arith.constant 45 : index
    %392 = vector.load %arg3[%c0_151, %c45] : memref<48x49xf32, #tpu.memory_space<vmem>>, vector<16x1xf32>
    %c45_152 = arith.constant 45 : index
    %c0_153 = arith.constant 0 : index
    %393 = vector.load %arg2[%c45_152, %c0_153] : memref<120x128xf32, #tpu.memory_space<vmem>>, vector<1x128xf32>
    %394 = vector.broadcast %392 : vector<16x1xf32> to vector<16x128xf32>
    %395 = arith.mulf %391, %394 : vector<16x128xf32>
    %396 = vector.broadcast %393 : vector<1x128xf32> to vector<16x128xf32>
    %397 = arith.mulf %395, %396 : vector<16x128xf32>
    %398 = arith.addf %390, %397 : vector<16x128xf32>
    %c103_i32 = arith.constant 103 : i32
    %399 = tpu.dynamic_rotate %30 by %c103_i32 dim 1 : vector<16x128xf32>, i32 -> vector<16x128xf32>
    %c0_154 = arith.constant 0 : index
    %c46 = arith.constant 46 : index
    %400 = vector.load %arg3[%c0_154, %c46] : memref<48x49xf32, #tpu.memory_space<vmem>>, vector<16x1xf32>
    %c46_155 = arith.constant 46 : index
    %c0_156 = arith.constant 0 : index
    %401 = vector.load %arg2[%c46_155, %c0_156] : memref<120x128xf32, #tpu.memory_space<vmem>>, vector<1x128xf32>
    %402 = vector.broadcast %400 : vector<16x1xf32> to vector<16x128xf32>
    %403 = arith.mulf %399, %402 : vector<16x128xf32>
    %404 = vector.broadcast %401 : vector<1x128xf32> to vector<16x128xf32>
    %405 = arith.mulf %403, %404 : vector<16x128xf32>
    %406 = arith.addf %398, %405 : vector<16x128xf32>
    %c102_i32 = arith.constant 102 : i32
    %407 = tpu.dynamic_rotate %30 by %c102_i32 dim 1 : vector<16x128xf32>, i32 -> vector<16x128xf32>
    %c0_157 = arith.constant 0 : index
    %c47 = arith.constant 47 : index
    %408 = vector.load %arg3[%c0_157, %c47] : memref<48x49xf32, #tpu.memory_space<vmem>>, vector<16x1xf32>
    %c47_158 = arith.constant 47 : index
    %c0_159 = arith.constant 0 : index
    %409 = vector.load %arg2[%c47_158, %c0_159] : memref<120x128xf32, #tpu.memory_space<vmem>>, vector<1x128xf32>
    %410 = vector.broadcast %408 : vector<16x1xf32> to vector<16x128xf32>
    %411 = arith.mulf %407, %410 : vector<16x128xf32>
    %412 = vector.broadcast %409 : vector<1x128xf32> to vector<16x128xf32>
    %413 = arith.mulf %411, %412 : vector<16x128xf32>
    %414 = arith.addf %406, %413 : vector<16x128xf32>
    %c101_i32 = arith.constant 101 : i32
    %415 = tpu.dynamic_rotate %30 by %c101_i32 dim 1 : vector<16x128xf32>, i32 -> vector<16x128xf32>
    %c0_160 = arith.constant 0 : index
    %c48 = arith.constant 48 : index
    %416 = vector.load %arg3[%c0_160, %c48] : memref<48x49xf32, #tpu.memory_space<vmem>>, vector<16x1xf32>
    %c48_161 = arith.constant 48 : index
    %c0_162 = arith.constant 0 : index
    %417 = vector.load %arg2[%c48_161, %c0_162] : memref<120x128xf32, #tpu.memory_space<vmem>>, vector<1x128xf32>
    %418 = vector.broadcast %416 : vector<16x1xf32> to vector<16x128xf32>
    %419 = arith.mulf %415, %418 : vector<16x128xf32>
    %420 = vector.broadcast %417 : vector<1x128xf32> to vector<16x128xf32>
    %421 = arith.mulf %419, %420 : vector<16x128xf32>
    %422 = arith.addf %414, %421 : vector<16x128xf32>
    %c0_163 = arith.constant 0 : index
    %c3_164 = arith.constant 3 : index
    %423 = vector.load %arg1[%c0_163, %c3_164] : memref<128x18xf32, #tpu.memory_space<vmem>>, vector<16x1xf32>
    %424 = vector.broadcast %423 : vector<16x1xf32> to vector<16x128xf32>
    %425 = arith.addf %422, %424 : vector<16x128xf32>
    %c0_165 = arith.constant 0 : index
    %c4_166 = arith.constant 4 : index
    %426 = vector.load %arg1[%c0_165, %c4_166] : memref<128x18xf32, #tpu.memory_space<vmem>>, vector<16x1xf32>
    %c0_167 = arith.constant 0 : index
    %c5_168 = arith.constant 5 : index
    %427 = vector.load %arg1[%c0_167, %c5_168] : memref<128x18xf32, #tpu.memory_space<vmem>>, vector<16x1xf32>
    %cst_169 = arith.constant dense<0.000000e+00> : vector<128xf32>
    %428 = vector.multi_reduction <add>, %425, %cst_169 [0] : vector<16x128xf32> to vector<128xf32>
    %429 = vector.shape_cast %428 : vector<128xf32> to vector<1x128xf32>
    %cst_170 = arith.constant 1.600000e+01 : f32
    %430 = vector.broadcast %cst_170 : f32 to vector<1x128xf32>
    %431 = arith.divf %429, %430 : vector<1x128xf32>
    %432 = vector.broadcast %431 : vector<1x128xf32> to vector<16x128xf32>
    %433 = arith.subf %425, %432 : vector<16x128xf32>
    %434 = arith.mulf %433, %433 : vector<16x128xf32>
    %cst_171 = arith.constant dense<0.000000e+00> : vector<128xf32>
    %435 = vector.multi_reduction <add>, %434, %cst_171 [0] : vector<16x128xf32> to vector<128xf32>
    %436 = vector.shape_cast %435 : vector<128xf32> to vector<1x128xf32>
    %cst_172 = arith.constant 1.600000e+01 : f32
    %437 = vector.broadcast %cst_172 : f32 to vector<1x128xf32>
    %438 = arith.divf %436, %437 : vector<1x128xf32>
    %439 = vector.broadcast %431 : vector<1x128xf32> to vector<16x128xf32>
    %440 = arith.subf %425, %439 : vector<16x128xf32>
    %cst_173 = arith.constant 9.99999997E-7 : f32
    %441 = vector.broadcast %cst_173 : f32 to vector<1x128xf32>
    %442 = arith.addf %438, %441 : vector<1x128xf32>
    %443 = math.rsqrt %442 : vector<1x128xf32>
    %444 = vector.broadcast %443 : vector<1x128xf32> to vector<16x128xf32>
    %445 = arith.mulf %440, %444 : vector<16x128xf32>
    %446 = vector.broadcast %426 : vector<16x1xf32> to vector<16x128xf32>
    %447 = arith.mulf %445, %446 : vector<16x128xf32>
    %448 = vector.broadcast %427 : vector<16x1xf32> to vector<16x128xf32>
    %449 = arith.addf %447, %448 : vector<16x128xf32>
    %c16_174 = arith.constant 16 : index
    %c0_175 = arith.constant 0 : index
    %450 = vector.load %arg4[%c16_174, %c0_175] : memref<464x256xbf16, #tpu.memory_space<vmem>>, vector<64x16xbf16>
    %451 = arith.truncf %449 : vector<16x128xf32> to vector<16x128xbf16>
    %cst_176 = arith.constant dense<0.000000e+00> : vector<64x128xf32>
    %452 = tpu.matmul %450, %451, %cst_176 {dimension_numbers = #tpu.dot_dimension_numbers<[1], [0], [0], [1], [0, 0, 1, 1], [], []>} : vector<64x16xbf16>, vector<16x128xbf16>, vector<64x128xf32> -> vector<64x128xf32>
    %c0_177 = arith.constant 0 : index
    %c16_178 = arith.constant 16 : index
    %453 = vector.load %arg1[%c0_177, %c16_178] : memref<128x18xf32, #tpu.memory_space<vmem>>, vector<64x1xf32>
    %454 = vector.broadcast %453 : vector<64x1xf32> to vector<64x128xf32>
    %455 = arith.addf %452, %454 : vector<64x128xf32>
    %cst_179 = arith.constant 5.000000e-01 : f32
    %456 = vector.broadcast %cst_179 : f32 to vector<64x128xf32>
    %457 = arith.mulf %456, %455 : vector<64x128xf32>
    %cst_180 = arith.constant 4.471500e-02 : f32
    %458 = vector.broadcast %cst_180 : f32 to vector<64x128xf32>
    %459 = arith.mulf %458, %455 : vector<64x128xf32>
    %460 = arith.mulf %459, %455 : vector<64x128xf32>
    %461 = arith.mulf %460, %455 : vector<64x128xf32>
    %462 = arith.addf %455, %461 : vector<64x128xf32>
    %cst_181 = arith.constant 0.797884583 : f32
    %463 = vector.broadcast %cst_181 : f32 to vector<64x128xf32>
    %464 = arith.mulf %463, %462 : vector<64x128xf32>
    %465 = math.tanh %464 : vector<64x128xf32>
    %cst_182 = arith.constant 1.000000e+00 : f32
    %466 = vector.broadcast %cst_182 : f32 to vector<64x128xf32>
    %467 = arith.addf %466, %465 : vector<64x128xf32>
    %468 = arith.mulf %457, %467 : vector<64x128xf32>
    %c80 = arith.constant 80 : index
    %c0_183 = arith.constant 0 : index
    %469 = vector.load %arg4[%c80, %c0_183] : memref<464x256xbf16, #tpu.memory_space<vmem>>, vector<16x64xbf16>
    %470 = arith.truncf %468 : vector<64x128xf32> to vector<64x128xbf16>
    %cst_184 = arith.constant dense<0.000000e+00> : vector<16x128xf32>
    %471 = tpu.matmul %469, %470, %cst_184 {dimension_numbers = #tpu.dot_dimension_numbers<[1], [0], [0], [1], [0, 0, 1, 1], [], []>} : vector<16x64xbf16>, vector<64x128xbf16>, vector<16x128xf32> -> vector<16x128xf32>
    %c0_185 = arith.constant 0 : index
    %c6_186 = arith.constant 6 : index
    %472 = vector.load %arg1[%c0_185, %c6_186] : memref<128x18xf32, #tpu.memory_space<vmem>>, vector<16x1xf32>
    %473 = vector.broadcast %472 : vector<16x1xf32> to vector<16x128xf32>
    %474 = arith.addf %471, %473 : vector<16x128xf32>
    %c0_187 = arith.constant 0 : index
    %c7_188 = arith.constant 7 : index
    %475 = vector.load %arg1[%c0_187, %c7_188] : memref<128x18xf32, #tpu.memory_space<vmem>>, vector<16x1xf32>
    %476 = vector.broadcast %475 : vector<16x1xf32> to vector<16x128xf32>
    %477 = arith.mulf %476, %474 : vector<16x128xf32>
    %478 = arith.addf %30, %477 : vector<16x128xf32>
    %c0_189 = arith.constant 0 : index
    %c8_190 = arith.constant 8 : index
    %479 = vector.load %arg1[%c0_189, %c8_190] : memref<128x18xf32, #tpu.memory_space<vmem>>, vector<16x1xf32>
    %c0_191 = arith.constant 0 : index
    %c9_192 = arith.constant 9 : index
    %480 = vector.load %arg1[%c0_191, %c9_192] : memref<128x18xf32, #tpu.memory_space<vmem>>, vector<16x1xf32>
    %cst_193 = arith.constant dense<0.000000e+00> : vector<128xf32>
    %481 = vector.multi_reduction <add>, %478, %cst_193 [0] : vector<16x128xf32> to vector<128xf32>
    %482 = vector.shape_cast %481 : vector<128xf32> to vector<1x128xf32>
    %cst_194 = arith.constant 1.600000e+01 : f32
    %483 = vector.broadcast %cst_194 : f32 to vector<1x128xf32>
    %484 = arith.divf %482, %483 : vector<1x128xf32>
    %485 = vector.broadcast %484 : vector<1x128xf32> to vector<16x128xf32>
    %486 = arith.subf %478, %485 : vector<16x128xf32>
    %487 = arith.mulf %486, %486 : vector<16x128xf32>
    %cst_195 = arith.constant dense<0.000000e+00> : vector<128xf32>
    %488 = vector.multi_reduction <add>, %487, %cst_195 [0] : vector<16x128xf32> to vector<128xf32>
    %489 = vector.shape_cast %488 : vector<128xf32> to vector<1x128xf32>
    %cst_196 = arith.constant 1.600000e+01 : f32
    %490 = vector.broadcast %cst_196 : f32 to vector<1x128xf32>
    %491 = arith.divf %489, %490 : vector<1x128xf32>
    %492 = vector.broadcast %484 : vector<1x128xf32> to vector<16x128xf32>
    %493 = arith.subf %478, %492 : vector<16x128xf32>
    %cst_197 = arith.constant 9.99999997E-7 : f32
    %494 = vector.broadcast %cst_197 : f32 to vector<1x128xf32>
    %495 = arith.addf %491, %494 : vector<1x128xf32>
    %496 = math.rsqrt %495 : vector<1x128xf32>
    %497 = vector.broadcast %496 : vector<1x128xf32> to vector<16x128xf32>
    %498 = arith.mulf %493, %497 : vector<16x128xf32>
    %499 = vector.broadcast %479 : vector<16x1xf32> to vector<16x128xf32>
    %500 = arith.mulf %498, %499 : vector<16x128xf32>
    %501 = vector.broadcast %480 : vector<16x1xf32> to vector<16x128xf32>
    %502 = arith.addf %500, %501 : vector<16x128xf32>
    %c127_i32_198 = arith.constant 127 : i32
    %503 = tpu.dynamic_rotate %502 by %c127_i32_198 dim 1 : vector<16x128xf32>, i32 -> vector<16x128xf32>
    %c120_i32_199 = arith.constant 120 : i32
    %504 = tpu.dynamic_rotate %502 by %c120_i32_199 dim 1 : vector<16x128xf32>, i32 -> vector<16x128xf32>
    %c119_i32_200 = arith.constant 119 : i32
    %505 = tpu.dynamic_rotate %502 by %c119_i32_200 dim 1 : vector<16x128xf32>, i32 -> vector<16x128xf32>
    %506 = tpu.concatenate %502, %503, %504, %505 in 0 : vector<16x128xf32>, vector<16x128xf32>, vector<16x128xf32>, vector<16x128xf32> -> vector<64x128xf32>
    %c96 = arith.constant 96 : index
    %c0_201 = arith.constant 0 : index
    %507 = vector.load %arg4[%c96, %c0_201] : memref<464x256xbf16, #tpu.memory_space<vmem>>, vector<32x64xbf16>
    %508 = arith.truncf %506 : vector<64x128xf32> to vector<64x128xbf16>
    %cst_202 = arith.constant dense<0.000000e+00> : vector<32x128xf32>
    %509 = tpu.matmul %507, %508, %cst_202 {dimension_numbers = #tpu.dot_dimension_numbers<[1], [0], [0], [1], [0, 0, 1, 1], [], []>} : vector<32x64xbf16>, vector<64x128xbf16>, vector<32x128xf32> -> vector<32x128xf32>
    %c128 = arith.constant 128 : index
    %c0_203 = arith.constant 0 : index
    %510 = vector.load %arg4[%c128, %c0_203] : memref<464x256xbf16, #tpu.memory_space<vmem>>, vector<128x128xbf16>
    %511 = arith.truncf %509 : vector<32x128xf32> to vector<32x128xbf16>
    %cst_204 = arith.constant dense<0.000000e+00> : vector<32x128xf32>
    %512 = tpu.matmul %511, %510, %cst_204 {dimension_numbers = #tpu.dot_dimension_numbers<[1], [0], [0], [1], [0, 0, 1, 1], [], []>} : vector<32x128xbf16>, vector<128x128xbf16>, vector<32x128xf32> -> vector<32x128xf32>
    %c0_205 = arith.constant 0 : index
    %c10_206 = arith.constant 10 : index
    %513 = vector.load %arg1[%c0_205, %c10_206] : memref<128x18xf32, #tpu.memory_space<vmem>>, vector<32x1xf32>
    %514 = vector.broadcast %513 : vector<32x1xf32> to vector<32x128xf32>
    %515 = arith.addf %512, %514 : vector<32x128xf32>
    %cst_207 = arith.constant 0.000000e+00 : f32
    %516 = vector.broadcast %cst_207 : f32 to vector<32x128xf32>
    %c15_i32_208 = arith.constant 15 : i32
    %517 = tpu.dynamic_rotate %515 by %c15_i32_208 dim 1 : vector<32x128xf32>, i32 -> vector<32x128xf32>
    %c16_209 = arith.constant 16 : index
    %c0_210 = arith.constant 0 : index
    %518 = vector.load %arg3[%c16_209, %c0_210] : memref<48x49xf32, #tpu.memory_space<vmem>>, vector<32x1xf32>
    %c56 = arith.constant 56 : index
    %c0_211 = arith.constant 0 : index
    %519 = vector.load %arg2[%c56, %c0_211] : memref<120x128xf32, #tpu.memory_space<vmem>>, vector<1x128xf32>
    %520 = vector.broadcast %518 : vector<32x1xf32> to vector<32x128xf32>
    %521 = arith.mulf %517, %520 : vector<32x128xf32>
    %522 = vector.broadcast %519 : vector<1x128xf32> to vector<32x128xf32>
    %523 = arith.mulf %521, %522 : vector<32x128xf32>
    %524 = arith.addf %516, %523 : vector<32x128xf32>
    %c14_i32_212 = arith.constant 14 : i32
    %525 = tpu.dynamic_rotate %515 by %c14_i32_212 dim 1 : vector<32x128xf32>, i32 -> vector<32x128xf32>
    %c16_213 = arith.constant 16 : index
    %c1_214 = arith.constant 1 : index
    %526 = vector.load %arg3[%c16_213, %c1_214] : memref<48x49xf32, #tpu.memory_space<vmem>>, vector<32x1xf32>
    %c57 = arith.constant 57 : index
    %c0_215 = arith.constant 0 : index
    %527 = vector.load %arg2[%c57, %c0_215] : memref<120x128xf32, #tpu.memory_space<vmem>>, vector<1x128xf32>
    %528 = vector.broadcast %526 : vector<32x1xf32> to vector<32x128xf32>
    %529 = arith.mulf %525, %528 : vector<32x128xf32>
    %530 = vector.broadcast %527 : vector<1x128xf32> to vector<32x128xf32>
    %531 = arith.mulf %529, %530 : vector<32x128xf32>
    %532 = arith.addf %524, %531 : vector<32x128xf32>
    %c13_i32_216 = arith.constant 13 : i32
    %533 = tpu.dynamic_rotate %515 by %c13_i32_216 dim 1 : vector<32x128xf32>, i32 -> vector<32x128xf32>
    %c16_217 = arith.constant 16 : index
    %c2_218 = arith.constant 2 : index
    %534 = vector.load %arg3[%c16_217, %c2_218] : memref<48x49xf32, #tpu.memory_space<vmem>>, vector<32x1xf32>
    %c58 = arith.constant 58 : index
    %c0_219 = arith.constant 0 : index
    %535 = vector.load %arg2[%c58, %c0_219] : memref<120x128xf32, #tpu.memory_space<vmem>>, vector<1x128xf32>
    %536 = vector.broadcast %534 : vector<32x1xf32> to vector<32x128xf32>
    %537 = arith.mulf %533, %536 : vector<32x128xf32>
    %538 = vector.broadcast %535 : vector<1x128xf32> to vector<32x128xf32>
    %539 = arith.mulf %537, %538 : vector<32x128xf32>
    %540 = arith.addf %532, %539 : vector<32x128xf32>
    %c12_i32 = arith.constant 12 : i32
    %541 = tpu.dynamic_rotate %515 by %c12_i32 dim 1 : vector<32x128xf32>, i32 -> vector<32x128xf32>
    %c16_220 = arith.constant 16 : index
    %c3_221 = arith.constant 3 : index
    %542 = vector.load %arg3[%c16_220, %c3_221] : memref<48x49xf32, #tpu.memory_space<vmem>>, vector<32x1xf32>
    %c59 = arith.constant 59 : index
    %c0_222 = arith.constant 0 : index
    %543 = vector.load %arg2[%c59, %c0_222] : memref<120x128xf32, #tpu.memory_space<vmem>>, vector<1x128xf32>
    %544 = vector.broadcast %542 : vector<32x1xf32> to vector<32x128xf32>
    %545 = arith.mulf %541, %544 : vector<32x128xf32>
    %546 = vector.broadcast %543 : vector<1x128xf32> to vector<32x128xf32>
    %547 = arith.mulf %545, %546 : vector<32x128xf32>
    %548 = arith.addf %540, %547 : vector<32x128xf32>
    %c11_i32_223 = arith.constant 11 : i32
    %549 = tpu.dynamic_rotate %515 by %c11_i32_223 dim 1 : vector<32x128xf32>, i32 -> vector<32x128xf32>
    %c16_224 = arith.constant 16 : index
    %c4_225 = arith.constant 4 : index
    %550 = vector.load %arg3[%c16_224, %c4_225] : memref<48x49xf32, #tpu.memory_space<vmem>>, vector<32x1xf32>
    %c60 = arith.constant 60 : index
    %c0_226 = arith.constant 0 : index
    %551 = vector.load %arg2[%c60, %c0_226] : memref<120x128xf32, #tpu.memory_space<vmem>>, vector<1x128xf32>
    %552 = vector.broadcast %550 : vector<32x1xf32> to vector<32x128xf32>
    %553 = arith.mulf %549, %552 : vector<32x128xf32>
    %554 = vector.broadcast %551 : vector<1x128xf32> to vector<32x128xf32>
    %555 = arith.mulf %553, %554 : vector<32x128xf32>
    %556 = arith.addf %548, %555 : vector<32x128xf32>
    %c10_i32_227 = arith.constant 10 : i32
    %557 = tpu.dynamic_rotate %515 by %c10_i32_227 dim 1 : vector<32x128xf32>, i32 -> vector<32x128xf32>
    %c16_228 = arith.constant 16 : index
    %c5_229 = arith.constant 5 : index
    %558 = vector.load %arg3[%c16_228, %c5_229] : memref<48x49xf32, #tpu.memory_space<vmem>>, vector<32x1xf32>
    %c61 = arith.constant 61 : index
    %c0_230 = arith.constant 0 : index
    %559 = vector.load %arg2[%c61, %c0_230] : memref<120x128xf32, #tpu.memory_space<vmem>>, vector<1x128xf32>
    %560 = vector.broadcast %558 : vector<32x1xf32> to vector<32x128xf32>
    %561 = arith.mulf %557, %560 : vector<32x128xf32>
    %562 = vector.broadcast %559 : vector<1x128xf32> to vector<32x128xf32>
    %563 = arith.mulf %561, %562 : vector<32x128xf32>
    %564 = arith.addf %556, %563 : vector<32x128xf32>
    %c9_i32_231 = arith.constant 9 : i32
    %565 = tpu.dynamic_rotate %515 by %c9_i32_231 dim 1 : vector<32x128xf32>, i32 -> vector<32x128xf32>
    %c16_232 = arith.constant 16 : index
    %c6_233 = arith.constant 6 : index
    %566 = vector.load %arg3[%c16_232, %c6_233] : memref<48x49xf32, #tpu.memory_space<vmem>>, vector<32x1xf32>
    %c62 = arith.constant 62 : index
    %c0_234 = arith.constant 0 : index
    %567 = vector.load %arg2[%c62, %c0_234] : memref<120x128xf32, #tpu.memory_space<vmem>>, vector<1x128xf32>
    %568 = vector.broadcast %566 : vector<32x1xf32> to vector<32x128xf32>
    %569 = arith.mulf %565, %568 : vector<32x128xf32>
    %570 = vector.broadcast %567 : vector<1x128xf32> to vector<32x128xf32>
    %571 = arith.mulf %569, %570 : vector<32x128xf32>
    %572 = arith.addf %564, %571 : vector<32x128xf32>
    %c11_i32_235 = arith.constant 11 : i32
    %573 = tpu.dynamic_rotate %515 by %c11_i32_235 dim 1 : vector<32x128xf32>, i32 -> vector<32x128xf32>
    %c16_236 = arith.constant 16 : index
    %c7_237 = arith.constant 7 : index
    %574 = vector.load %arg3[%c16_236, %c7_237] : memref<48x49xf32, #tpu.memory_space<vmem>>, vector<32x1xf32>
    %c63 = arith.constant 63 : index
    %c0_238 = arith.constant 0 : index
    %575 = vector.load %arg2[%c63, %c0_238] : memref<120x128xf32, #tpu.memory_space<vmem>>, vector<1x128xf32>
    %576 = vector.broadcast %574 : vector<32x1xf32> to vector<32x128xf32>
    %577 = arith.mulf %573, %576 : vector<32x128xf32>
    %578 = vector.broadcast %575 : vector<1x128xf32> to vector<32x128xf32>
    %579 = arith.mulf %577, %578 : vector<32x128xf32>
    %580 = arith.addf %572, %579 : vector<32x128xf32>
    %c10_i32_239 = arith.constant 10 : i32
    %581 = tpu.dynamic_rotate %515 by %c10_i32_239 dim 1 : vector<32x128xf32>, i32 -> vector<32x128xf32>
    %c16_240 = arith.constant 16 : index
    %c8_241 = arith.constant 8 : index
    %582 = vector.load %arg3[%c16_240, %c8_241] : memref<48x49xf32, #tpu.memory_space<vmem>>, vector<32x1xf32>
    %c64 = arith.constant 64 : index
    %c0_242 = arith.constant 0 : index
    %583 = vector.load %arg2[%c64, %c0_242] : memref<120x128xf32, #tpu.memory_space<vmem>>, vector<1x128xf32>
    %584 = vector.broadcast %582 : vector<32x1xf32> to vector<32x128xf32>
    %585 = arith.mulf %581, %584 : vector<32x128xf32>
    %586 = vector.broadcast %583 : vector<1x128xf32> to vector<32x128xf32>
    %587 = arith.mulf %585, %586 : vector<32x128xf32>
    %588 = arith.addf %580, %587 : vector<32x128xf32>
    %c9_i32_243 = arith.constant 9 : i32
    %589 = tpu.dynamic_rotate %515 by %c9_i32_243 dim 1 : vector<32x128xf32>, i32 -> vector<32x128xf32>
    %c16_244 = arith.constant 16 : index
    %c9_245 = arith.constant 9 : index
    %590 = vector.load %arg3[%c16_244, %c9_245] : memref<48x49xf32, #tpu.memory_space<vmem>>, vector<32x1xf32>
    %c65 = arith.constant 65 : index
    %c0_246 = arith.constant 0 : index
    %591 = vector.load %arg2[%c65, %c0_246] : memref<120x128xf32, #tpu.memory_space<vmem>>, vector<1x128xf32>
    %592 = vector.broadcast %590 : vector<32x1xf32> to vector<32x128xf32>
    %593 = arith.mulf %589, %592 : vector<32x128xf32>
    %594 = vector.broadcast %591 : vector<1x128xf32> to vector<32x128xf32>
    %595 = arith.mulf %593, %594 : vector<32x128xf32>
    %596 = arith.addf %588, %595 : vector<32x128xf32>
    %c8_i32_247 = arith.constant 8 : i32
    %597 = tpu.dynamic_rotate %515 by %c8_i32_247 dim 1 : vector<32x128xf32>, i32 -> vector<32x128xf32>
    %c16_248 = arith.constant 16 : index
    %c10_249 = arith.constant 10 : index
    %598 = vector.load %arg3[%c16_248, %c10_249] : memref<48x49xf32, #tpu.memory_space<vmem>>, vector<32x1xf32>
    %c66 = arith.constant 66 : index
    %c0_250 = arith.constant 0 : index
    %599 = vector.load %arg2[%c66, %c0_250] : memref<120x128xf32, #tpu.memory_space<vmem>>, vector<1x128xf32>
    %600 = vector.broadcast %598 : vector<32x1xf32> to vector<32x128xf32>
    %601 = arith.mulf %597, %600 : vector<32x128xf32>
    %602 = vector.broadcast %599 : vector<1x128xf32> to vector<32x128xf32>
    %603 = arith.mulf %601, %602 : vector<32x128xf32>
    %604 = arith.addf %596, %603 : vector<32x128xf32>
    %c7_i32_251 = arith.constant 7 : i32
    %605 = tpu.dynamic_rotate %515 by %c7_i32_251 dim 1 : vector<32x128xf32>, i32 -> vector<32x128xf32>
    %c16_252 = arith.constant 16 : index
    %c11_253 = arith.constant 11 : index
    %606 = vector.load %arg3[%c16_252, %c11_253] : memref<48x49xf32, #tpu.memory_space<vmem>>, vector<32x1xf32>
    %c67 = arith.constant 67 : index
    %c0_254 = arith.constant 0 : index
    %607 = vector.load %arg2[%c67, %c0_254] : memref<120x128xf32, #tpu.memory_space<vmem>>, vector<1x128xf32>
    %608 = vector.broadcast %606 : vector<32x1xf32> to vector<32x128xf32>
    %609 = arith.mulf %605, %608 : vector<32x128xf32>
    %610 = vector.broadcast %607 : vector<1x128xf32> to vector<32x128xf32>
    %611 = arith.mulf %609, %610 : vector<32x128xf32>
    %612 = arith.addf %604, %611 : vector<32x128xf32>
    %c6_i32_255 = arith.constant 6 : i32
    %613 = tpu.dynamic_rotate %515 by %c6_i32_255 dim 1 : vector<32x128xf32>, i32 -> vector<32x128xf32>
    %c16_256 = arith.constant 16 : index
    %c12_257 = arith.constant 12 : index
    %614 = vector.load %arg3[%c16_256, %c12_257] : memref<48x49xf32, #tpu.memory_space<vmem>>, vector<32x1xf32>
    %c68 = arith.constant 68 : index
    %c0_258 = arith.constant 0 : index
    %615 = vector.load %arg2[%c68, %c0_258] : memref<120x128xf32, #tpu.memory_space<vmem>>, vector<1x128xf32>
    %616 = vector.broadcast %614 : vector<32x1xf32> to vector<32x128xf32>
    %617 = arith.mulf %613, %616 : vector<32x128xf32>
    %618 = vector.broadcast %615 : vector<1x128xf32> to vector<32x128xf32>
    %619 = arith.mulf %617, %618 : vector<32x128xf32>
    %620 = arith.addf %612, %619 : vector<32x128xf32>
    %c5_i32_259 = arith.constant 5 : i32
    %621 = tpu.dynamic_rotate %515 by %c5_i32_259 dim 1 : vector<32x128xf32>, i32 -> vector<32x128xf32>
    %c16_260 = arith.constant 16 : index
    %c13_261 = arith.constant 13 : index
    %622 = vector.load %arg3[%c16_260, %c13_261] : memref<48x49xf32, #tpu.memory_space<vmem>>, vector<32x1xf32>
    %c69 = arith.constant 69 : index
    %c0_262 = arith.constant 0 : index
    %623 = vector.load %arg2[%c69, %c0_262] : memref<120x128xf32, #tpu.memory_space<vmem>>, vector<1x128xf32>
    %624 = vector.broadcast %622 : vector<32x1xf32> to vector<32x128xf32>
    %625 = arith.mulf %621, %624 : vector<32x128xf32>
    %626 = vector.broadcast %623 : vector<1x128xf32> to vector<32x128xf32>
    %627 = arith.mulf %625, %626 : vector<32x128xf32>
    %628 = arith.addf %620, %627 : vector<32x128xf32>
    %c7_i32_263 = arith.constant 7 : i32
    %629 = tpu.dynamic_rotate %515 by %c7_i32_263 dim 1 : vector<32x128xf32>, i32 -> vector<32x128xf32>
    %c16_264 = arith.constant 16 : index
    %c14_265 = arith.constant 14 : index
    %630 = vector.load %arg3[%c16_264, %c14_265] : memref<48x49xf32, #tpu.memory_space<vmem>>, vector<32x1xf32>
    %c70 = arith.constant 70 : index
    %c0_266 = arith.constant 0 : index
    %631 = vector.load %arg2[%c70, %c0_266] : memref<120x128xf32, #tpu.memory_space<vmem>>, vector<1x128xf32>
    %632 = vector.broadcast %630 : vector<32x1xf32> to vector<32x128xf32>
    %633 = arith.mulf %629, %632 : vector<32x128xf32>
    %634 = vector.broadcast %631 : vector<1x128xf32> to vector<32x128xf32>
    %635 = arith.mulf %633, %634 : vector<32x128xf32>
    %636 = arith.addf %628, %635 : vector<32x128xf32>
    %c6_i32_267 = arith.constant 6 : i32
    %637 = tpu.dynamic_rotate %515 by %c6_i32_267 dim 1 : vector<32x128xf32>, i32 -> vector<32x128xf32>
    %c16_268 = arith.constant 16 : index
    %c15_269 = arith.constant 15 : index
    %638 = vector.load %arg3[%c16_268, %c15_269] : memref<48x49xf32, #tpu.memory_space<vmem>>, vector<32x1xf32>
    %c71 = arith.constant 71 : index
    %c0_270 = arith.constant 0 : index
    %639 = vector.load %arg2[%c71, %c0_270] : memref<120x128xf32, #tpu.memory_space<vmem>>, vector<1x128xf32>
    %640 = vector.broadcast %638 : vector<32x1xf32> to vector<32x128xf32>
    %641 = arith.mulf %637, %640 : vector<32x128xf32>
    %642 = vector.broadcast %639 : vector<1x128xf32> to vector<32x128xf32>
    %643 = arith.mulf %641, %642 : vector<32x128xf32>
    %644 = arith.addf %636, %643 : vector<32x128xf32>
    %c5_i32_271 = arith.constant 5 : i32
    %645 = tpu.dynamic_rotate %515 by %c5_i32_271 dim 1 : vector<32x128xf32>, i32 -> vector<32x128xf32>
    %c16_272 = arith.constant 16 : index
    %c16_273 = arith.constant 16 : index
    %646 = vector.load %arg3[%c16_272, %c16_273] : memref<48x49xf32, #tpu.memory_space<vmem>>, vector<32x1xf32>
    %c72 = arith.constant 72 : index
    %c0_274 = arith.constant 0 : index
    %647 = vector.load %arg2[%c72, %c0_274] : memref<120x128xf32, #tpu.memory_space<vmem>>, vector<1x128xf32>
    %648 = vector.broadcast %646 : vector<32x1xf32> to vector<32x128xf32>
    %649 = arith.mulf %645, %648 : vector<32x128xf32>
    %650 = vector.broadcast %647 : vector<1x128xf32> to vector<32x128xf32>
    %651 = arith.mulf %649, %650 : vector<32x128xf32>
    %652 = arith.addf %644, %651 : vector<32x128xf32>
    %c4_i32 = arith.constant 4 : i32
    %653 = tpu.dynamic_rotate %515 by %c4_i32 dim 1 : vector<32x128xf32>, i32 -> vector<32x128xf32>
    %c16_275 = arith.constant 16 : index
    %c17_276 = arith.constant 17 : index
    %654 = vector.load %arg3[%c16_275, %c17_276] : memref<48x49xf32, #tpu.memory_space<vmem>>, vector<32x1xf32>
    %c73 = arith.constant 73 : index
    %c0_277 = arith.constant 0 : index
    %655 = vector.load %arg2[%c73, %c0_277] : memref<120x128xf32, #tpu.memory_space<vmem>>, vector<1x128xf32>
    %656 = vector.broadcast %654 : vector<32x1xf32> to vector<32x128xf32>
    %657 = arith.mulf %653, %656 : vector<32x128xf32>
    %658 = vector.broadcast %655 : vector<1x128xf32> to vector<32x128xf32>
    %659 = arith.mulf %657, %658 : vector<32x128xf32>
    %660 = arith.addf %652, %659 : vector<32x128xf32>
    %c3_i32_278 = arith.constant 3 : i32
    %661 = tpu.dynamic_rotate %515 by %c3_i32_278 dim 1 : vector<32x128xf32>, i32 -> vector<32x128xf32>
    %c16_279 = arith.constant 16 : index
    %c18_280 = arith.constant 18 : index
    %662 = vector.load %arg3[%c16_279, %c18_280] : memref<48x49xf32, #tpu.memory_space<vmem>>, vector<32x1xf32>
    %c74 = arith.constant 74 : index
    %c0_281 = arith.constant 0 : index
    %663 = vector.load %arg2[%c74, %c0_281] : memref<120x128xf32, #tpu.memory_space<vmem>>, vector<1x128xf32>
    %664 = vector.broadcast %662 : vector<32x1xf32> to vector<32x128xf32>
    %665 = arith.mulf %661, %664 : vector<32x128xf32>
    %666 = vector.broadcast %663 : vector<1x128xf32> to vector<32x128xf32>
    %667 = arith.mulf %665, %666 : vector<32x128xf32>
    %668 = arith.addf %660, %667 : vector<32x128xf32>
    %c2_i32_282 = arith.constant 2 : i32
    %669 = tpu.dynamic_rotate %515 by %c2_i32_282 dim 1 : vector<32x128xf32>, i32 -> vector<32x128xf32>
    %c16_283 = arith.constant 16 : index
    %c19_284 = arith.constant 19 : index
    %670 = vector.load %arg3[%c16_283, %c19_284] : memref<48x49xf32, #tpu.memory_space<vmem>>, vector<32x1xf32>
    %c75 = arith.constant 75 : index
    %c0_285 = arith.constant 0 : index
    %671 = vector.load %arg2[%c75, %c0_285] : memref<120x128xf32, #tpu.memory_space<vmem>>, vector<1x128xf32>
    %672 = vector.broadcast %670 : vector<32x1xf32> to vector<32x128xf32>
    %673 = arith.mulf %669, %672 : vector<32x128xf32>
    %674 = vector.broadcast %671 : vector<1x128xf32> to vector<32x128xf32>
    %675 = arith.mulf %673, %674 : vector<32x128xf32>
    %676 = arith.addf %668, %675 : vector<32x128xf32>
    %c1_i32_286 = arith.constant 1 : i32
    %677 = tpu.dynamic_rotate %515 by %c1_i32_286 dim 1 : vector<32x128xf32>, i32 -> vector<32x128xf32>
    %c16_287 = arith.constant 16 : index
    %c20_288 = arith.constant 20 : index
    %678 = vector.load %arg3[%c16_287, %c20_288] : memref<48x49xf32, #tpu.memory_space<vmem>>, vector<32x1xf32>
    %c76 = arith.constant 76 : index
    %c0_289 = arith.constant 0 : index
    %679 = vector.load %arg2[%c76, %c0_289] : memref<120x128xf32, #tpu.memory_space<vmem>>, vector<1x128xf32>
    %680 = vector.broadcast %678 : vector<32x1xf32> to vector<32x128xf32>
    %681 = arith.mulf %677, %680 : vector<32x128xf32>
    %682 = vector.broadcast %679 : vector<1x128xf32> to vector<32x128xf32>
    %683 = arith.mulf %681, %682 : vector<32x128xf32>
    %684 = arith.addf %676, %683 : vector<32x128xf32>
    %c3_i32_290 = arith.constant 3 : i32
    %685 = tpu.dynamic_rotate %515 by %c3_i32_290 dim 1 : vector<32x128xf32>, i32 -> vector<32x128xf32>
    %c16_291 = arith.constant 16 : index
    %c21_292 = arith.constant 21 : index
    %686 = vector.load %arg3[%c16_291, %c21_292] : memref<48x49xf32, #tpu.memory_space<vmem>>, vector<32x1xf32>
    %c77 = arith.constant 77 : index
    %c0_293 = arith.constant 0 : index
    %687 = vector.load %arg2[%c77, %c0_293] : memref<120x128xf32, #tpu.memory_space<vmem>>, vector<1x128xf32>
    %688 = vector.broadcast %686 : vector<32x1xf32> to vector<32x128xf32>
    %689 = arith.mulf %685, %688 : vector<32x128xf32>
    %690 = vector.broadcast %687 : vector<1x128xf32> to vector<32x128xf32>
    %691 = arith.mulf %689, %690 : vector<32x128xf32>
    %692 = arith.addf %684, %691 : vector<32x128xf32>
    %c2_i32_294 = arith.constant 2 : i32
    %693 = tpu.dynamic_rotate %515 by %c2_i32_294 dim 1 : vector<32x128xf32>, i32 -> vector<32x128xf32>
    %c16_295 = arith.constant 16 : index
    %c22_296 = arith.constant 22 : index
    %694 = vector.load %arg3[%c16_295, %c22_296] : memref<48x49xf32, #tpu.memory_space<vmem>>, vector<32x1xf32>
    %c78 = arith.constant 78 : index
    %c0_297 = arith.constant 0 : index
    %695 = vector.load %arg2[%c78, %c0_297] : memref<120x128xf32, #tpu.memory_space<vmem>>, vector<1x128xf32>
    %696 = vector.broadcast %694 : vector<32x1xf32> to vector<32x128xf32>
    %697 = arith.mulf %693, %696 : vector<32x128xf32>
    %698 = vector.broadcast %695 : vector<1x128xf32> to vector<32x128xf32>
    %699 = arith.mulf %697, %698 : vector<32x128xf32>
    %700 = arith.addf %692, %699 : vector<32x128xf32>
    %c1_i32_298 = arith.constant 1 : i32
    %701 = tpu.dynamic_rotate %515 by %c1_i32_298 dim 1 : vector<32x128xf32>, i32 -> vector<32x128xf32>
    %c16_299 = arith.constant 16 : index
    %c23_300 = arith.constant 23 : index
    %702 = vector.load %arg3[%c16_299, %c23_300] : memref<48x49xf32, #tpu.memory_space<vmem>>, vector<32x1xf32>
    %c79 = arith.constant 79 : index
    %c0_301 = arith.constant 0 : index
    %703 = vector.load %arg2[%c79, %c0_301] : memref<120x128xf32, #tpu.memory_space<vmem>>, vector<1x128xf32>
    %704 = vector.broadcast %702 : vector<32x1xf32> to vector<32x128xf32>
    %705 = arith.mulf %701, %704 : vector<32x128xf32>
    %706 = vector.broadcast %703 : vector<1x128xf32> to vector<32x128xf32>
    %707 = arith.mulf %705, %706 : vector<32x128xf32>
    %708 = arith.addf %700, %707 : vector<32x128xf32>
    %c16_302 = arith.constant 16 : index
    %c24_303 = arith.constant 24 : index
    %709 = vector.load %arg3[%c16_302, %c24_303] : memref<48x49xf32, #tpu.memory_space<vmem>>, vector<32x1xf32>
    %c80_304 = arith.constant 80 : index
    %c0_305 = arith.constant 0 : index
    %710 = vector.load %arg2[%c80_304, %c0_305] : memref<120x128xf32, #tpu.memory_space<vmem>>, vector<1x128xf32>
    %711 = vector.broadcast %709 : vector<32x1xf32> to vector<32x128xf32>
    %712 = arith.mulf %515, %711 : vector<32x128xf32>
    %713 = vector.broadcast %710 : vector<1x128xf32> to vector<32x128xf32>
    %714 = arith.mulf %712, %713 : vector<32x128xf32>
    %715 = arith.addf %708, %714 : vector<32x128xf32>
    %c127_i32_306 = arith.constant 127 : i32
    %716 = tpu.dynamic_rotate %515 by %c127_i32_306 dim 1 : vector<32x128xf32>, i32 -> vector<32x128xf32>
    %c16_307 = arith.constant 16 : index
    %c25_308 = arith.constant 25 : index
    %717 = vector.load %arg3[%c16_307, %c25_308] : memref<48x49xf32, #tpu.memory_space<vmem>>, vector<32x1xf32>
    %c81 = arith.constant 81 : index
    %c0_309 = arith.constant 0 : index
    %718 = vector.load %arg2[%c81, %c0_309] : memref<120x128xf32, #tpu.memory_space<vmem>>, vector<1x128xf32>
    %719 = vector.broadcast %717 : vector<32x1xf32> to vector<32x128xf32>
    %720 = arith.mulf %716, %719 : vector<32x128xf32>
    %721 = vector.broadcast %718 : vector<1x128xf32> to vector<32x128xf32>
    %722 = arith.mulf %720, %721 : vector<32x128xf32>
    %723 = arith.addf %715, %722 : vector<32x128xf32>
    %c126_i32_310 = arith.constant 126 : i32
    %724 = tpu.dynamic_rotate %515 by %c126_i32_310 dim 1 : vector<32x128xf32>, i32 -> vector<32x128xf32>
    %c16_311 = arith.constant 16 : index
    %c26_312 = arith.constant 26 : index
    %725 = vector.load %arg3[%c16_311, %c26_312] : memref<48x49xf32, #tpu.memory_space<vmem>>, vector<32x1xf32>
    %c82 = arith.constant 82 : index
    %c0_313 = arith.constant 0 : index
    %726 = vector.load %arg2[%c82, %c0_313] : memref<120x128xf32, #tpu.memory_space<vmem>>, vector<1x128xf32>
    %727 = vector.broadcast %725 : vector<32x1xf32> to vector<32x128xf32>
    %728 = arith.mulf %724, %727 : vector<32x128xf32>
    %729 = vector.broadcast %726 : vector<1x128xf32> to vector<32x128xf32>
    %730 = arith.mulf %728, %729 : vector<32x128xf32>
    %731 = arith.addf %723, %730 : vector<32x128xf32>
    %c125_i32_314 = arith.constant 125 : i32
    %732 = tpu.dynamic_rotate %515 by %c125_i32_314 dim 1 : vector<32x128xf32>, i32 -> vector<32x128xf32>
    %c16_315 = arith.constant 16 : index
    %c27_316 = arith.constant 27 : index
    %733 = vector.load %arg3[%c16_315, %c27_316] : memref<48x49xf32, #tpu.memory_space<vmem>>, vector<32x1xf32>
    %c83 = arith.constant 83 : index
    %c0_317 = arith.constant 0 : index
    %734 = vector.load %arg2[%c83, %c0_317] : memref<120x128xf32, #tpu.memory_space<vmem>>, vector<1x128xf32>
    %735 = vector.broadcast %733 : vector<32x1xf32> to vector<32x128xf32>
    %736 = arith.mulf %732, %735 : vector<32x128xf32>
    %737 = vector.broadcast %734 : vector<1x128xf32> to vector<32x128xf32>
    %738 = arith.mulf %736, %737 : vector<32x128xf32>
    %739 = arith.addf %731, %738 : vector<32x128xf32>
    %c127_i32_318 = arith.constant 127 : i32
    %740 = tpu.dynamic_rotate %515 by %c127_i32_318 dim 1 : vector<32x128xf32>, i32 -> vector<32x128xf32>
    %c16_319 = arith.constant 16 : index
    %c28_320 = arith.constant 28 : index
    %741 = vector.load %arg3[%c16_319, %c28_320] : memref<48x49xf32, #tpu.memory_space<vmem>>, vector<32x1xf32>
    %c84 = arith.constant 84 : index
    %c0_321 = arith.constant 0 : index
    %742 = vector.load %arg2[%c84, %c0_321] : memref<120x128xf32, #tpu.memory_space<vmem>>, vector<1x128xf32>
    %743 = vector.broadcast %741 : vector<32x1xf32> to vector<32x128xf32>
    %744 = arith.mulf %740, %743 : vector<32x128xf32>
    %745 = vector.broadcast %742 : vector<1x128xf32> to vector<32x128xf32>
    %746 = arith.mulf %744, %745 : vector<32x128xf32>
    %747 = arith.addf %739, %746 : vector<32x128xf32>
    %c126_i32_322 = arith.constant 126 : i32
    %748 = tpu.dynamic_rotate %515 by %c126_i32_322 dim 1 : vector<32x128xf32>, i32 -> vector<32x128xf32>
    %c16_323 = arith.constant 16 : index
    %c29_324 = arith.constant 29 : index
    %749 = vector.load %arg3[%c16_323, %c29_324] : memref<48x49xf32, #tpu.memory_space<vmem>>, vector<32x1xf32>
    %c85 = arith.constant 85 : index
    %c0_325 = arith.constant 0 : index
    %750 = vector.load %arg2[%c85, %c0_325] : memref<120x128xf32, #tpu.memory_space<vmem>>, vector<1x128xf32>
    %751 = vector.broadcast %749 : vector<32x1xf32> to vector<32x128xf32>
    %752 = arith.mulf %748, %751 : vector<32x128xf32>
    %753 = vector.broadcast %750 : vector<1x128xf32> to vector<32x128xf32>
    %754 = arith.mulf %752, %753 : vector<32x128xf32>
    %755 = arith.addf %747, %754 : vector<32x128xf32>
    %c125_i32_326 = arith.constant 125 : i32
    %756 = tpu.dynamic_rotate %515 by %c125_i32_326 dim 1 : vector<32x128xf32>, i32 -> vector<32x128xf32>
    %c16_327 = arith.constant 16 : index
    %c30_328 = arith.constant 30 : index
    %757 = vector.load %arg3[%c16_327, %c30_328] : memref<48x49xf32, #tpu.memory_space<vmem>>, vector<32x1xf32>
    %c86 = arith.constant 86 : index
    %c0_329 = arith.constant 0 : index
    %758 = vector.load %arg2[%c86, %c0_329] : memref<120x128xf32, #tpu.memory_space<vmem>>, vector<1x128xf32>
    %759 = vector.broadcast %757 : vector<32x1xf32> to vector<32x128xf32>
    %760 = arith.mulf %756, %759 : vector<32x128xf32>
    %761 = vector.broadcast %758 : vector<1x128xf32> to vector<32x128xf32>
    %762 = arith.mulf %760, %761 : vector<32x128xf32>
    %763 = arith.addf %755, %762 : vector<32x128xf32>
    %c124_i32 = arith.constant 124 : i32
    %764 = tpu.dynamic_rotate %515 by %c124_i32 dim 1 : vector<32x128xf32>, i32 -> vector<32x128xf32>
    %c16_330 = arith.constant 16 : index
    %c31_331 = arith.constant 31 : index
    %765 = vector.load %arg3[%c16_330, %c31_331] : memref<48x49xf32, #tpu.memory_space<vmem>>, vector<32x1xf32>
    %c87 = arith.constant 87 : index
    %c0_332 = arith.constant 0 : index
    %766 = vector.load %arg2[%c87, %c0_332] : memref<120x128xf32, #tpu.memory_space<vmem>>, vector<1x128xf32>
    %767 = vector.broadcast %765 : vector<32x1xf32> to vector<32x128xf32>
    %768 = arith.mulf %764, %767 : vector<32x128xf32>
    %769 = vector.broadcast %766 : vector<1x128xf32> to vector<32x128xf32>
    %770 = arith.mulf %768, %769 : vector<32x128xf32>
    %771 = arith.addf %763, %770 : vector<32x128xf32>
    %c123_i32_333 = arith.constant 123 : i32
    %772 = tpu.dynamic_rotate %515 by %c123_i32_333 dim 1 : vector<32x128xf32>, i32 -> vector<32x128xf32>
    %c16_334 = arith.constant 16 : index
    %c32_335 = arith.constant 32 : index
    %773 = vector.load %arg3[%c16_334, %c32_335] : memref<48x49xf32, #tpu.memory_space<vmem>>, vector<32x1xf32>
    %c88 = arith.constant 88 : index
    %c0_336 = arith.constant 0 : index
    %774 = vector.load %arg2[%c88, %c0_336] : memref<120x128xf32, #tpu.memory_space<vmem>>, vector<1x128xf32>
    %775 = vector.broadcast %773 : vector<32x1xf32> to vector<32x128xf32>
    %776 = arith.mulf %772, %775 : vector<32x128xf32>
    %777 = vector.broadcast %774 : vector<1x128xf32> to vector<32x128xf32>
    %778 = arith.mulf %776, %777 : vector<32x128xf32>
    %779 = arith.addf %771, %778 : vector<32x128xf32>
    %c122_i32_337 = arith.constant 122 : i32
    %780 = tpu.dynamic_rotate %515 by %c122_i32_337 dim 1 : vector<32x128xf32>, i32 -> vector<32x128xf32>
    %c16_338 = arith.constant 16 : index
    %c33_339 = arith.constant 33 : index
    %781 = vector.load %arg3[%c16_338, %c33_339] : memref<48x49xf32, #tpu.memory_space<vmem>>, vector<32x1xf32>
    %c89 = arith.constant 89 : index
    %c0_340 = arith.constant 0 : index
    %782 = vector.load %arg2[%c89, %c0_340] : memref<120x128xf32, #tpu.memory_space<vmem>>, vector<1x128xf32>
    %783 = vector.broadcast %781 : vector<32x1xf32> to vector<32x128xf32>
    %784 = arith.mulf %780, %783 : vector<32x128xf32>
    %785 = vector.broadcast %782 : vector<1x128xf32> to vector<32x128xf32>
    %786 = arith.mulf %784, %785 : vector<32x128xf32>
    %787 = arith.addf %779, %786 : vector<32x128xf32>
    %c121_i32_341 = arith.constant 121 : i32
    %788 = tpu.dynamic_rotate %515 by %c121_i32_341 dim 1 : vector<32x128xf32>, i32 -> vector<32x128xf32>
    %c16_342 = arith.constant 16 : index
    %c34_343 = arith.constant 34 : index
    %789 = vector.load %arg3[%c16_342, %c34_343] : memref<48x49xf32, #tpu.memory_space<vmem>>, vector<32x1xf32>
    %c90 = arith.constant 90 : index
    %c0_344 = arith.constant 0 : index
    %790 = vector.load %arg2[%c90, %c0_344] : memref<120x128xf32, #tpu.memory_space<vmem>>, vector<1x128xf32>
    %791 = vector.broadcast %789 : vector<32x1xf32> to vector<32x128xf32>
    %792 = arith.mulf %788, %791 : vector<32x128xf32>
    %793 = vector.broadcast %790 : vector<1x128xf32> to vector<32x128xf32>
    %794 = arith.mulf %792, %793 : vector<32x128xf32>
    %795 = arith.addf %787, %794 : vector<32x128xf32>
    %c123_i32_345 = arith.constant 123 : i32
    %796 = tpu.dynamic_rotate %515 by %c123_i32_345 dim 1 : vector<32x128xf32>, i32 -> vector<32x128xf32>
    %c16_346 = arith.constant 16 : index
    %c35_347 = arith.constant 35 : index
    %797 = vector.load %arg3[%c16_346, %c35_347] : memref<48x49xf32, #tpu.memory_space<vmem>>, vector<32x1xf32>
    %c91 = arith.constant 91 : index
    %c0_348 = arith.constant 0 : index
    %798 = vector.load %arg2[%c91, %c0_348] : memref<120x128xf32, #tpu.memory_space<vmem>>, vector<1x128xf32>
    %799 = vector.broadcast %797 : vector<32x1xf32> to vector<32x128xf32>
    %800 = arith.mulf %796, %799 : vector<32x128xf32>
    %801 = vector.broadcast %798 : vector<1x128xf32> to vector<32x128xf32>
    %802 = arith.mulf %800, %801 : vector<32x128xf32>
    %803 = arith.addf %795, %802 : vector<32x128xf32>
    %c122_i32_349 = arith.constant 122 : i32
    %804 = tpu.dynamic_rotate %515 by %c122_i32_349 dim 1 : vector<32x128xf32>, i32 -> vector<32x128xf32>
    %c16_350 = arith.constant 16 : index
    %c36_351 = arith.constant 36 : index
    %805 = vector.load %arg3[%c16_350, %c36_351] : memref<48x49xf32, #tpu.memory_space<vmem>>, vector<32x1xf32>
    %c92 = arith.constant 92 : index
    %c0_352 = arith.constant 0 : index
    %806 = vector.load %arg2[%c92, %c0_352] : memref<120x128xf32, #tpu.memory_space<vmem>>, vector<1x128xf32>
    %807 = vector.broadcast %805 : vector<32x1xf32> to vector<32x128xf32>
    %808 = arith.mulf %804, %807 : vector<32x128xf32>
    %809 = vector.broadcast %806 : vector<1x128xf32> to vector<32x128xf32>
    %810 = arith.mulf %808, %809 : vector<32x128xf32>
    %811 = arith.addf %803, %810 : vector<32x128xf32>
    %c121_i32_353 = arith.constant 121 : i32
    %812 = tpu.dynamic_rotate %515 by %c121_i32_353 dim 1 : vector<32x128xf32>, i32 -> vector<32x128xf32>
    %c16_354 = arith.constant 16 : index
    %c37_355 = arith.constant 37 : index
    %813 = vector.load %arg3[%c16_354, %c37_355] : memref<48x49xf32, #tpu.memory_space<vmem>>, vector<32x1xf32>
    %c93 = arith.constant 93 : index
    %c0_356 = arith.constant 0 : index
    %814 = vector.load %arg2[%c93, %c0_356] : memref<120x128xf32, #tpu.memory_space<vmem>>, vector<1x128xf32>
    %815 = vector.broadcast %813 : vector<32x1xf32> to vector<32x128xf32>
    %816 = arith.mulf %812, %815 : vector<32x128xf32>
    %817 = vector.broadcast %814 : vector<1x128xf32> to vector<32x128xf32>
    %818 = arith.mulf %816, %817 : vector<32x128xf32>
    %819 = arith.addf %811, %818 : vector<32x128xf32>
    %c120_i32_357 = arith.constant 120 : i32
    %820 = tpu.dynamic_rotate %515 by %c120_i32_357 dim 1 : vector<32x128xf32>, i32 -> vector<32x128xf32>
    %c16_358 = arith.constant 16 : index
    %c38_359 = arith.constant 38 : index
    %821 = vector.load %arg3[%c16_358, %c38_359] : memref<48x49xf32, #tpu.memory_space<vmem>>, vector<32x1xf32>
    %c94 = arith.constant 94 : index
    %c0_360 = arith.constant 0 : index
    %822 = vector.load %arg2[%c94, %c0_360] : memref<120x128xf32, #tpu.memory_space<vmem>>, vector<1x128xf32>
    %823 = vector.broadcast %821 : vector<32x1xf32> to vector<32x128xf32>
    %824 = arith.mulf %820, %823 : vector<32x128xf32>
    %825 = vector.broadcast %822 : vector<1x128xf32> to vector<32x128xf32>
    %826 = arith.mulf %824, %825 : vector<32x128xf32>
    %827 = arith.addf %819, %826 : vector<32x128xf32>
    %c119_i32_361 = arith.constant 119 : i32
    %828 = tpu.dynamic_rotate %515 by %c119_i32_361 dim 1 : vector<32x128xf32>, i32 -> vector<32x128xf32>
    %c16_362 = arith.constant 16 : index
    %c39_363 = arith.constant 39 : index
    %829 = vector.load %arg3[%c16_362, %c39_363] : memref<48x49xf32, #tpu.memory_space<vmem>>, vector<32x1xf32>
    %c95 = arith.constant 95 : index
    %c0_364 = arith.constant 0 : index
    %830 = vector.load %arg2[%c95, %c0_364] : memref<120x128xf32, #tpu.memory_space<vmem>>, vector<1x128xf32>
    %831 = vector.broadcast %829 : vector<32x1xf32> to vector<32x128xf32>
    %832 = arith.mulf %828, %831 : vector<32x128xf32>
    %833 = vector.broadcast %830 : vector<1x128xf32> to vector<32x128xf32>
    %834 = arith.mulf %832, %833 : vector<32x128xf32>
    %835 = arith.addf %827, %834 : vector<32x128xf32>
    %c118_i32_365 = arith.constant 118 : i32
    %836 = tpu.dynamic_rotate %515 by %c118_i32_365 dim 1 : vector<32x128xf32>, i32 -> vector<32x128xf32>
    %c16_366 = arith.constant 16 : index
    %c40_367 = arith.constant 40 : index
    %837 = vector.load %arg3[%c16_366, %c40_367] : memref<48x49xf32, #tpu.memory_space<vmem>>, vector<32x1xf32>
    %c96_368 = arith.constant 96 : index
    %c0_369 = arith.constant 0 : index
    %838 = vector.load %arg2[%c96_368, %c0_369] : memref<120x128xf32, #tpu.memory_space<vmem>>, vector<1x128xf32>
    %839 = vector.broadcast %837 : vector<32x1xf32> to vector<32x128xf32>
    %840 = arith.mulf %836, %839 : vector<32x128xf32>
    %841 = vector.broadcast %838 : vector<1x128xf32> to vector<32x128xf32>
    %842 = arith.mulf %840, %841 : vector<32x128xf32>
    %843 = arith.addf %835, %842 : vector<32x128xf32>
    %c117_i32_370 = arith.constant 117 : i32
    %844 = tpu.dynamic_rotate %515 by %c117_i32_370 dim 1 : vector<32x128xf32>, i32 -> vector<32x128xf32>
    %c16_371 = arith.constant 16 : index
    %c41_372 = arith.constant 41 : index
    %845 = vector.load %arg3[%c16_371, %c41_372] : memref<48x49xf32, #tpu.memory_space<vmem>>, vector<32x1xf32>
    %c97 = arith.constant 97 : index
    %c0_373 = arith.constant 0 : index
    %846 = vector.load %arg2[%c97, %c0_373] : memref<120x128xf32, #tpu.memory_space<vmem>>, vector<1x128xf32>
    %847 = vector.broadcast %845 : vector<32x1xf32> to vector<32x128xf32>
    %848 = arith.mulf %844, %847 : vector<32x128xf32>
    %849 = vector.broadcast %846 : vector<1x128xf32> to vector<32x128xf32>
    %850 = arith.mulf %848, %849 : vector<32x128xf32>
    %851 = arith.addf %843, %850 : vector<32x128xf32>
    %c119_i32_374 = arith.constant 119 : i32
    %852 = tpu.dynamic_rotate %515 by %c119_i32_374 dim 1 : vector<32x128xf32>, i32 -> vector<32x128xf32>
    %c16_375 = arith.constant 16 : index
    %c42_376 = arith.constant 42 : index
    %853 = vector.load %arg3[%c16_375, %c42_376] : memref<48x49xf32, #tpu.memory_space<vmem>>, vector<32x1xf32>
    %c98 = arith.constant 98 : index
    %c0_377 = arith.constant 0 : index
    %854 = vector.load %arg2[%c98, %c0_377] : memref<120x128xf32, #tpu.memory_space<vmem>>, vector<1x128xf32>
    %855 = vector.broadcast %853 : vector<32x1xf32> to vector<32x128xf32>
    %856 = arith.mulf %852, %855 : vector<32x128xf32>
    %857 = vector.broadcast %854 : vector<1x128xf32> to vector<32x128xf32>
    %858 = arith.mulf %856, %857 : vector<32x128xf32>
    %859 = arith.addf %851, %858 : vector<32x128xf32>
    %c118_i32_378 = arith.constant 118 : i32
    %860 = tpu.dynamic_rotate %515 by %c118_i32_378 dim 1 : vector<32x128xf32>, i32 -> vector<32x128xf32>
    %c16_379 = arith.constant 16 : index
    %c43_380 = arith.constant 43 : index
    %861 = vector.load %arg3[%c16_379, %c43_380] : memref<48x49xf32, #tpu.memory_space<vmem>>, vector<32x1xf32>
    %c99 = arith.constant 99 : index
    %c0_381 = arith.constant 0 : index
    %862 = vector.load %arg2[%c99, %c0_381] : memref<120x128xf32, #tpu.memory_space<vmem>>, vector<1x128xf32>
    %863 = vector.broadcast %861 : vector<32x1xf32> to vector<32x128xf32>
    %864 = arith.mulf %860, %863 : vector<32x128xf32>
    %865 = vector.broadcast %862 : vector<1x128xf32> to vector<32x128xf32>
    %866 = arith.mulf %864, %865 : vector<32x128xf32>
    %867 = arith.addf %859, %866 : vector<32x128xf32>
    %c117_i32_382 = arith.constant 117 : i32
    %868 = tpu.dynamic_rotate %515 by %c117_i32_382 dim 1 : vector<32x128xf32>, i32 -> vector<32x128xf32>
    %c16_383 = arith.constant 16 : index
    %c44_384 = arith.constant 44 : index
    %869 = vector.load %arg3[%c16_383, %c44_384] : memref<48x49xf32, #tpu.memory_space<vmem>>, vector<32x1xf32>
    %c100 = arith.constant 100 : index
    %c0_385 = arith.constant 0 : index
    %870 = vector.load %arg2[%c100, %c0_385] : memref<120x128xf32, #tpu.memory_space<vmem>>, vector<1x128xf32>
    %871 = vector.broadcast %869 : vector<32x1xf32> to vector<32x128xf32>
    %872 = arith.mulf %868, %871 : vector<32x128xf32>
    %873 = vector.broadcast %870 : vector<1x128xf32> to vector<32x128xf32>
    %874 = arith.mulf %872, %873 : vector<32x128xf32>
    %875 = arith.addf %867, %874 : vector<32x128xf32>
    %c116_i32 = arith.constant 116 : i32
    %876 = tpu.dynamic_rotate %515 by %c116_i32 dim 1 : vector<32x128xf32>, i32 -> vector<32x128xf32>
    %c16_386 = arith.constant 16 : index
    %c45_387 = arith.constant 45 : index
    %877 = vector.load %arg3[%c16_386, %c45_387] : memref<48x49xf32, #tpu.memory_space<vmem>>, vector<32x1xf32>
    %c101 = arith.constant 101 : index
    %c0_388 = arith.constant 0 : index
    %878 = vector.load %arg2[%c101, %c0_388] : memref<120x128xf32, #tpu.memory_space<vmem>>, vector<1x128xf32>
    %879 = vector.broadcast %877 : vector<32x1xf32> to vector<32x128xf32>
    %880 = arith.mulf %876, %879 : vector<32x128xf32>
    %881 = vector.broadcast %878 : vector<1x128xf32> to vector<32x128xf32>
    %882 = arith.mulf %880, %881 : vector<32x128xf32>
    %883 = arith.addf %875, %882 : vector<32x128xf32>
    %c115_i32_389 = arith.constant 115 : i32
    %884 = tpu.dynamic_rotate %515 by %c115_i32_389 dim 1 : vector<32x128xf32>, i32 -> vector<32x128xf32>
    %c16_390 = arith.constant 16 : index
    %c46_391 = arith.constant 46 : index
    %885 = vector.load %arg3[%c16_390, %c46_391] : memref<48x49xf32, #tpu.memory_space<vmem>>, vector<32x1xf32>
    %c102 = arith.constant 102 : index
    %c0_392 = arith.constant 0 : index
    %886 = vector.load %arg2[%c102, %c0_392] : memref<120x128xf32, #tpu.memory_space<vmem>>, vector<1x128xf32>
    %887 = vector.broadcast %885 : vector<32x1xf32> to vector<32x128xf32>
    %888 = arith.mulf %884, %887 : vector<32x128xf32>
    %889 = vector.broadcast %886 : vector<1x128xf32> to vector<32x128xf32>
    %890 = arith.mulf %888, %889 : vector<32x128xf32>
    %891 = arith.addf %883, %890 : vector<32x128xf32>
    %c114_i32_393 = arith.constant 114 : i32
    %892 = tpu.dynamic_rotate %515 by %c114_i32_393 dim 1 : vector<32x128xf32>, i32 -> vector<32x128xf32>
    %c16_394 = arith.constant 16 : index
    %c47_395 = arith.constant 47 : index
    %893 = vector.load %arg3[%c16_394, %c47_395] : memref<48x49xf32, #tpu.memory_space<vmem>>, vector<32x1xf32>
    %c103 = arith.constant 103 : index
    %c0_396 = arith.constant 0 : index
    %894 = vector.load %arg2[%c103, %c0_396] : memref<120x128xf32, #tpu.memory_space<vmem>>, vector<1x128xf32>
    %895 = vector.broadcast %893 : vector<32x1xf32> to vector<32x128xf32>
    %896 = arith.mulf %892, %895 : vector<32x128xf32>
    %897 = vector.broadcast %894 : vector<1x128xf32> to vector<32x128xf32>
    %898 = arith.mulf %896, %897 : vector<32x128xf32>
    %899 = arith.addf %891, %898 : vector<32x128xf32>
    %c113_i32_397 = arith.constant 113 : i32
    %900 = tpu.dynamic_rotate %515 by %c113_i32_397 dim 1 : vector<32x128xf32>, i32 -> vector<32x128xf32>
    %c16_398 = arith.constant 16 : index
    %c48_399 = arith.constant 48 : index
    %901 = vector.load %arg3[%c16_398, %c48_399] : memref<48x49xf32, #tpu.memory_space<vmem>>, vector<32x1xf32>
    %c104 = arith.constant 104 : index
    %c0_400 = arith.constant 0 : index
    %902 = vector.load %arg2[%c104, %c0_400] : memref<120x128xf32, #tpu.memory_space<vmem>>, vector<1x128xf32>
    %903 = vector.broadcast %901 : vector<32x1xf32> to vector<32x128xf32>
    %904 = arith.mulf %900, %903 : vector<32x128xf32>
    %905 = vector.broadcast %902 : vector<1x128xf32> to vector<32x128xf32>
    %906 = arith.mulf %904, %905 : vector<32x128xf32>
    %907 = arith.addf %899, %906 : vector<32x128xf32>
    %c0_401 = arith.constant 0 : index
    %c11_402 = arith.constant 11 : index
    %908 = vector.load %arg1[%c0_401, %c11_402] : memref<128x18xf32, #tpu.memory_space<vmem>>, vector<32x1xf32>
    %909 = vector.broadcast %908 : vector<32x1xf32> to vector<32x128xf32>
    %910 = arith.addf %907, %909 : vector<32x128xf32>
    %c0_403 = arith.constant 0 : index
    %c12_404 = arith.constant 12 : index
    %911 = vector.load %arg1[%c0_403, %c12_404] : memref<128x18xf32, #tpu.memory_space<vmem>>, vector<32x1xf32>
    %c0_405 = arith.constant 0 : index
    %c13_406 = arith.constant 13 : index
    %912 = vector.load %arg1[%c0_405, %c13_406] : memref<128x18xf32, #tpu.memory_space<vmem>>, vector<32x1xf32>
    %cst_407 = arith.constant dense<0.000000e+00> : vector<128xf32>
    %913 = vector.multi_reduction <add>, %910, %cst_407 [0] : vector<32x128xf32> to vector<128xf32>
    %914 = vector.shape_cast %913 : vector<128xf32> to vector<1x128xf32>
    %cst_408 = arith.constant 3.200000e+01 : f32
    %915 = vector.broadcast %cst_408 : f32 to vector<1x128xf32>
    %916 = arith.divf %914, %915 : vector<1x128xf32>
    %917 = vector.broadcast %916 : vector<1x128xf32> to vector<32x128xf32>
    %918 = arith.subf %910, %917 : vector<32x128xf32>
    %919 = arith.mulf %918, %918 : vector<32x128xf32>
    %cst_409 = arith.constant dense<0.000000e+00> : vector<128xf32>
    %920 = vector.multi_reduction <add>, %919, %cst_409 [0] : vector<32x128xf32> to vector<128xf32>
    %921 = vector.shape_cast %920 : vector<128xf32> to vector<1x128xf32>
    %cst_410 = arith.constant 3.200000e+01 : f32
    %922 = vector.broadcast %cst_410 : f32 to vector<1x128xf32>
    %923 = arith.divf %921, %922 : vector<1x128xf32>
    %924 = vector.broadcast %916 : vector<1x128xf32> to vector<32x128xf32>
    %925 = arith.subf %910, %924 : vector<32x128xf32>
    %cst_411 = arith.constant 9.99999997E-7 : f32
    %926 = vector.broadcast %cst_411 : f32 to vector<1x128xf32>
    %927 = arith.addf %923, %926 : vector<1x128xf32>
    %928 = math.rsqrt %927 : vector<1x128xf32>
    %929 = vector.broadcast %928 : vector<1x128xf32> to vector<32x128xf32>
    %930 = arith.mulf %925, %929 : vector<32x128xf32>
    %931 = vector.broadcast %911 : vector<32x1xf32> to vector<32x128xf32>
    %932 = arith.mulf %930, %931 : vector<32x128xf32>
    %933 = vector.broadcast %912 : vector<32x1xf32> to vector<32x128xf32>
    %934 = arith.addf %932, %933 : vector<32x128xf32>
    %c256 = arith.constant 256 : index
    %c0_412 = arith.constant 0 : index
    %935 = vector.load %arg4[%c256, %c0_412] : memref<464x256xbf16, #tpu.memory_space<vmem>>, vector<128x32xbf16>
    %936 = arith.truncf %934 : vector<32x128xf32> to vector<32x128xbf16>
    %cst_413 = arith.constant dense<0.000000e+00> : vector<128x128xf32>
    %937 = tpu.matmul %935, %936, %cst_413 {dimension_numbers = #tpu.dot_dimension_numbers<[1], [0], [0], [1], [0, 0, 1, 1], [], []>} : vector<128x32xbf16>, vector<32x128xbf16>, vector<128x128xf32> -> vector<128x128xf32>
    %c0_414 = arith.constant 0 : index
    %c17_415 = arith.constant 17 : index
    %938 = vector.load %arg1[%c0_414, %c17_415] : memref<128x18xf32, #tpu.memory_space<vmem>>, vector<128x1xf32>
    %939 = vector.broadcast %938 : vector<128x1xf32> to vector<128x128xf32>
    %940 = arith.addf %937, %939 : vector<128x128xf32>
    %cst_416 = arith.constant 5.000000e-01 : f32
    %941 = vector.broadcast %cst_416 : f32 to vector<128x128xf32>
    %942 = arith.mulf %941, %940 : vector<128x128xf32>
    %cst_417 = arith.constant 4.471500e-02 : f32
    %943 = vector.broadcast %cst_417 : f32 to vector<128x128xf32>
    %944 = arith.mulf %943, %940 : vector<128x128xf32>
    %945 = arith.mulf %944, %940 : vector<128x128xf32>
    %946 = arith.mulf %945, %940 : vector<128x128xf32>
    %947 = arith.addf %940, %946 : vector<128x128xf32>
    %cst_418 = arith.constant 0.797884583 : f32
    %948 = vector.broadcast %cst_418 : f32 to vector<128x128xf32>
    %949 = arith.mulf %948, %947 : vector<128x128xf32>
    %950 = math.tanh %949 : vector<128x128xf32>
    %cst_419 = arith.constant 1.000000e+00 : f32
    %951 = vector.broadcast %cst_419 : f32 to vector<128x128xf32>
    %952 = arith.addf %951, %950 : vector<128x128xf32>
    %953 = arith.mulf %942, %952 : vector<128x128xf32>
    %c384 = arith.constant 384 : index
    %c0_420 = arith.constant 0 : index
    %954 = vector.load %arg4[%c384, %c0_420] : memref<464x256xbf16, #tpu.memory_space<vmem>>, vector<32x128xbf16>
    %955 = arith.truncf %953 : vector<128x128xf32> to vector<128x128xbf16>
    %cst_421 = arith.constant dense<0.000000e+00> : vector<32x128xf32>
    %956 = tpu.matmul %954, %955, %cst_421 {dimension_numbers = #tpu.dot_dimension_numbers<[1], [0], [0], [1], [0, 0, 1, 1], [], []>} : vector<32x128xbf16>, vector<128x128xbf16>, vector<32x128xf32> -> vector<32x128xf32>
    %c0_422 = arith.constant 0 : index
    %c14_423 = arith.constant 14 : index
    %957 = vector.load %arg1[%c0_422, %c14_423] : memref<128x18xf32, #tpu.memory_space<vmem>>, vector<32x1xf32>
    %958 = vector.broadcast %957 : vector<32x1xf32> to vector<32x128xf32>
    %959 = arith.addf %956, %958 : vector<32x128xf32>
    %c0_424 = arith.constant 0 : index
    %c15_425 = arith.constant 15 : index
    %960 = vector.load %arg1[%c0_424, %c15_425] : memref<128x18xf32, #tpu.memory_space<vmem>>, vector<32x1xf32>
    %961 = vector.broadcast %960 : vector<32x1xf32> to vector<32x128xf32>
    %962 = arith.mulf %961, %959 : vector<32x128xf32>
    %963 = arith.addf %515, %962 : vector<32x128xf32>
    %c416 = arith.constant 416 : index
    %c0_426 = arith.constant 0 : index
    %964 = vector.load %arg4[%c416, %c0_426] : memref<464x256xbf16, #tpu.memory_space<vmem>>, vector<2x128xbf16>
    %965 = arith.truncf %963 : vector<32x128xf32> to vector<32x128xbf16>
    %cst_427 = arith.constant dense<0.000000e+00> : vector<2x32xf32>
    %966 = tpu.matmul %964, %965, %cst_427 {dimension_numbers = #tpu.dot_dimension_numbers<[1], [1], [0], [0], [0, 0, 1, 0], [], []>} : vector<2x128xbf16>, vector<32x128xbf16>, vector<2x32xf32> -> vector<2x32xf32>
    %c112 = arith.constant 112 : index
    %c0_428 = arith.constant 0 : index
    %967 = vector.load %arg2[%c112, %c0_428] : memref<120x128xf32, #tpu.memory_space<vmem>>, vector<1x32xf32>
    %c113 = arith.constant 113 : index
    %c0_429 = arith.constant 0 : index
    %968 = vector.load %arg2[%c113, %c0_429] : memref<120x128xf32, #tpu.memory_space<vmem>>, vector<1x32xf32>
    %cst_430 = arith.constant dense<0.000000e+00> : vector<2xf32>
    %969 = vector.multi_reduction <add>, %966, %cst_430 [1] : vector<2x32xf32> to vector<2xf32>
    %970 = vector.shape_cast %969 : vector<2xf32> to vector<2x1xf32>
    %cst_431 = arith.constant 3.200000e+01 : f32
    %971 = vector.broadcast %cst_431 : f32 to vector<2x1xf32>
    %972 = arith.divf %970, %971 : vector<2x1xf32>
    %973 = vector.broadcast %972 : vector<2x1xf32> to vector<2x32xf32>
    %974 = arith.subf %966, %973 : vector<2x32xf32>
    %975 = arith.mulf %974, %974 : vector<2x32xf32>
    %cst_432 = arith.constant dense<0.000000e+00> : vector<2xf32>
    %976 = vector.multi_reduction <add>, %975, %cst_432 [1] : vector<2x32xf32> to vector<2xf32>
    %977 = vector.shape_cast %976 : vector<2xf32> to vector<2x1xf32>
    %cst_433 = arith.constant 3.200000e+01 : f32
    %978 = vector.broadcast %cst_433 : f32 to vector<2x1xf32>
    %979 = arith.divf %977, %978 : vector<2x1xf32>
    %980 = vector.broadcast %972 : vector<2x1xf32> to vector<2x32xf32>
    %981 = arith.subf %966, %980 : vector<2x32xf32>
    %cst_434 = arith.constant 9.99999997E-7 : f32
    %982 = vector.broadcast %cst_434 : f32 to vector<2x1xf32>
    %983 = arith.addf %979, %982 : vector<2x1xf32>
    %984 = math.rsqrt %983 : vector<2x1xf32>
    %985 = vector.broadcast %984 : vector<2x1xf32> to vector<2x32xf32>
    %986 = arith.mulf %981, %985 : vector<2x32xf32>
    %987 = vector.broadcast %967 : vector<1x32xf32> to vector<2x32xf32>
    %988 = arith.mulf %986, %987 : vector<2x32xf32>
    %989 = vector.broadcast %968 : vector<1x32xf32> to vector<2x32xf32>
    %990 = arith.addf %988, %989 : vector<2x32xf32>
    %c114 = arith.constant 114 : index
    %c0_435 = arith.constant 0 : index
    %991 = vector.load %arg2[%c114, %c0_435] : memref<120x128xf32, #tpu.memory_space<vmem>>, vector<1x128xf32>
    %c115 = arith.constant 115 : index
    %c0_436 = arith.constant 0 : index
    %992 = vector.load %arg2[%c115, %c0_436] : memref<120x128xf32, #tpu.memory_space<vmem>>, vector<1x128xf32>
    %993 = tpu.concatenate %991, %992 in 1 : vector<1x128xf32>, vector<1x128xf32> -> vector<1x256xf32>
    %c432 = arith.constant 432 : index
    %c0_437 = arith.constant 0 : index
    %994 = vector.load %arg4[%c432, %c0_437] : memref<464x256xbf16, #tpu.memory_space<vmem>>, vector<32x256xbf16>
    %995 = arith.truncf %990 : vector<2x32xf32> to vector<2x32xbf16>
    %cst_438 = arith.constant dense<0.000000e+00> : vector<2x256xf32>
    %996 = tpu.matmul %995, %994, %cst_438 {dimension_numbers = #tpu.dot_dimension_numbers<[1], [0], [0], [1], [0, 0, 1, 1], [], []>} : vector<2x32xbf16>, vector<32x256xbf16>, vector<2x256xf32> -> vector<2x256xf32>
    %997 = vector.broadcast %993 : vector<1x256xf32> to vector<2x256xf32>
    %998 = arith.addf %996, %997 : vector<2x256xf32>
    %cst_439 = arith.constant 5.000000e-01 : f32
    %999 = vector.broadcast %cst_439 : f32 to vector<2x256xf32>
    %1000 = arith.mulf %999, %998 : vector<2x256xf32>
    %1001 = math.tanh %1000 : vector<2x256xf32>
    %cst_440 = arith.constant 1.000000e+00 : f32
    %1002 = vector.broadcast %cst_440 : f32 to vector<2x256xf32>
    %1003 = arith.addf %1001, %1002 : vector<2x256xf32>
    %cst_441 = arith.constant 5.000000e-01 : f32
    %1004 = vector.broadcast %cst_441 : f32 to vector<2x256xf32>
    %1005 = arith.mulf %1004, %1003 : vector<2x256xf32>
    %c0_442 = arith.constant 0 : index
    %c0_443 = arith.constant 0 : index
    %1006 = vector.load %arg5[%c0_442, %c0_443] : memref<2x256xf32, #tpu.memory_space<vmem>>, vector<2x256xf32>
    tpu.vector_store %arg5[%c0_442, %c0_443], %1005 {strides = array<i32>} : memref<2x256xf32, #tpu.memory_space<vmem>>, vector<2x256xf32>,
    return
  }
}

</mosaic_0001>

<llo_original>
// kernel: convnext_bird_forward.1
$region0: #{convnext_bird_forward.1}
  #allocation0 [shape = 'u32[]', space=smem, size = 0x4, offset = 0x4, fixed_abs, tag = 'smem constant byte address 0x4 - core index']
  #allocation1 [shape = 'u32[72,128]{1,0:T(1,128)}', space=vmem, size = 0x9000, scoped, tag = 'internal scratch']
  %s0 = inlined_call_operand.vmem [shape: f32[16,128], index: 0, kind: input, shape index: {}]
  %s1 = inlined_call_operand.vmem [shape: f32[128,18], index: 1, kind: input, shape index: {}]
  %s2 = inlined_call_operand.vmem [shape: f32[120,128], index: 2, kind: input, shape index: {}]
  %s3 = inlined_call_operand.vmem [shape: f32[48,49], index: 3, kind: input, shape index: {}]
  %s4 = inlined_call_operand.vmem [shape: bf16[464,256], index: 4, kind: input, shape index: {}]
  %s5 = inlined_call_operand.hbm [shape: f32[2,256], index: 5, kind: output, shape index: {}]
  %s6 = sld [smem:[#allocation0]]
  $region30: #{convnext_bird_forward.1} parent=0
    _
  %s8 = ssub.s32 1, %s6
  %s9 = scalar_select 0, %s8, %s6
  $region1: #{convnext_bird_forward.1} parent=0
    #allocation2 [shape = 'u8[2048]{0}', space=vmem, size = 0x800, scoped, tag = 'output window, operand 0, single buffered']
    #allocation3 [shape = 's32[1]{0}', space=sflag, size = 0x4, scoped, tag = 'scoped memory for convnext_bird_forward.1']
    %10 = vsyncpa [#allocation3], 0
    // Predicated region
    $region2: #{convnext_bird_forward.1} parent=1 // pred_check
      _
    $region3: #{convnext_bird_forward.1} parent=1 // pred_check_branch
      %12 = sbr.rel (0) target = $region5
    $region4: #{convnext_bird_forward.1} parent=1 // pred_region
      _
    $region5: #{convnext_bird_forward.1} parent=1 // pred_fallthru
      _
    // Predicated region
    $region6: #{convnext_bird_forward.1} parent=1 // pred_check
      _
    $region7: #{convnext_bird_forward.1} parent=1 // pred_check_branch
      %14 = sbr.rel (0) target = $region9
    $region8: #{convnext_bird_forward.1} parent=1 // pred_region
      _
    $region9: #{convnext_bird_forward.1} parent=1 // pred_fallthru
      _
    // Predicated region
    $region10: #{convnext_bird_forward.1} parent=1 // pred_check
      _
    $region11: #{convnext_bird_forward.1} parent=1 // pred_check_branch
      %16 = sbr.rel (0) target = $region13
    $region12: #{convnext_bird_forward.1} parent=1 // pred_region
      _
    $region13: #{convnext_bird_forward.1} parent=1 // pred_fallthru
      _
    // Predicated region
    $region14: #{convnext_bird_forward.1} parent=1 // pred_check
      _
    $region15: #{convnext_bird_forward.1} parent=1 // pred_check_branch
      %18 = sbr.rel (0) target = $region17
    $region16: #{convnext_bird_forward.1} parent=1 // pred_region
      _
    $region17: #{convnext_bird_forward.1} parent=1 // pred_fallthru
      _
    // Predicated region
    $region18: #{convnext_bird_forward.1} parent=1 // pred_check
      _
    $region19: #{convnext_bird_forward.1} parent=1 // pred_check_branch
      %20 = sbr.rel (0) target = $region21
    $region20: #{convnext_bird_forward.1} parent=1 // pred_region
      _
    $region21: #{convnext_bird_forward.1} parent=1 // pred_fallthru
      _
    %v22 = vld [vmem:[%s4] sm:$0xf]
    %v23 = vld [vmem:[%s4 + $0x8] sm:$0xf]
    %v24 = vld [vmem:[%s0] sm:$0xff]
    %v25 = vld [vmem:[%s0 + $0x8] sm:$0xff]
    %v26 = vpack.c.bf16 %v25, %v24
    %v27 = vld [vmem:[%s1] sm:$0xff]
    %v28 = vld [vmem:[%s1 + $0x8] sm:$0xff]
    %30 = vset.pattern.permute.xlu0 0
    %31 = vperm.xlu0 %30, %v27
    %v32 = vpop.permute.xlu0 %31
    %35 = vset.pattern.permute.xlu0 0
    %36 = vperm.xlu0 %35, %v28
    %v37 = vpop.permute.xlu0 %36
    %v41 = vunpack.c.l.b16 %v22
    %v42 = vunpack.c.l.b16 %v23
    %v43 = vpack.c.b16 %v42, %v41
    %vm44 = vcmask 130048
    %v46 = vsel %vm44, %v43, 0
    %48 = vmatpush.bf16.msra.mxu0 0
    %49 = vmatpush.bf16.msra.mxu0 0
    %50 = vmatpush.bf16.msra.mxu0 0
    %51 = vmatpush.bf16.msra.mxu0 0
    %52 = vmatpush.bf16.msra.mxu0 0
    %53 = vmatpush.bf16.msra.mxu0 0
    %54 = vmatpush.bf16.msra.mxu0 0
    %55 = vmatpush.bf16.msra.mxu0 %v26
    %56 = vmatmul.bf16.gmra.mxu0 %v46
    %v57 = vpop.f32.mrf.mxu0
    %v58 = vadd.f32 %v32, %v57
    %v59 = vpop.f32.mrf.mxu0
    %v60 = vadd.f32 %v37, %v59
    %61 = vdwg.mxu0
    %v62 = vadd.f32 %v58, %v60
    %v63 = vrot.slane %v62, 4
    %v64 = vadd.f32 %v62, %v63
    %v65 = vrot.slane %v64, 2
    %v66 = vadd.f32 %v64, %v65
    %v67 = vrot.slane %v66, 1
    %v68 = vadd.f32 %v66, %v67
    %v69 = vrcp.pop 16.0
    %v70 = vmul.f32 16.0, %v69
    %v71 = vsub.f32 1.0, %v70
    %v72 = vmul.f32 %v69, %v71
    %v73 = vadd.f32 %v69, %v72
    %vm74 = vweird.f32 %v69
    %v75 = vsel %vm74, %v69, %v73
    %v76 = vmul.f32 %v68, %v75
    %v77 = vsub.f32 %v58, %v76
    %v78 = vsub.f32 %v60, %v76
    %v79 = vmul.f32 %v77, %v77
    %v80 = vmul.f32 %v78, %v78
    %v81 = vadd.f32 %v79, %v80
    %v82 = vrot.slane %v81, 4
    %v83 = vadd.f32 %v81, %v82
    %v84 = vrot.slane %v83, 2
    %v85 = vadd.f32 %v83, %v84
    %v86 = vrot.slane %v85, 1
    %v87 = vadd.f32 %v85, %v86
    %v88 = vmul.f32 %v87, %v75
    %v89 = vadd.f32 %v88, 1e-06
    %v90 = vrsqrt.pop %v89
    %v91 = vmul.f32 %v90, %v89
    %v92 = vmul.f32 %v91, %v90
    %v93 = vmul.f32 0.5, %v92
    %v94 = vsub.f32 1.5, %v93
    %v95 = vmul.f32 %v90, %v94
    %vm96 = vweird.f32 %v89
    %vm97 = vweird.f32 %v90
    %vm98 = vmor %vm96, %vm97
    %v99 = vsel %vm98, %v90, %v95
    %v100 = vmul.f32 %v77, %v99
    %v101 = vmul.f32 %v78, %v99
    %102 = vset.pattern.permute.xlu0 1
    %103 = vperm.xlu0 %102, %v27
    %v104 = vpop.permute.xlu0 %103
    %106 = vset.pattern.permute.xlu0 1
    %107 = vperm.xlu0 %106, %v28
    %v108 = vpop.permute.xlu0 %107
    %v110 = vmul.f32 %v100, %v104
    %v111 = vmul.f32 %v101, %v108
    %112 = vset.pattern.permute.xlu0 2
    %113 = vperm.xlu0 %112, %v27
    %v114 = vpop.permute.xlu0 %113
    %116 = vset.pattern.permute.xlu0 2
    %117 = vperm.xlu0 %116, %v28
    %v118 = vpop.permute.xlu0 %117
    %v120 = vadd.f32 %v110, %v114
    %v121 = vadd.f32 %v111, %v118
    %122 = vrot.lane.b32.xlu0 %v120, 27
    %v123 = vpop.permute.xlu0 %122
    %124 = vrot.lane.b32.xlu0 %v121, 27
    %v125 = vpop.permute.xlu0 %124
    %v126 = vld [vmem:[%s3] sm:$0xff]
    %v127 = vld [vmem:[%s3 + $0x8] sm:$0xff]
    %v128 = vld [vmem:[%s2] sm:$0x1]
    %130 = vset.pattern.permute.xlu0 0
    %131 = vperm.xlu0 %130, %v126
    %v132 = vpop.permute.xlu0 %131
    %135 = vset.pattern.permute.xlu0 0
    %136 = vperm.xlu0 %135, %v127
    %v137 = vpop.permute.xlu0 %136
    %v139 = vmul.f32 %v123, %v132
    %v140 = vmul.f32 %v125, %v137
    %v141 = vperm.slane %v128, 0
    %v142 = vmul.f32 %v139, %v141
    %v143 = vmul.f32 %v140, %v141
    %v144 = vadd.f32 %v142, 0.0
    %v145 = vadd.f32 %v143, 0.0
    %146 = vrot.lane.b32.xlu0 %v120, 26
    %v147 = vpop.permute.xlu0 %146
    %148 = vrot.lane.b32.xlu0 %v121, 26
    %v149 = vpop.permute.xlu0 %148
    %v150 = vld [vmem:[%s2 + $0x1] sm:$0x1]
    %151 = vset.pattern.permute.xlu0 1
    %152 = vperm.xlu0 %151, %v126
    %v153 = vpop.permute.xlu0 %152
    %155 = vset.pattern.permute.xlu0 1
    %156 = vperm.xlu0 %155, %v127
    %v157 = vpop.permute.xlu0 %156
    %v159 = vmul.f32 %v147, %v153
    %v160 = vmul.f32 %v149, %v157
    %v161 = vperm.slane %v150, 0
    %v162 = vmul.f32 %v159, %v161
    %v163 = vmul.f32 %v160, %v161
    %v164 = vadd.f32 %v144, %v162
    %v165 = vadd.f32 %v145, %v163
    %166 = vrot.lane.b32.xlu0 %v120, 25
    %v167 = vpop.permute.xlu0 %166
    %168 = vrot.lane.b32.xlu0 %v121, 25
    %v169 = vpop.permute.xlu0 %168
    %v170 = vld [vmem:[%s2 + $0x2] sm:$0x1]
    %171 = vset.pattern.permute.xlu0 2
    %172 = vperm.xlu0 %171, %v126
    %v173 = vpop.permute.xlu0 %172
    %175 = vset.pattern.permute.xlu0 2
    %176 = vperm.xlu0 %175, %v127
    %v177 = vpop.permute.xlu0 %176
    %v179 = vmul.f32 %v167, %v173
    %v180 = vmul.f32 %v169, %v177
    %v181 = vperm.slane %v170, 0
    %v182 = vmul.f32 %v179, %v181
    %v183 = vmul.f32 %v180, %v181
    %v184 = vadd.f32 %v164, %v182
    %v185 = vadd.f32 %v165, %v183
    %186 = vrot.lane.b32.xlu0 %v120, 24
    %v187 = vpop.permute.xlu0 %186
    %188 = vrot.lane.b32.xlu0 %v121, 24
    %v189 = vpop.permute.xlu0 %188
    %v190 = vld [vmem:[%s2 + $0x3] sm:$0x1]
    %191 = vset.pattern.permute.xlu0 3
    %192 = vperm.xlu0 %191, %v126
    %v193 = vpop.permute.xlu0 %192
    %195 = vset.pattern.permute.xlu0 3
    %196 = vperm.xlu0 %195, %v127
    %v197 = vpop.permute.xlu0 %196
    %v199 = vmul.f32 %v187, %v193
    %v200 = vmul.f32 %v189, %v197
    %v201 = vperm.slane %v190, 0
    %v202 = vmul.f32 %v199, %v201
    %v203 = vmul.f32 %v200, %v201
    %v204 = vadd.f32 %v184, %v202
    %v205 = vadd.f32 %v185, %v203
    %206 = vrot.lane.b32.xlu0 %v120, 23
    %v207 = vpop.permute.xlu0 %206
    %208 = vrot.lane.b32.xlu0 %v121, 23
    %v209 = vpop.permute.xlu0 %208
    %v210 = vld [vmem:[%s2 + $0x4] sm:$0x1]
    %211 = vset.pattern.permute.xlu0 4
    %212 = vperm.xlu0 %211, %v126
    %v213 = vpop.permute.xlu0 %212
    %215 = vset.pattern.permute.xlu0 4
    %216 = vperm.xlu0 %215, %v127
    %v217 = vpop.permute.xlu0 %216
    %v219 = vmul.f32 %v207, %v213
    %v220 = vmul.f32 %v209, %v217
    %v221 = vperm.slane %v210, 0
    %v222 = vmul.f32 %v219, %v221
    %v223 = vmul.f32 %v220, %v221
    %v224 = vadd.f32 %v204, %v222
    %v225 = vadd.f32 %v205, %v223
    %226 = vrot.lane.b32.xlu0 %v120, 22
    %v227 = vpop.permute.xlu0 %226
    %228 = vrot.lane.b32.xlu0 %v121, 22
    %v229 = vpop.permute.xlu0 %228
    %v230 = vld [vmem:[%s2 + $0x5] sm:$0x1]
    %231 = vset.pattern.permute.xlu0 5
    %232 = vperm.xlu0 %231, %v126
    %v233 = vpop.permute.xlu0 %232
    %235 = vset.pattern.permute.xlu0 5
    %236 = vperm.xlu0 %235, %v127
    %v237 = vpop.permute.xlu0 %236
    %v239 = vmul.f32 %v227, %v233
    %v240 = vmul.f32 %v229, %v237
    %v241 = vperm.slane %v230, 0
    %v242 = vmul.f32 %v239, %v241
    %v243 = vmul.f32 %v240, %v241
    %v244 = vadd.f32 %v224, %v242
    %v245 = vadd.f32 %v225, %v243
    %246 = vrot.lane.b32.xlu0 %v120, 21
    %v247 = vpop.permute.xlu0 %246
    %248 = vrot.lane.b32.xlu0 %v121, 21
    %v249 = vpop.permute.xlu0 %248
    %v250 = vld [vmem:[%s2 + $0x6] sm:$0x1]
    %251 = vset.pattern.permute.xlu0 6
    %252 = vperm.xlu0 %251, %v126
    %v253 = vpop.permute.xlu0 %252
    %255 = vset.pattern.permute.xlu0 6
    %256 = vperm.xlu0 %255, %v127
    %v257 = vpop.permute.xlu0 %256
    %v259 = vmul.f32 %v247, %v253
    %v260 = vmul.f32 %v249, %v257
    %v261 = vperm.slane %v250, 0
    %v262 = vmul.f32 %v259, %v261
    %v263 = vmul.f32 %v260, %v261
    %v264 = vadd.f32 %v244, %v262
    %v265 = vadd.f32 %v245, %v263
    %266 = vrot.lane.b32.xlu0 %v120, 19
    %v267 = vpop.permute.xlu0 %266
    %268 = vrot.lane.b32.xlu0 %v121, 19
    %v269 = vpop.permute.xlu0 %268
    %v270 = vld [vmem:[%s2 + $0x7] sm:$0x1]
    %271 = vset.pattern.permute.xlu0 7
    %272 = vperm.xlu0 %271, %v126
    %v273 = vpop.permute.xlu0 %272
    %275 = vset.pattern.permute.xlu0 7
    %276 = vperm.xlu0 %275, %v127
    %v277 = vpop.permute.xlu0 %276
    %v279 = vmul.f32 %v267, %v273
    %v280 = vmul.f32 %v269, %v277
    %v281 = vperm.slane %v270, 0
    %v282 = vmul.f32 %v279, %v281
    %v283 = vmul.f32 %v280, %v281
    %v284 = vadd.f32 %v264, %v282
    %v285 = vadd.f32 %v265, %v283
    %286 = vrot.lane.b32.xlu0 %v120, 18
    %v287 = vpop.permute.xlu0 %286
    %288 = vrot.lane.b32.xlu0 %v121, 18
    %v289 = vpop.permute.xlu0 %288
    %v290 = vld [vmem:[%s2 + $0x8] sm:$0x1]
    %291 = vset.pattern.permute.xlu0 8
    %292 = vperm.xlu0 %291, %v126
    %v293 = vpop.permute.xlu0 %292
    %295 = vset.pattern.permute.xlu0 8
    %296 = vperm.xlu0 %295, %v127
    %v297 = vpop.permute.xlu0 %296
    %v299 = vmul.f32 %v287, %v293
    %v300 = vmul.f32 %v289, %v297
    %v301 = vperm.slane %v290, 0
    %v302 = vmul.f32 %v299, %v301
    %v303 = vmul.f32 %v300, %v301
    %v304 = vadd.f32 %v284, %v302
    %v305 = vadd.f32 %v285, %v303
    %306 = vrot.lane.b32.xlu0 %v120, 17
    %v307 = vpop.permute.xlu0 %306
    %308 = vrot.lane.b32.xlu0 %v121, 17
    %v309 = vpop.permute.xlu0 %308
    %v310 = vld [vmem:[%s2 + $0x9] sm:$0x1]
    %311 = vset.pattern.permute.xlu0 9
    %312 = vperm.xlu0 %311, %v126
    %v313 = vpop.permute.xlu0 %312
    %315 = vset.pattern.permute.xlu0 9
    %316 = vperm.xlu0 %315, %v127
    %v317 = vpop.permute.xlu0 %316
    %v319 = vmul.f32 %v307, %v313
    %v320 = vmul.f32 %v309, %v317
    %v321 = vperm.slane %v310, 0
    %v322 = vmul.f32 %v319, %v321
    %v323 = vmul.f32 %v320, %v321
    %v324 = vadd.f32 %v304, %v322
    %v325 = vadd.f32 %v305, %v323
    %326 = vrot.lane.b32.xlu0 %v120, 16
    %v327 = vpop.permute.xlu0 %326
    %328 = vrot.lane.b32.xlu0 %v121, 16
    %v329 = vpop.permute.xlu0 %328
    %v330 = vld [vmem:[%s2 + $0xa] sm:$0x1]
    %331 = vset.pattern.permute.xlu0 10
    %332 = vperm.xlu0 %331, %v126
    %v333 = vpop.permute.xlu0 %332
    %335 = vset.pattern.permute.xlu0 10
    %336 = vperm.xlu0 %335, %v127
    %v337 = vpop.permute.xlu0 %336
    %v339 = vmul.f32 %v327, %v333
    %v340 = vmul.f32 %v329, %v337
    %v341 = vperm.slane %v330, 0
    %v342 = vmul.f32 %v339, %v341
    %v343 = vmul.f32 %v340, %v341
    %v344 = vadd.f32 %v324, %v342
    %v345 = vadd.f32 %v325, %v343
    %346 = vrot.lane.b32.xlu0 %v120, 15
    %v347 = vpop.permute.xlu0 %346
    %348 = vrot.lane.b32.xlu0 %v121, 15
    %v349 = vpop.permute.xlu0 %348
    %v350 = vld [vmem:[%s2 + $0xb] sm:$0x1]
    %351 = vset.pattern.permute.xlu0 11
    %352 = vperm.xlu0 %351, %v126
    %v353 = vpop.permute.xlu0 %352
    %355 = vset.pattern.permute.xlu0 11
    %356 = vperm.xlu0 %355, %v127
    %v357 = vpop.permute.xlu0 %356
    %v359 = vmul.f32 %v347, %v353
    %v360 = vmul.f32 %v349, %v357
    %v361 = vperm.slane %v350, 0
    %v362 = vmul.f32 %v359, %v361
    %v363 = vmul.f32 %v360, %v361
    %v364 = vadd.f32 %v344, %v362
    %v365 = vadd.f32 %v345, %v363
    %366 = vrot.lane.b32.xlu0 %v120, 14
    %v367 = vpop.permute.xlu0 %366
    %368 = vrot.lane.b32.xlu0 %v121, 14
    %v369 = vpop.permute.xlu0 %368
    %v370 = vld [vmem:[%s2 + $0xc] sm:$0x1]
    %371 = vset.pattern.permute.xlu0 12
    %372 = vperm.xlu0 %371, %v126
    %v373 = vpop.permute.xlu0 %372
    %375 = vset.pattern.permute.xlu0 12
    %376 = vperm.xlu0 %375, %v127
    %v377 = vpop.permute.xlu0 %376
    %v379 = vmul.f32 %v367, %v373
    %v380 = vmul.f32 %v369, %v377
    %v381 = vperm.slane %v370, 0
    %v382 = vmul.f32 %v379, %v381
    %v383 = vmul.f32 %v380, %v381
    %v384 = vadd.f32 %v364, %v382
    %v385 = vadd.f32 %v365, %v383
    %386 = vrot.lane.b32.xlu0 %v120, 13
    %v387 = vpop.permute.xlu0 %386
    %388 = vrot.lane.b32.xlu0 %v121, 13
    %v389 = vpop.permute.xlu0 %388
    %v390 = vld [vmem:[%s2 + $0xd] sm:$0x1]
    %391 = vset.pattern.permute.xlu0 13
    %392 = vperm.xlu0 %391, %v126
    %v393 = vpop.permute.xlu0 %392
    %395 = vset.pattern.permute.xlu0 13
    %396 = vperm.xlu0 %395, %v127
    %v397 = vpop.permute.xlu0 %396
    %v399 = vmul.f32 %v387, %v393
    %v400 = vmul.f32 %v389, %v397
    %v401 = vperm.slane %v390, 0
    %v402 = vmul.f32 %v399, %v401
    %v403 = vmul.f32 %v400, %v401
    %v404 = vadd.f32 %v384, %v402
    %v405 = vadd.f32 %v385, %v403
    %406 = vrot.lane.b32.xlu0 %v120, 11
    %v407 = vpop.permute.xlu0 %406
    %408 = vrot.lane.b32.xlu0 %v121, 11
    %v409 = vpop.permute.xlu0 %408
    %v410 = vld [vmem:[%s2 + $0xe] sm:$0x1]
    %411 = vset.pattern.permute.xlu0 14
    %412 = vperm.xlu0 %411, %v126
    %v413 = vpop.permute.xlu0 %412
    %415 = vset.pattern.permute.xlu0 14
    %416 = vperm.xlu0 %415, %v127
    %v417 = vpop.permute.xlu0 %416
    %v419 = vmul.f32 %v407, %v413
    %v420 = vmul.f32 %v409, %v417
    %v421 = vperm.slane %v410, 0
    %v422 = vmul.f32 %v419, %v421
    %v423 = vmul.f32 %v420, %v421
    %v424 = vadd.f32 %v404, %v422
    %v425 = vadd.f32 %v405, %v423
    %426 = vrot.lane.b32.xlu0 %v120, 10
    %v427 = vpop.permute.xlu0 %426
    %428 = vrot.lane.b32.xlu0 %v121, 10
    %v429 = vpop.permute.xlu0 %428
    %v430 = vld [vmem:[%s2 + $0xf] sm:$0x1]
    %431 = vset.pattern.permute.xlu0 15
    %432 = vperm.xlu0 %431, %v126
    %v433 = vpop.permute.xlu0 %432
    %435 = vset.pattern.permute.xlu0 15
    %436 = vperm.xlu0 %435, %v127
    %v437 = vpop.permute.xlu0 %436
    %v439 = vmul.f32 %v427, %v433
    %v440 = vmul.f32 %v429, %v437
    %v441 = vperm.slane %v430, 0
    %v442 = vmul.f32 %v439, %v441
    %v443 = vmul.f32 %v440, %v441
    %v444 = vadd.f32 %v424, %v442
    %v445 = vadd.f32 %v425, %v443
    %446 = vrot.lane.b32.xlu0 %v120, 9
    %v447 = vpop.permute.xlu0 %446
    %448 = vrot.lane.b32.xlu0 %v121, 9
    %v449 = vpop.permute.xlu0 %448
    %v450 = vld [vmem:[%s2 + $0x10] sm:$0x1]
    %451 = vset.pattern.permute.xlu0 16
    %452 = vperm.xlu0 %451, %v126
    %v453 = vpop.permute.xlu0 %452
    %455 = vset.pattern.permute.xlu0 16
    %456 = vperm.xlu0 %455, %v127
    %v457 = vpop.permute.xlu0 %456
    %v459 = vmul.f32 %v447, %v453
    %v460 = vmul.f32 %v449, %v457
    %v461 = vperm.slane %v450, 0
    %v462 = vmul.f32 %v459, %v461
    %v463 = vmul.f32 %v460, %v461
    %v464 = vadd.f32 %v444, %v462
    %v465 = vadd.f32 %v445, %v463
    %466 = vrot.lane.b32.xlu0 %v120, 8
    %v467 = vpop.permute.xlu0 %466
    %468 = vrot.lane.b32.xlu0 %v121, 8
    %v469 = vpop.permute.xlu0 %468
    %v470 = vld [vmem:[%s2 + $0x11] sm:$0x1]
    %471 = vset.pattern.permute.xlu0 17
    %472 = vperm.xlu0 %471, %v126
    %v473 = vpop.permute.xlu0 %472
    %475 = vset.pattern.permute.xlu0 17
    %476 = vperm.xlu0 %475, %v127
    %v477 = vpop.permute.xlu0 %476
    %v479 = vmul.f32 %v467, %v473
    %v480 = vmul.f32 %v469, %v477
    %v481 = vperm.slane %v470, 0
    %v482 = vmul.f32 %v479, %v481
    %v483 = vmul.f32 %v480, %v481
    %v484 = vadd.f32 %v464, %v482
    %v485 = vadd.f32 %v465, %v483
    %486 = vrot.lane.b32.xlu0 %v120, 7
    %v487 = vpop.permute.xlu0 %486
    %488 = vrot.lane.b32.xlu0 %v121, 7
    %v489 = vpop.permute.xlu0 %488
    %v490 = vld [vmem:[%s2 + $0x12] sm:$0x1]
    %491 = vset.pattern.permute.xlu0 18
    %492 = vperm.xlu0 %491, %v126
    %v493 = vpop.permute.xlu0 %492
    %495 = vset.pattern.permute.xlu0 18
    %496 = vperm.xlu0 %495, %v127
    %v497 = vpop.permute.xlu0 %496
    %v499 = vmul.f32 %v487, %v493
    %v500 = vmul.f32 %v489, %v497
    %v501 = vperm.slane %v490, 0
    %v502 = vmul.f32 %v499, %v501
    %v503 = vmul.f32 %v500, %v501
    %v504 = vadd.f32 %v484, %v502
    %v505 = vadd.f32 %v485, %v503
    %506 = vrot.lane.b32.xlu0 %v120, 6
    %v507 = vpop.permute.xlu0 %506
    %508 = vrot.lane.b32.xlu0 %v121, 6
    %v509 = vpop.permute.xlu0 %508
    %v510 = vld [vmem:[%s2 + $0x13] sm:$0x1]
    %511 = vset.pattern.permute.xlu0 19
    %512 = vperm.xlu0 %511, %v126
    %v513 = vpop.permute.xlu0 %512
    %515 = vset.pattern.permute.xlu0 19
    %516 = vperm.xlu0 %515, %v127
    %v517 = vpop.permute.xlu0 %516
    %v519 = vmul.f32 %v507, %v513
    %v520 = vmul.f32 %v509, %v517
    %v521 = vperm.slane %v510, 0
    %v522 = vmul.f32 %v519, %v521
    %v523 = vmul.f32 %v520, %v521
    %v524 = vadd.f32 %v504, %v522
    %v525 = vadd.f32 %v505, %v523
    %526 = vrot.lane.b32.xlu0 %v120, 5
    %v527 = vpop.permute.xlu0 %526
    %528 = vrot.lane.b32.xlu0 %v121, 5
    %v529 = vpop.permute.xlu0 %528
    %v530 = vld [vmem:[%s2 + $0x14] sm:$0x1]
    %531 = vset.pattern.permute.xlu0 20
    %532 = vperm.xlu0 %531, %v126
    %v533 = vpop.permute.xlu0 %532
    %535 = vset.pattern.permute.xlu0 20
    %536 = vperm.xlu0 %535, %v127
    %v537 = vpop.permute.xlu0 %536
    %v539 = vmul.f32 %v527, %v533
    %v540 = vmul.f32 %v529, %v537
    %v541 = vperm.slane %v530, 0
    %v542 = vmul.f32 %v539, %v541
    %v543 = vmul.f32 %v540, %v541
    %v544 = vadd.f32 %v524, %v542
    %v545 = vadd.f32 %v525, %v543
    %546 = vrot.lane.b32.xlu0 %v120, 3
    %v547 = vpop.permute.xlu0 %546
    %548 = vrot.lane.b32.xlu0 %v121, 3
    %v549 = vpop.permute.xlu0 %548
    %v550 = vld [vmem:[%s2 + $0x15] sm:$0x1]
    %551 = vset.pattern.permute.xlu0 21
    %552 = vperm.xlu0 %551, %v126
    %v553 = vpop.permute.xlu0 %552
    %555 = vset.pattern.permute.xlu0 21
    %556 = vperm.xlu0 %555, %v127
    %v557 = vpop.permute.xlu0 %556
    %v559 = vmul.f32 %v547, %v553
    %v560 = vmul.f32 %v549, %v557
    %v561 = vperm.slane %v550, 0
    %v562 = vmul.f32 %v559, %v561
    %v563 = vmul.f32 %v560, %v561
    %v564 = vadd.f32 %v544, %v562
    %v565 = vadd.f32 %v545, %v563
    %566 = vrot.lane.b32.xlu0 %v120, 2
    %v567 = vpop.permute.xlu0 %566
    %568 = vrot.lane.b32.xlu0 %v121, 2
    %v569 = vpop.permute.xlu0 %568
    %v570 = vld [vmem:[%s2 + $0x16] sm:$0x1]
    %571 = vset.pattern.permute.xlu0 22
    %572 = vperm.xlu0 %571, %v126
    %v573 = vpop.permute.xlu0 %572
    %575 = vset.pattern.permute.xlu0 22
    %576 = vperm.xlu0 %575, %v127
    %v577 = vpop.permute.xlu0 %576
    %v579 = vmul.f32 %v567, %v573
    %v580 = vmul.f32 %v569, %v577
    %v581 = vperm.slane %v570, 0
    %v582 = vmul.f32 %v579, %v581
    %v583 = vmul.f32 %v580, %v581
    %v584 = vadd.f32 %v564, %v582
    %v585 = vadd.f32 %v565, %v583
    %586 = vrot.lane.b32.xlu0 %v120, 1
    %v587 = vpop.permute.xlu0 %586
    %588 = vrot.lane.b32.xlu0 %v121, 1
    %v589 = vpop.permute.xlu0 %588
    %v590 = vld [vmem:[%s2 + $0x17] sm:$0x1]
    %591 = vset.pattern.permute.xlu0 23
    %592 = vperm.xlu0 %591, %v126
    %v593 = vpop.permute.xlu0 %592
    %595 = vset.pattern.permute.xlu0 23
    %596 = vperm.xlu0 %595, %v127
    %v597 = vpop.permute.xlu0 %596
    %v599 = vmul.f32 %v587, %v593
    %v600 = vmul.f32 %v589, %v597
    %v601 = vperm.slane %v590, 0
    %v602 = vmul.f32 %v599, %v601
    %v603 = vmul.f32 %v600, %v601
    %v604 = vadd.f32 %v584, %v602
    %v605 = vadd.f32 %v585, %v603
    %v606 = vld [vmem:[%s2 + $0x18] sm:$0x1]
    %607 = vset.pattern.permute.xlu0 24
    %608 = vperm.xlu0 %607, %v126
    %v609 = vpop.permute.xlu0 %608
    %611 = vset.pattern.permute.xlu0 24
    %612 = vperm.xlu0 %611, %v127
    %v613 = vpop.permute.xlu0 %612
    %v615 = vmul.f32 %v120, %v609
    %v616 = vmul.f32 %v121, %v613
    %v617 = vperm.slane %v606, 0
    %v618 = vmul.f32 %v615, %v617
    %v619 = vmul.f32 %v616, %v617
    %v620 = vadd.f32 %v604, %v618
    %v621 = vadd.f32 %v605, %v619
    %622 = vrot.lane.b32.xlu0 %v120, 127
    %v623 = vpop.permute.xlu0 %622
    %624 = vrot.lane.b32.xlu0 %v121, 127
    %v625 = vpop.permute.xlu0 %624
    %v626 = vld [vmem:[%s2 + $0x19] sm:$0x1]
    %627 = vset.pattern.permute.xlu0 25
    %628 = vperm.xlu0 %627, %v126
    %v629 = vpop.permute.xlu0 %628
    %631 = vset.pattern.permute.xlu0 25
    %632 = vperm.xlu0 %631, %v127
    %v633 = vpop.permute.xlu0 %632
    %v635 = vmul.f32 %v623, %v629
    %v636 = vmul.f32 %v625, %v633
    %v637 = vperm.slane %v626, 0
    %v638 = vmul.f32 %v635, %v637
    %v639 = vmul.f32 %v636, %v637
    %v640 = vadd.f32 %v620, %v638
    %v641 = vadd.f32 %v621, %v639
    %642 = vrot.lane.b32.xlu0 %v120, 126
    %v643 = vpop.permute.xlu0 %642
    %644 = vrot.lane.b32.xlu0 %v121, 126
    %v645 = vpop.permute.xlu0 %644
    %v646 = vld [vmem:[%s2 + $0x1a] sm:$0x1]
    %647 = vset.pattern.permute.xlu0 26
    %648 = vperm.xlu0 %647, %v126
    %v649 = vpop.permute.xlu0 %648
    %651 = vset.pattern.permute.xlu0 26
    %652 = vperm.xlu0 %651, %v127
    %v653 = vpop.permute.xlu0 %652
    %v655 = vmul.f32 %v643, %v649
    %v656 = vmul.f32 %v645, %v653
    %v657 = vperm.slane %v646, 0
    %v658 = vmul.f32 %v655, %v657
    %v659 = vmul.f32 %v656, %v657
    %v660 = vadd.f32 %v640, %v658
    %v661 = vadd.f32 %v641, %v659
    %662 = vrot.lane.b32.xlu0 %v120, 125
    %v663 = vpop.permute.xlu0 %662
    %664 = vrot.lane.b32.xlu0 %v121, 125
    %v665 = vpop.permute.xlu0 %664
    %v666 = vld [vmem:[%s2 + $0x1b] sm:$0x1]
    %667 = vset.pattern.permute.xlu0 27
    %668 = vperm.xlu0 %667, %v126
    %v669 = vpop.permute.xlu0 %668
    %671 = vset.pattern.permute.xlu0 27
    %672 = vperm.xlu0 %671, %v127
    %v673 = vpop.permute.xlu0 %672
    %v675 = vmul.f32 %v663, %v669
    %v676 = vmul.f32 %v665, %v673
    %v677 = vperm.slane %v666, 0
    %v678 = vmul.f32 %v675, %v677
    %v679 = vmul.f32 %v676, %v677
    %v680 = vadd.f32 %v660, %v678
    %v681 = vadd.f32 %v661, %v679
    %682 = vrot.lane.b32.xlu0 %v120, 123
    %v683 = vpop.permute.xlu0 %682
    %684 = vrot.lane.b32.xlu0 %v121, 123
    %v685 = vpop.permute.xlu0 %684
    %v686 = vld [vmem:[%s2 + $0x1c] sm:$0x1]
    %687 = vset.pattern.permute.xlu0 28
    %688 = vperm.xlu0 %687, %v126
    %v689 = vpop.permute.xlu0 %688
    %691 = vset.pattern.permute.xlu0 28
    %692 = vperm.xlu0 %691, %v127
    %v693 = vpop.permute.xlu0 %692
    %v695 = vmul.f32 %v683, %v689
    %v696 = vmul.f32 %v685, %v693
    %v697 = vperm.slane %v686, 0
    %v698 = vmul.f32 %v695, %v697
    %v699 = vmul.f32 %v696, %v697
    %v700 = vadd.f32 %v680, %v698
    %v701 = vadd.f32 %v681, %v699
    %702 = vrot.lane.b32.xlu0 %v120, 122
    %v703 = vpop.permute.xlu0 %702
    %704 = vrot.lane.b32.xlu0 %v121, 122
    %v705 = vpop.permute.xlu0 %704
    %v706 = vld [vmem:[%s2 + $0x1d] sm:$0x1]
    %707 = vset.pattern.permute.xlu0 29
    %708 = vperm.xlu0 %707, %v126
    %v709 = vpop.permute.xlu0 %708
    %711 = vset.pattern.permute.xlu0 29
    %712 = vperm.xlu0 %711, %v127
    %v713 = vpop.permute.xlu0 %712
    %v715 = vmul.f32 %v703, %v709
    %v716 = vmul.f32 %v705, %v713
    %v717 = vperm.slane %v706, 0
    %v718 = vmul.f32 %v715, %v717
    %v719 = vmul.f32 %v716, %v717
    %v720 = vadd.f32 %v700, %v718
    %v721 = vadd.f32 %v701, %v719
    %722 = vrot.lane.b32.xlu0 %v120, 121
    %v723 = vpop.permute.xlu0 %722
    %724 = vrot.lane.b32.xlu0 %v121, 121
    %v725 = vpop.permute.xlu0 %724
    %v726 = vld [vmem:[%s2 + $0x1e] sm:$0x1]
    %727 = vset.pattern.permute.xlu0 30
    %728 = vperm.xlu0 %727, %v126
    %v729 = vpop.permute.xlu0 %728
    %731 = vset.pattern.permute.xlu0 30
    %732 = vperm.xlu0 %731, %v127
    %v733 = vpop.permute.xlu0 %732
    %v735 = vmul.f32 %v723, %v729
    %v736 = vmul.f32 %v725, %v733
    %v737 = vperm.slane %v726, 0
    %v738 = vmul.f32 %v735, %v737
    %v739 = vmul.f32 %v736, %v737
    %v740 = vadd.f32 %v720, %v738
    %v741 = vadd.f32 %v721, %v739
    %742 = vrot.lane.b32.xlu0 %v120, 120
    %v743 = vpop.permute.xlu0 %742
    %744 = vrot.lane.b32.xlu0 %v121, 120
    %v745 = vpop.permute.xlu0 %744
    %v746 = vld [vmem:[%s2 + $0x1f] sm:$0x1]
    %747 = vset.pattern.permute.xlu0 31
    %748 = vperm.xlu0 %747, %v126
    %v749 = vpop.permute.xlu0 %748
    %751 = vset.pattern.permute.xlu0 31
    %752 = vperm.xlu0 %751, %v127
    %v753 = vpop.permute.xlu0 %752
    %v755 = vmul.f32 %v743, %v749
    %v756 = vmul.f32 %v745, %v753
    %v757 = vperm.slane %v746, 0
    %v758 = vmul.f32 %v755, %v757
    %v759 = vmul.f32 %v756, %v757
    %v760 = vadd.f32 %v740, %v758
    %v761 = vadd.f32 %v741, %v759
    %762 = vrot.lane.b32.xlu0 %v120, 119
    %v763 = vpop.permute.xlu0 %762
    %764 = vrot.lane.b32.xlu0 %v121, 119
    %v765 = vpop.permute.xlu0 %764
    %v766 = vld [vmem:[%s2 + $0x20] sm:$0x1]
    %767 = vset.pattern.permute.xlu0 32
    %768 = vperm.xlu0 %767, %v126
    %v769 = vpop.permute.xlu0 %768
    %771 = vset.pattern.permute.xlu0 32
    %772 = vperm.xlu0 %771, %v127
    %v773 = vpop.permute.xlu0 %772
    %v775 = vmul.f32 %v763, %v769
    %v776 = vmul.f32 %v765, %v773
    %v777 = vperm.slane %v766, 0
    %v778 = vmul.f32 %v775, %v777
    %v779 = vmul.f32 %v776, %v777
    %v780 = vadd.f32 %v760, %v778
    %v781 = vadd.f32 %v761, %v779
    %782 = vrot.lane.b32.xlu0 %v120, 118
    %v783 = vpop.permute.xlu0 %782
    %784 = vrot.lane.b32.xlu0 %v121, 118
    %v785 = vpop.permute.xlu0 %784
    %v786 = vld [vmem:[%s2 + $0x21] sm:$0x1]
    %787 = vset.pattern.permute.xlu0 33
    %788 = vperm.xlu0 %787, %v126
    %v789 = vpop.permute.xlu0 %788
    %791 = vset.pattern.permute.xlu0 33
    %792 = vperm.xlu0 %791, %v127
    %v793 = vpop.permute.xlu0 %792
    %v795 = vmul.f32 %v783, %v789
    %v796 = vmul.f32 %v785, %v793
    %v797 = vperm.slane %v786, 0
    %v798 = vmul.f32 %v795, %v797
    %v799 = vmul.f32 %v796, %v797
    %v800 = vadd.f32 %v780, %v798
    %v801 = vadd.f32 %v781, %v799
    %802 = vrot.lane.b32.xlu0 %v120, 117
    %v803 = vpop.permute.xlu0 %802
    %804 = vrot.lane.b32.xlu0 %v121, 117
    %v805 = vpop.permute.xlu0 %804
    %v806 = vld [vmem:[%s2 + $0x22] sm:$0x1]
    %807 = vset.pattern.permute.xlu0 34
    %808 = vperm.xlu0 %807, %v126
    %v809 = vpop.permute.xlu0 %808
    %811 = vset.pattern.permute.xlu0 34
    %812 = vperm.xlu0 %811, %v127
    %v813 = vpop.permute.xlu0 %812
    %v815 = vmul.f32 %v803, %v809
    %v816 = vmul.f32 %v805, %v813
    %v817 = vperm.slane %v806, 0
    %v818 = vmul.f32 %v815, %v817
    %v819 = vmul.f32 %v816, %v817
    %v820 = vadd.f32 %v800, %v818
    %v821 = vadd.f32 %v801, %v819
    %822 = vrot.lane.b32.xlu0 %v120, 115
    %v823 = vpop.permute.xlu0 %822
    %824 = vrot.lane.b32.xlu0 %v121, 115
    %v825 = vpop.permute.xlu0 %824
    %v826 = vld [vmem:[%s2 + $0x23] sm:$0x1]
    %827 = vset.pattern.permute.xlu0 35
    %828 = vperm.xlu0 %827, %v126
    %v829 = vpop.permute.xlu0 %828
    %831 = vset.pattern.permute.xlu0 35
    %832 = vperm.xlu0 %831, %v127
    %v833 = vpop.permute.xlu0 %832
    %v835 = vmul.f32 %v823, %v829
    %v836 = vmul.f32 %v825, %v833
    %v837 = vperm.slane %v826, 0
    %v838 = vmul.f32 %v835, %v837
    %v839 = vmul.f32 %v836, %v837
    %v840 = vadd.f32 %v820, %v838
    %v841 = vadd.f32 %v821, %v839
    %842 = vrot.lane.b32.xlu0 %v120, 114
    %v843 = vpop.permute.xlu0 %842
    %844 = vrot.lane.b32.xlu0 %v121, 114
    %v845 = vpop.permute.xlu0 %844
    %v846 = vld [vmem:[%s2 + $0x24] sm:$0x1]
    %847 = vset.pattern.permute.xlu0 36
    %848 = vperm.xlu0 %847, %v126
    %v849 = vpop.permute.xlu0 %848
    %851 = vset.pattern.permute.xlu0 36
    %852 = vperm.xlu0 %851, %v127
    %v853 = vpop.permute.xlu0 %852
    %v855 = vmul.f32 %v843, %v849
    %v856 = vmul.f32 %v845, %v853
    %v857 = vperm.slane %v846, 0
    %v858 = vmul.f32 %v855, %v857
    %v859 = vmul.f32 %v856, %v857
    %v860 = vadd.f32 %v840, %v858
    %v861 = vadd.f32 %v841, %v859
    %862 = vrot.lane.b32.xlu0 %v120, 113
    %v863 = vpop.permute.xlu0 %862
    %864 = vrot.lane.b32.xlu0 %v121, 113
    %v865 = vpop.permute.xlu0 %864
    %v866 = vld [vmem:[%s2 + $0x25] sm:$0x1]
    %867 = vset.pattern.permute.xlu0 37
    %868 = vperm.xlu0 %867, %v126
    %v869 = vpop.permute.xlu0 %868
    %871 = vset.pattern.permute.xlu0 37
    %872 = vperm.xlu0 %871, %v127
    %v873 = vpop.permute.xlu0 %872
    %v875 = vmul.f32 %v863, %v869
    %v876 = vmul.f32 %v865, %v873
    %v877 = vperm.slane %v866, 0
    %v878 = vmul.f32 %v875, %v877
    %v879 = vmul.f32 %v876, %v877
    %v880 = vadd.f32 %v860, %v878
    %v881 = vadd.f32 %v861, %v879
    %882 = vrot.lane.b32.xlu0 %v120, 112
    %v883 = vpop.permute.xlu0 %882
    %884 = vrot.lane.b32.xlu0 %v121, 112
    %v885 = vpop.permute.xlu0 %884
    %v886 = vld [vmem:[%s2 + $0x26] sm:$0x1]
    %887 = vset.pattern.permute.xlu0 38
    %888 = vperm.xlu0 %887, %v126
    %v889 = vpop.permute.xlu0 %888
    %891 = vset.pattern.permute.xlu0 38
    %892 = vperm.xlu0 %891, %v127
    %v893 = vpop.permute.xlu0 %892
    %v895 = vmul.f32 %v883, %v889
    %v896 = vmul.f32 %v885, %v893
    %v897 = vperm.slane %v886, 0
    %v898 = vmul.f32 %v895, %v897
    %v899 = vmul.f32 %v896, %v897
    %v900 = vadd.f32 %v880, %v898
    %v901 = vadd.f32 %v881, %v899
    %902 = vrot.lane.b32.xlu0 %v120, 111
    %v903 = vpop.permute.xlu0 %902
    %904 = vrot.lane.b32.xlu0 %v121, 111
    %v905 = vpop.permute.xlu0 %904
    %v906 = vld [vmem:[%s2 + $0x27] sm:$0x1]
    %907 = vset.pattern.permute.xlu0 39
    %908 = vperm.xlu0 %907, %v126
    %v909 = vpop.permute.xlu0 %908
    %911 = vset.pattern.permute.xlu0 39
    %912 = vperm.xlu0 %911, %v127
    %v913 = vpop.permute.xlu0 %912
    %v915 = vmul.f32 %v903, %v909
    %v916 = vmul.f32 %v905, %v913
    %v917 = vperm.slane %v906, 0
    %v918 = vmul.f32 %v915, %v917
    %v919 = vmul.f32 %v916, %v917
    %v920 = vadd.f32 %v900, %v918
    %v921 = vadd.f32 %v901, %v919
    %922 = vrot.lane.b32.xlu0 %v120, 110
    %v923 = vpop.permute.xlu0 %922
    %924 = vrot.lane.b32.xlu0 %v121, 110
    %v925 = vpop.permute.xlu0 %924
    %v926 = vld [vmem:[%s2 + $0x28] sm:$0x1]
    %927 = vset.pattern.permute.xlu0 40
    %928 = vperm.xlu0 %927, %v126
    %v929 = vpop.permute.xlu0 %928
    %931 = vset.pattern.permute.xlu0 40
    %932 = vperm.xlu0 %931, %v127
    %v933 = vpop.permute.xlu0 %932
    %v935 = vmul.f32 %v923, %v929
    %v936 = vmul.f32 %v925, %v933
    %v937 = vperm.slane %v926, 0
    %v938 = vmul.f32 %v935, %v937
    %v939 = vmul.f32 %v936, %v937
    %v940 = vadd.f32 %v920, %v938
    %v941 = vadd.f32 %v921, %v939
    %942 = vrot.lane.b32.xlu0 %v120, 109
    %v943 = vpop.permute.xlu0 %942
    %944 = vrot.lane.b32.xlu0 %v121, 109
    %v945 = vpop.permute.xlu0 %944
    %v946 = vld [vmem:[%s2 + $0x29] sm:$0x1]
    %947 = vset.pattern.permute.xlu0 41
    %948 = vperm.xlu0 %947, %v126
    %v949 = vpop.permute.xlu0 %948
    %951 = vset.pattern.permute.xlu0 41
    %952 = vperm.xlu0 %951, %v127
    %v953 = vpop.permute.xlu0 %952
    %v955 = vmul.f32 %v943, %v949
    %v956 = vmul.f32 %v945, %v953
    %v957 = vperm.slane %v946, 0
    %v958 = vmul.f32 %v955, %v957
    %v959 = vmul.f32 %v956, %v957
    %v960 = vadd.f32 %v940, %v958
    %v961 = vadd.f32 %v941, %v959
    %962 = vrot.lane.b32.xlu0 %v120, 107
    %v963 = vpop.permute.xlu0 %962
    %964 = vrot.lane.b32.xlu0 %v121, 107
    %v965 = vpop.permute.xlu0 %964
    %v966 = vld [vmem:[%s2 + $0x2a] sm:$0x1]
    %967 = vset.pattern.permute.xlu0 42
    %968 = vperm.xlu0 %967, %v126
    %v969 = vpop.permute.xlu0 %968
    %971 = vset.pattern.permute.xlu0 42
    %972 = vperm.xlu0 %971, %v127
    %v973 = vpop.permute.xlu0 %972
    %v975 = vmul.f32 %v963, %v969
    %v976 = vmul.f32 %v965, %v973
    %v977 = vperm.slane %v966, 0
    %v978 = vmul.f32 %v975, %v977
    %v979 = vmul.f32 %v976, %v977
    %v980 = vadd.f32 %v960, %v978
    %v981 = vadd.f32 %v961, %v979
    %982 = vrot.lane.b32.xlu0 %v120, 106
    %v983 = vpop.permute.xlu0 %982
    %984 = vrot.lane.b32.xlu0 %v121, 106
    %v985 = vpop.permute.xlu0 %984
    %v986 = vld [vmem:[%s2 + $0x2b] sm:$0x1]
    %987 = vset.pattern.permute.xlu0 43
    %988 = vperm.xlu0 %987, %v126
    %v989 = vpop.permute.xlu0 %988
    %991 = vset.pattern.permute.xlu0 43
    %992 = vperm.xlu0 %991, %v127
    %v993 = vpop.permute.xlu0 %992
    %v995 = vmul.f32 %v983, %v989
    %v996 = vmul.f32 %v985, %v993
    %v997 = vperm.slane %v986, 0
    %v998 = vmul.f32 %v995, %v997
    %v999 = vmul.f32 %v996, %v997
    %v1000 = vadd.f32 %v980, %v998
    %v1001 = vadd.f32 %v981, %v999
    %1002 = vrot.lane.b32.xlu0 %v120, 105
    %v1003 = vpop.permute.xlu0 %1002
    %1004 = vrot.lane.b32.xlu0 %v121, 105
    %v1005 = vpop.permute.xlu0 %1004
    %v1006 = vld [vmem:[%s2 + $0x2c] sm:$0x1]
    %1007 = vset.pattern.permute.xlu0 44
    %1008 = vperm.xlu0 %1007, %v126
    %v1009 = vpop.permute.xlu0 %1008
    %1011 = vset.pattern.permute.xlu0 44
    %1012 = vperm.xlu0 %1011, %v127
    %v1013 = vpop.permute.xlu0 %1012
    %v1015 = vmul.f32 %v1003, %v1009
    %v1016 = vmul.f32 %v1005, %v1013
    %v1017 = vperm.slane %v1006, 0
    %v1018 = vmul.f32 %v1015, %v1017
    %v1019 = vmul.f32 %v1016, %v1017
    %v1020 = vadd.f32 %v1000, %v1018
    %v1021 = vadd.f32 %v1001, %v1019
    %1022 = vrot.lane.b32.xlu0 %v120, 104
    %v1023 = vpop.permute.xlu0 %1022
    %1024 = vrot.lane.b32.xlu0 %v121, 104
    %v1025 = vpop.permute.xlu0 %1024
    %v1026 = vld [vmem:[%s2 + $0x2d] sm:$0x1]
    %1027 = vset.pattern.permute.xlu0 45
    %1028 = vperm.xlu0 %1027, %v126
    %v1029 = vpop.permute.xlu0 %1028
    %1031 = vset.pattern.permute.xlu0 45
    %1032 = vperm.xlu0 %1031, %v127
    %v1033 = vpop.permute.xlu0 %1032
    %v1035 = vmul.f32 %v1023, %v1029
    %v1036 = vmul.f32 %v1025, %v1033
    %v1037 = vperm.slane %v1026, 0
    %v1038 = vmul.f32 %v1035, %v1037
    %v1039 = vmul.f32 %v1036, %v1037
    %v1040 = vadd.f32 %v1020, %v1038
    %v1041 = vadd.f32 %v1021, %v1039
    %1042 = vrot.lane.b32.xlu0 %v120, 103
    %v1043 = vpop.permute.xlu0 %1042
    %1044 = vrot.lane.b32.xlu0 %v121, 103
    %v1045 = vpop.permute.xlu0 %1044
    %v1046 = vld [vmem:[%s2 + $0x2e] sm:$0x1]
    %1047 = vset.pattern.permute.xlu0 46
    %1048 = vperm.xlu0 %1047, %v126
    %v1049 = vpop.permute.xlu0 %1048
    %1051 = vset.pattern.permute.xlu0 46
    %1052 = vperm.xlu0 %1051, %v127
    %v1053 = vpop.permute.xlu0 %1052
    %v1055 = vmul.f32 %v1043, %v1049
    %v1056 = vmul.f32 %v1045, %v1053
    %v1057 = vperm.slane %v1046, 0
    %v1058 = vmul.f32 %v1055, %v1057
    %v1059 = vmul.f32 %v1056, %v1057
    %v1060 = vadd.f32 %v1040, %v1058
    %v1061 = vadd.f32 %v1041, %v1059
    %1062 = vrot.lane.b32.xlu0 %v120, 102
    %v1063 = vpop.permute.xlu0 %1062
    %1064 = vrot.lane.b32.xlu0 %v121, 102
    %v1065 = vpop.permute.xlu0 %1064
    %v1066 = vld [vmem:[%s2 + $0x2f] sm:$0x1]
    %1067 = vset.pattern.permute.xlu0 47
    %1068 = vperm.xlu0 %1067, %v126
    %v1069 = vpop.permute.xlu0 %1068
    %1071 = vset.pattern.permute.xlu0 47
    %1072 = vperm.xlu0 %1071, %v127
    %v1073 = vpop.permute.xlu0 %1072
    %v1075 = vmul.f32 %v1063, %v1069
    %v1076 = vmul.f32 %v1065, %v1073
    %v1077 = vperm.slane %v1066, 0
    %v1078 = vmul.f32 %v1075, %v1077
    %v1079 = vmul.f32 %v1076, %v1077
    %v1080 = vadd.f32 %v1060, %v1078
    %v1081 = vadd.f32 %v1061, %v1079
    %1082 = vrot.lane.b32.xlu0 %v120, 101
    %v1083 = vpop.permute.xlu0 %1082
    %1084 = vrot.lane.b32.xlu0 %v121, 101
    %v1085 = vpop.permute.xlu0 %1084
    %v1086 = vld [vmem:[%s2 + $0x30] sm:$0x1]
    %1087 = vset.pattern.permute.xlu0 48
    %1088 = vperm.xlu0 %1087, %v126
    %v1089 = vpop.permute.xlu0 %1088
    %1091 = vset.pattern.permute.xlu0 48
    %1092 = vperm.xlu0 %1091, %v127
    %v1093 = vpop.permute.xlu0 %1092
    %v1095 = vmul.f32 %v1083, %v1089
    %v1096 = vmul.f32 %v1085, %v1093
    %v1097 = vperm.slane %v1086, 0
    %v1098 = vmul.f32 %v1095, %v1097
    %v1099 = vmul.f32 %v1096, %v1097
    %v1100 = vadd.f32 %v1080, %v1098
    %v1101 = vadd.f32 %v1081, %v1099
    %1102 = vset.pattern.permute.xlu0 3
    %1103 = vperm.xlu0 %1102, %v27
    %v1104 = vpop.permute.xlu0 %1103
    %1106 = vset.pattern.permute.xlu0 3
    %1107 = vperm.xlu0 %1106, %v28
    %v1108 = vpop.permute.xlu0 %1107
    %v1110 = vadd.f32 %v1100, %v1104
    %v1111 = vadd.f32 %v1101, %v1108
    %v1112 = vadd.f32 %v1110, %v1111
    %v1113 = vrot.slane %v1112, 4
    %v1114 = vadd.f32 %v1112, %v1113
    %v1115 = vrot.slane %v1114, 2
    %v1116 = vadd.f32 %v1114, %v1115
    %v1117 = vrot.slane %v1116, 1
    %v1118 = vadd.f32 %v1116, %v1117
    %v1119 = vmul.f32 %v1118, %v75
    %v1120 = vsub.f32 %v1110, %v1119
    %v1121 = vsub.f32 %v1111, %v1119
    %v1122 = vmul.f32 %v1120, %v1120
    %v1123 = vmul.f32 %v1121, %v1121
    %v1124 = vadd.f32 %v1122, %v1123
    %v1125 = vrot.slane %v1124, 4
    %v1126 = vadd.f32 %v1124, %v1125
    %v1127 = vrot.slane %v1126, 2
    %v1128 = vadd.f32 %v1126, %v1127
    %v1129 = vrot.slane %v1128, 1
    %v1130 = vadd.f32 %v1128, %v1129
    %v1131 = vmul.f32 %v1130, %v75
    %v1132 = vadd.f32 %v1131, 1e-06
    %v1133 = vrsqrt.pop %v1132
    %v1134 = vmul.f32 %v1133, %v1132
    %v1135 = vmul.f32 %v1134, %v1133
    %v1136 = vmul.f32 0.5, %v1135
    %v1137 = vsub.f32 1.5, %v1136
    %v1138 = vmul.f32 %v1133, %v1137
    %vm1139 = vweird.f32 %v1132
    %vm1140 = vweird.f32 %v1133
    %vm1141 = vmor %vm1139, %vm1140
    %v1142 = vsel %vm1141, %v1133, %v1138
    %v1143 = vmul.f32 %v1120, %v1142
    %v1144 = vmul.f32 %v1121, %v1142
    %1145 = vset.pattern.permute.xlu0 4
    %1146 = vperm.xlu0 %1145, %v27
    %v1147 = vpop.permute.xlu0 %1146
    %1149 = vset.pattern.permute.xlu0 4
    %1150 = vperm.xlu0 %1149, %v28
    %v1151 = vpop.permute.xlu0 %1150
    %v1153 = vmul.f32 %v1143, %v1147
    %v1154 = vmul.f32 %v1144, %v1151
    %1155 = vset.pattern.permute.xlu0 5
    %1156 = vperm.xlu0 %1155, %v27
    %v1157 = vpop.permute.xlu0 %1156
    %1159 = vset.pattern.permute.xlu0 5
    %1160 = vperm.xlu0 %1159, %v28
    %v1161 = vpop.permute.xlu0 %1160
    %v1163 = vadd.f32 %v1153, %v1157
    %v1164 = vadd.f32 %v1154, %v1161
    %v1165 = vld [vmem:[%s4 + $0x10] sm:$0xf]
    %v1166 = vld [vmem:[%s4 + $0x18] sm:$0xf]
    %v1167 = vld [vmem:[%s4 + $0x20] sm:$0xf]
    %v1168 = vld [vmem:[%s4 + $0x28] sm:$0xf]
    %v1169 = vld [vmem:[%s4 + $0x30] sm:$0xf]
    %v1170 = vld [vmem:[%s4 + $0x38] sm:$0xf]
    %v1171 = vld [vmem:[%s4 + $0x40] sm:$0xf]
    %v1172 = vld [vmem:[%s4 + $0x48] sm:$0xf]
    %v1173 = vpack.c.bf16 %v1164, %v1163
    %v1174 = vld [vmem:[%s1] sm:$0xff]
    %v1175 = vld [vmem:[%s1 + $0x8] sm:$0xff]
    %v1176 = vld [vmem:[%s1 + $0x10] sm:$0xff]
    %v1177 = vld [vmem:[%s1 + $0x18] sm:$0xff]
    %v1178 = vld [vmem:[%s1 + $0x20] sm:$0xff]
    %v1179 = vld [vmem:[%s1 + $0x28] sm:$0xff]
    %v1180 = vld [vmem:[%s1 + $0x30] sm:$0xff]
    %v1181 = vld [vmem:[%s1 + $0x38] sm:$0xff]
    %1183 = vset.pattern.permute.xlu0 16
    %1184 = vperm.xlu0 %1183, %v1174
    %v1185 = vpop.permute.xlu0 %1184
    %1188 = vset.pattern.permute.xlu0 16
    %1189 = vperm.xlu0 %1188, %v1175
    %v1190 = vpop.permute.xlu0 %1189
    %1193 = vset.pattern.permute.xlu0 16
    %1194 = vperm.xlu0 %1193, %v1176
    %v1195 = vpop.permute.xlu0 %1194
    %1198 = vset.pattern.permute.xlu0 16
    %1199 = vperm.xlu0 %1198, %v1177
    %v1200 = vpop.permute.xlu0 %1199
    %1203 = vset.pattern.permute.xlu0 16
    %1204 = vperm.xlu0 %1203, %v1178
    %v1205 = vpop.permute.xlu0 %1204
    %1208 = vset.pattern.permute.xlu0 16
    %1209 = vperm.xlu0 %1208, %v1179
    %v1210 = vpop.permute.xlu0 %1209
    %1213 = vset.pattern.permute.xlu0 16
    %1214 = vperm.xlu0 %1213, %v1180
    %v1215 = vpop.permute.xlu0 %1214
    %1218 = vset.pattern.permute.xlu0 16
    %1219 = vperm.xlu0 %1218, %v1181
    %v1220 = vpop.permute.xlu0 %1219
    %v1230 = vunpack.c.l.b16 %v1165
    %v1231 = vunpack.c.l.b16 %v1166
    %v1232 = vunpack.c.l.b16 %v1167
    %v1233 = vunpack.c.l.b16 %v1168
    %v1234 = vunpack.c.l.b16 %v1169
    %v1235 = vunpack.c.l.b16 %v1170
    %v1236 = vunpack.c.l.b16 %v1171
    %v1237 = vunpack.c.l.b16 %v1172
    %v1238 = vpack.c.b16 %v1231, %v1230
    %v1239 = vpack.c.b16 %v1233, %v1232
    %v1240 = vpack.c.b16 %v1235, %v1234
    %v1241 = vpack.c.b16 %v1237, %v1236
    %v1243 = vsel %vm44, %v1238, 0
    %v1246 = vsel %vm44, %v1239, 0
    %v1249 = vsel %vm44, %v1240, 0
    %v1252 = vsel %vm44, %v1241, 0
    %1254 = vmatpush.bf16.msra.mxu0 0
    %1255 = vmatpush.bf16.msra.mxu0 0
    %1256 = vmatpush.bf16.msra.mxu0 0
    %1257 = vmatpush.bf16.msra.mxu0 0
    %1258 = vmatpush.bf16.msra.mxu0 0
    %1259 = vmatpush.bf16.msra.mxu0 0
    %1260 = vmatpush.bf16.msra.mxu0 0
    %1261 = vmatpush.bf16.msra.mxu0 %v1173
    %1262 = vmatmul.bf16.gmra.mxu0 %v1243
    %v1263 = vpop.f32.mrf.mxu0
    %v1264 = vadd.f32 %v1185, %v1263
    %v1265 = vpop.f32.mrf.mxu0
    %v1266 = vadd.f32 %v1190, %v1265
    %1267 = vmatmul.bf16.gmra.mxu0 %v1246
    %v1268 = vpop.f32.mrf.mxu0
    %v1269 = vadd.f32 %v1195, %v1268
    %v1270 = vpop.f32.mrf.mxu0
    %v1271 = vadd.f32 %v1200, %v1270
    %1272 = vmatmul.bf16.gmra.mxu0 %v1249
    %v1273 = vpop.f32.mrf.mxu0
    %v1274 = vadd.f32 %v1205, %v1273
    %v1275 = vpop.f32.mrf.mxu0
    %v1276 = vadd.f32 %v1210, %v1275
    %1277 = vmatmul.bf16.gmra.mxu0 %v1252
    %v1278 = vpop.f32.mrf.mxu0
    %v1279 = vadd.f32 %v1215, %v1278
    %v1280 = vpop.f32.mrf.mxu0
    %v1281 = vadd.f32 %v1220, %v1280
    %1282 = vdwg.mxu0
    %v1283 = vmul.f32 %v1264, 0.5
    %v1284 = vmul.f32 %v1266, 0.5
    %v1285 = vmul.f32 %v1269, 0.5
    %v1286 = vmul.f32 %v1271, 0.5
    %v1287 = vmul.f32 %v1274, 0.5
    %v1288 = vmul.f32 %v1276, 0.5
    %v1289 = vmul.f32 %v1279, 0.5
    %v1290 = vmul.f32 %v1281, 0.5
    %v1291 = vmul.f32 %v1264, 0.044715
    %v1292 = vmul.f32 %v1266, 0.044715
    %v1293 = vmul.f32 %v1269, 0.044715
    %v1294 = vmul.f32 %v1271, 0.044715
    %v1295 = vmul.f32 %v1274, 0.044715
    %v1296 = vmul.f32 %v1276, 0.044715
    %v1297 = vmul.f32 %v1279, 0.044715
    %v1298 = vmul.f32 %v1281, 0.044715
    %v1299 = vmul.f32 %v1291, %v1264
    %v1300 = vmul.f32 %v1292, %v1266
    %v1301 = vmul.f32 %v1293, %v1269
    %v1302 = vmul.f32 %v1294, %v1271
    %v1303 = vmul.f32 %v1295, %v1274
    %v1304 = vmul.f32 %v1296, %v1276
    %v1305 = vmul.f32 %v1297, %v1279
    %v1306 = vmul.f32 %v1298, %v1281
    %v1307 = vmul.f32 %v1299, %v1264
    %v1308 = vmul.f32 %v1300, %v1266
    %v1309 = vmul.f32 %v1301, %v1269
    %v1310 = vmul.f32 %v1302, %v1271
    %v1311 = vmul.f32 %v1303, %v1274
    %v1312 = vmul.f32 %v1304, %v1276
    %v1313 = vmul.f32 %v1305, %v1279
    %v1314 = vmul.f32 %v1306, %v1281
    %v1315 = vadd.f32 %v1264, %v1307
    %v1316 = vadd.f32 %v1266, %v1308
    %v1317 = vadd.f32 %v1269, %v1309
    %v1318 = vadd.f32 %v1271, %v1310
    %v1319 = vadd.f32 %v1274, %v1311
    %v1320 = vadd.f32 %v1276, %v1312
    %v1321 = vadd.f32 %v1279, %v1313
    %v1322 = vadd.f32 %v1281, %v1314
    %v1323 = vmul.f32 %v1315, 0.7978846
    %v1324 = vmul.f32 %v1316, 0.7978846
    %v1325 = vmul.f32 %v1317, 0.7978846
    %v1326 = vmul.f32 %v1318, 0.7978846
    %v1327 = vmul.f32 %v1319, 0.7978846
    %v1328 = vmul.f32 %v1320, 0.7978846
    %v1329 = vmul.f32 %v1321, 0.7978846
    %v1330 = vmul.f32 %v1322, 0.7978846
    %v1331 = vtanh.pop %v1323
    %v1332 = vtanh.pop %v1324
    %v1333 = vtanh.pop %v1325
    %v1334 = vtanh.pop %v1326
    %v1335 = vtanh.pop %v1327
    %v1336 = vtanh.pop %v1328
    %v1337 = vtanh.pop %v1329
    %v1338 = vtanh.pop %v1330
    %v1339 = vadd.f32 %v1331, 1.0
    %v1340 = vadd.f32 %v1332, 1.0
    %v1341 = vadd.f32 %v1333, 1.0
    %v1342 = vadd.f32 %v1334, 1.0
    %v1343 = vadd.f32 %v1335, 1.0
    %v1344 = vadd.f32 %v1336, 1.0
    %v1345 = vadd.f32 %v1337, 1.0
    %v1346 = vadd.f32 %v1338, 1.0
    %v1347 = vmul.f32 %v1283, %v1339
    %v1348 = vmul.f32 %v1284, %v1340
    %v1349 = vmul.f32 %v1285, %v1341
    %v1350 = vmul.f32 %v1286, %v1342
    %v1351 = vmul.f32 %v1287, %v1343
    %v1352 = vmul.f32 %v1288, %v1344
    %v1353 = vmul.f32 %v1289, %v1345
    %v1354 = vmul.f32 %v1290, %v1346
    %v1355 = vld [vmem:[%s4 + $0x50] sm:$0xf]
    %v1356 = vld [vmem:[%s4 + $0x58] sm:$0xf]
    %v1357 = vpack.c.bf16 %v1348, %v1347
    %v1358 = vpack.c.bf16 %v1350, %v1349
    %v1359 = vpack.c.bf16 %v1352, %v1351
    %v1360 = vpack.c.bf16 %v1354, %v1353
    %1361 = vset.pattern.permute.xlu0 6
    %1362 = vperm.xlu0 %1361, %v27
    %v1363 = vpop.permute.xlu0 %1362
    %1365 = vset.pattern.permute.xlu0 6
    %1366 = vperm.xlu0 %1365, %v28
    %v1367 = vpop.permute.xlu0 %1366
    %v1371 = vunpack.c.l.b16 %v1355
    %v1372 = vunpack.c.l.b16 %v1356
    %v1373 = vpack.c.b16 %v1372, %v1371
    %vm1374 = vcmask 523264
    %v1376 = vsel %vm1374, %v1373, 0
    %1378 = vmatpush.bf16.msra.mxu0 0
    %1379 = vmatpush.bf16.msra.mxu0 0
    %1380 = vmatpush.bf16.msra.mxu0 0
    %1381 = vmatpush.bf16.msra.mxu0 0
    %1382 = vmatpush.bf16.msra.mxu0 %v1360
    %1383 = vmatpush.bf16.msra.mxu0 %v1359
    %1384 = vmatpush.bf16.msra.mxu0 %v1358
    %1385 = vmatpush.bf16.msra.mxu0 %v1357
    %1386 = vmatmul.bf16.gmra.mxu0 %v1376
    %v1387 = vpop.f32.mrf.mxu0
    %v1388 = vadd.f32 %v1363, %v1387
    %v1389 = vpop.f32.mrf.mxu0
    %v1390 = vadd.f32 %v1367, %v1389
    %1391 = vdwg.mxu0
    %1392 = vset.pattern.permute.xlu0 7
    %1393 = vperm.xlu0 %1392, %v27
    %v1394 = vpop.permute.xlu0 %1393
    %1396 = vset.pattern.permute.xlu0 7
    %1397 = vperm.xlu0 %1396, %v28
    %v1398 = vpop.permute.xlu0 %1397
    %v1400 = vmul.f32 %v1394, %v1388
    %v1401 = vmul.f32 %v1398, %v1390
    %v1402 = vadd.f32 %v120, %v1400
    %v1403 = vadd.f32 %v121, %v1401
    %v1404 = vadd.f32 %v1402, %v1403
    %v1405 = vrot.slane %v1404, 4
    %v1406 = vadd.f32 %v1404, %v1405
    %v1407 = vrot.slane %v1406, 2
    %v1408 = vadd.f32 %v1406, %v1407
    %v1409 = vrot.slane %v1408, 1
    %v1410 = vadd.f32 %v1408, %v1409
    %v1411 = vmul.f32 %v1410, %v75
    %v1412 = vsub.f32 %v1402, %v1411
    %v1413 = vsub.f32 %v1403, %v1411
    %v1414 = vmul.f32 %v1412, %v1412
    %v1415 = vmul.f32 %v1413, %v1413
    %v1416 = vadd.f32 %v1414, %v1415
    %v1417 = vrot.slane %v1416, 4
    %v1418 = vadd.f32 %v1416, %v1417
    %v1419 = vrot.slane %v1418, 2
    %v1420 = vadd.f32 %v1418, %v1419
    %v1421 = vrot.slane %v1420, 1
    %v1422 = vadd.f32 %v1420, %v1421
    %v1423 = vmul.f32 %v1422, %v75
    %v1424 = vadd.f32 %v1423, 1e-06
    %v1425 = vrsqrt.pop %v1424
    %v1426 = vmul.f32 %v1425, %v1424
    %v1427 = vmul.f32 %v1426, %v1425
    %v1428 = vmul.f32 0.5, %v1427
    %v1429 = vsub.f32 1.5, %v1428
    %v1430 = vmul.f32 %v1425, %v1429
    %vm1431 = vweird.f32 %v1424
    %vm1432 = vweird.f32 %v1425
    %vm1433 = vmor %vm1431, %vm1432
    %v1434 = vsel %vm1433, %v1425, %v1430
    %v1435 = vmul.f32 %v1412, %v1434
    %v1436 = vmul.f32 %v1413, %v1434
    %1437 = vset.pattern.permute.xlu0 8
    %1438 = vperm.xlu0 %1437, %v27
    %v1439 = vpop.permute.xlu0 %1438
    %1441 = vset.pattern.permute.xlu0 8
    %1442 = vperm.xlu0 %1441, %v28
    %v1443 = vpop.permute.xlu0 %1442
    %v1445 = vmul.f32 %v1435, %v1439
    %v1446 = vmul.f32 %v1436, %v1443
    %1447 = vset.pattern.permute.xlu0 9
    %1448 = vperm.xlu0 %1447, %v27
    %v1449 = vpop.permute.xlu0 %1448
    %1451 = vset.pattern.permute.xlu0 9
    %1452 = vperm.xlu0 %1451, %v28
    %v1453 = vpop.permute.xlu0 %1452
    %v1455 = vadd.f32 %v1445, %v1449
    %v1456 = vadd.f32 %v1446, %v1453
    %1457 = vrot.lane.b32.xlu0 %v1455, 127
    %v1458 = vpop.permute.xlu0 %1457
    %1459 = vrot.lane.b32.xlu0 %v1456, 127
    %v1460 = vpop.permute.xlu0 %1459
    %1461 = vrot.lane.b32.xlu0 %v1455, 120
    %v1462 = vpop.permute.xlu0 %1461
    %1463 = vrot.lane.b32.xlu0 %v1456, 120
    %v1464 = vpop.permute.xlu0 %1463
    %1465 = vrot.lane.b32.xlu0 %v1455, 119
    %v1466 = vpop.permute.xlu0 %1465
    %1467 = vrot.lane.b32.xlu0 %v1456, 119
    %v1468 = vpop.permute.xlu0 %1467
    %v1469 = vld [vmem:[%s4 + $0x60] sm:$0xf]
    %v1470 = vld [vmem:[%s4 + $0x68] sm:$0xf]
    %v1471 = vld [vmem:[%s4 + $0x70] sm:$0xf]
    %v1472 = vld [vmem:[%s4 + $0x78] sm:$0xf]
    %v1473 = vpack.c.bf16 %v1456, %v1455
    %v1474 = vpack.c.bf16 %v1460, %v1458
    %v1475 = vpack.c.bf16 %v1464, %v1462
    %v1476 = vpack.c.bf16 %v1468, %v1466
    %v1481 = vunpack.c.l.b16 %v1469
    %v1482 = vunpack.c.l.b16 %v1470
    %v1483 = vunpack.c.l.b16 %v1471
    %v1484 = vunpack.c.l.b16 %v1472
    %v1485 = vpack.c.b16 %v1482, %v1481
    %v1486 = vpack.c.b16 %v1484, %v1483
    %v1488 = vsel %vm1374, %v1485, 0
    %v1491 = vsel %vm1374, %v1486, 0
    %1493 = vmatpush.bf16.msra.mxu0 0
    %1494 = vmatpush.bf16.msra.mxu0 0
    %1495 = vmatpush.bf16.msra.mxu0 0
    %1496 = vmatpush.bf16.msra.mxu0 0
    %1497 = vmatpush.bf16.msra.mxu0 %v1476
    %1498 = vmatpush.bf16.msra.mxu0 %v1475
    %1499 = vmatpush.bf16.msra.mxu0 %v1474
    %1500 = vmatpush.bf16.msra.mxu0 %v1473
    %1501 = vmatmul.bf16.gmra.mxu0 %v1488
    %v1502 = vpop.f32.mrf.mxu0
    %v1503 = vadd.f32 0.0, %v1502
    %v1504 = vpop.f32.mrf.mxu0
    %v1505 = vadd.f32 0.0, %v1504
    %1506 = vmatmul.bf16.gmra.mxu0 %v1491
    %v1507 = vpop.f32.mrf.mxu0
    %v1508 = vadd.f32 0.0, %v1507
    %v1509 = vpop.f32.mrf.mxu0
    %v1510 = vadd.f32 0.0, %v1509
    %1511 = vdwg.mxu0
    %v1512 = vld [vmem:[%s4 + $0x80] sm:$0xf]
    %v1513 = vld [vmem:[%s4 + $0x88] sm:$0xf]
    %v1514 = vld [vmem:[%s4 + $0x90] sm:$0xf]
    %v1515 = vld [vmem:[%s4 + $0x98] sm:$0xf]
    %v1516 = vld [vmem:[%s4 + $0xa0] sm:$0xf]
    %v1517 = vld [vmem:[%s4 + $0xa8] sm:$0xf]
    %v1518 = vld [vmem:[%s4 + $0xb0] sm:$0xf]
    %v1519 = vld [vmem:[%s4 + $0xb8] sm:$0xf]
    %v1520 = vld [vmem:[%s4 + $0xc0] sm:$0xf]
    %v1521 = vld [vmem:[%s4 + $0xc8] sm:$0xf]
    %v1522 = vld [vmem:[%s4 + $0xd0] sm:$0xf]
    %v1523 = vld [vmem:[%s4 + $0xd8] sm:$0xf]
    %v1524 = vld [vmem:[%s4 + $0xe0] sm:$0xf]
    %v1525 = vld [vmem:[%s4 + $0xe8] sm:$0xf]
    %v1526 = vld [vmem:[%s4 + $0xf0] sm:$0xf]
    %v1527 = vld [vmem:[%s4 + $0xf8] sm:$0xf]
    %v1528 = vpack.c.bf16 %v1505, %v1503
    %v1529 = vpack.c.bf16 %v1510, %v1508
    %v1530 = vld [vmem:[%s1] sm:$0xff]
    %v1531 = vld [vmem:[%s1 + $0x8] sm:$0xff]
    %v1532 = vld [vmem:[%s1 + $0x10] sm:$0xff]
    %v1533 = vld [vmem:[%s1 + $0x18] sm:$0xff]
    %1535 = vset.pattern.permute.xlu0 10
    %1536 = vperm.xlu0 %1535, %v1530
    %v1537 = vpop.permute.xlu0 %1536
    %1540 = vset.pattern.permute.xlu0 10
    %1541 = vperm.xlu0 %1540, %v1531
    %v1542 = vpop.permute.xlu0 %1541
    %1545 = vset.pattern.permute.xlu0 10
    %1546 = vperm.xlu0 %1545, %v1532
    %v1547 = vpop.permute.xlu0 %1546
    %1550 = vset.pattern.permute.xlu0 10
    %1551 = vperm.xlu0 %1550, %v1533
    %v1552 = vpop.permute.xlu0 %1551
    %v1570 = vunpack.c.l.b16 %v1512
    %v1571 = vunpack.c.l.b16 %v1513
    %v1572 = vunpack.c.l.b16 %v1514
    %v1573 = vunpack.c.l.b16 %v1515
    %v1574 = vunpack.c.l.b16 %v1516
    %v1575 = vunpack.c.l.b16 %v1517
    %v1576 = vunpack.c.l.b16 %v1518
    %v1577 = vunpack.c.l.b16 %v1519
    %v1578 = vunpack.c.l.b16 %v1520
    %v1579 = vunpack.c.l.b16 %v1521
    %v1580 = vunpack.c.l.b16 %v1522
    %v1581 = vunpack.c.l.b16 %v1523
    %v1582 = vunpack.c.l.b16 %v1524
    %v1583 = vunpack.c.l.b16 %v1525
    %v1584 = vunpack.c.l.b16 %v1526
    %v1585 = vunpack.c.l.b16 %v1527
    %v1586 = vpack.c.b16 %v1571, %v1570
    %v1587 = vpack.c.b16 %v1573, %v1572
    %v1588 = vpack.c.b16 %v1575, %v1574
    %v1589 = vpack.c.b16 %v1577, %v1576
    %v1590 = vpack.c.b16 %v1579, %v1578
    %v1591 = vpack.c.b16 %v1581, %v1580
    %v1592 = vpack.c.b16 %v1583, %v1582
    %v1593 = vpack.c.b16 %v1585, %v1584
    %1602 = vmatpush.bf16.msra.mxu0 %v1593
    %1603 = vmatpush.bf16.msra.mxu0 %v1592
    %1604 = vmatpush.bf16.msra.mxu0 %v1591
    %1605 = vmatpush.bf16.msra.mxu0 %v1590
    %1606 = vmatpush.bf16.msra.mxu0 %v1589
    %1607 = vmatpush.bf16.msra.mxu0 %v1588
    %1608 = vmatpush.bf16.msra.mxu0 %v1587
    %1609 = vmatpush.bf16.msra.mxu0 %v1586
    %1610 = vmatmul.bf16.gmra.mxu0 %v1528
    %v1611 = vpop.f32.mrf.mxu0
    %v1612 = vadd.f32 %v1537, %v1611
    %v1613 = vpop.f32.mrf.mxu0
    %v1614 = vadd.f32 %v1542, %v1613
    %1615 = vmatmul.bf16.gmra.mxu0 %v1529
    %v1616 = vpop.f32.mrf.mxu0
    %v1617 = vadd.f32 %v1547, %v1616
    %v1618 = vpop.f32.mrf.mxu0
    %v1619 = vadd.f32 %v1552, %v1618
    %1620 = vdwg.mxu0
    %1621 = vrot.lane.b32.xlu0 %v1612, 15
    %v1622 = vpop.permute.xlu0 %1621
    %1623 = vrot.lane.b32.xlu0 %v1614, 15
    %v1624 = vpop.permute.xlu0 %1623
    %1625 = vrot.lane.b32.xlu0 %v1617, 15
    %v1626 = vpop.permute.xlu0 %1625
    %1627 = vrot.lane.b32.xlu0 %v1619, 15
    %v1628 = vpop.permute.xlu0 %1627
    %v1629 = vld [vmem:[%s3 + $0x10] sm:$0xff]
    %v1630 = vld [vmem:[%s3 + $0x18] sm:$0xff]
    %v1631 = vld [vmem:[%s3 + $0x20] sm:$0xff]
    %v1632 = vld [vmem:[%s3 + $0x28] sm:$0xff]
    %v1633 = vld [vmem:[%s2 + $0x38] sm:$0x1]
    %1635 = vset.pattern.permute.xlu0 0
    %1636 = vperm.xlu0 %1635, %v1629
    %v1637 = vpop.permute.xlu0 %1636
    %1640 = vset.pattern.permute.xlu0 0
    %1641 = vperm.xlu0 %1640, %v1630
    %v1642 = vpop.permute.xlu0 %1641
    %1645 = vset.pattern.permute.xlu0 0
    %1646 = vperm.xlu0 %1645, %v1631
    %v1647 = vpop.permute.xlu0 %1646
    %1650 = vset.pattern.permute.xlu0 0
    %1651 = vperm.xlu0 %1650, %v1632
    %v1652 = vpop.permute.xlu0 %1651
    %v1654 = vmul.f32 %v1622, %v1637
    %v1655 = vmul.f32 %v1624, %v1642
    %v1656 = vmul.f32 %v1626, %v1647
    %v1657 = vmul.f32 %v1628, %v1652
    %v1658 = vperm.slane %v1633, 0
    %v1659 = vmul.f32 %v1654, %v1658
    %v1660 = vmul.f32 %v1655, %v1658
    %v1661 = vmul.f32 %v1656, %v1658
    %v1662 = vmul.f32 %v1657, %v1658
    %v1663 = vadd.f32 %v1659, 0.0
    %v1664 = vadd.f32 %v1660, 0.0
    %v1665 = vadd.f32 %v1661, 0.0
    %v1666 = vadd.f32 %v1662, 0.0
    %1667 = vrot.lane.b32.xlu0 %v1612, 14
    %v1668 = vpop.permute.xlu0 %1667
    %1669 = vrot.lane.b32.xlu0 %v1614, 14
    %v1670 = vpop.permute.xlu0 %1669
    %1671 = vrot.lane.b32.xlu0 %v1617, 14
    %v1672 = vpop.permute.xlu0 %1671
    %1673 = vrot.lane.b32.xlu0 %v1619, 14
    %v1674 = vpop.permute.xlu0 %1673
    %v1675 = vld [vmem:[%s2 + $0x39] sm:$0x1]
    %1676 = vset.pattern.permute.xlu0 1
    %1677 = vperm.xlu0 %1676, %v1629
    %v1678 = vpop.permute.xlu0 %1677
    %1680 = vset.pattern.permute.xlu0 1
    %1681 = vperm.xlu0 %1680, %v1630
    %v1682 = vpop.permute.xlu0 %1681
    %1684 = vset.pattern.permute.xlu0 1
    %1685 = vperm.xlu0 %1684, %v1631
    %v1686 = vpop.permute.xlu0 %1685
    %1688 = vset.pattern.permute.xlu0 1
    %1689 = vperm.xlu0 %1688, %v1632
    %v1690 = vpop.permute.xlu0 %1689
    %v1692 = vmul.f32 %v1668, %v1678
    %v1693 = vmul.f32 %v1670, %v1682
    %v1694 = vmul.f32 %v1672, %v1686
    %v1695 = vmul.f32 %v1674, %v1690
    %v1696 = vperm.slane %v1675, 0
    %v1697 = vmul.f32 %v1692, %v1696
    %v1698 = vmul.f32 %v1693, %v1696
    %v1699 = vmul.f32 %v1694, %v1696
    %v1700 = vmul.f32 %v1695, %v1696
    %v1701 = vadd.f32 %v1663, %v1697
    %v1702 = vadd.f32 %v1664, %v1698
    %v1703 = vadd.f32 %v1665, %v1699
    %v1704 = vadd.f32 %v1666, %v1700
    %1705 = vrot.lane.b32.xlu0 %v1612, 13
    %v1706 = vpop.permute.xlu0 %1705
    %1707 = vrot.lane.b32.xlu0 %v1614, 13
    %v1708 = vpop.permute.xlu0 %1707
    %1709 = vrot.lane.b32.xlu0 %v1617, 13
    %v1710 = vpop.permute.xlu0 %1709
    %1711 = vrot.lane.b32.xlu0 %v1619, 13
    %v1712 = vpop.permute.xlu0 %1711
    %v1713 = vld [vmem:[%s2 + $0x3a] sm:$0x1]
    %1714 = vset.pattern.permute.xlu0 2
    %1715 = vperm.xlu0 %1714, %v1629
    %v1716 = vpop.permute.xlu0 %1715
    %1718 = vset.pattern.permute.xlu0 2
    %1719 = vperm.xlu0 %1718, %v1630
    %v1720 = vpop.permute.xlu0 %1719
    %1722 = vset.pattern.permute.xlu0 2
    %1723 = vperm.xlu0 %1722, %v1631
    %v1724 = vpop.permute.xlu0 %1723
    %1726 = vset.pattern.permute.xlu0 2
    %1727 = vperm.xlu0 %1726, %v1632
    %v1728 = vpop.permute.xlu0 %1727
    %v1730 = vmul.f32 %v1706, %v1716
    %v1731 = vmul.f32 %v1708, %v1720
    %v1732 = vmul.f32 %v1710, %v1724
    %v1733 = vmul.f32 %v1712, %v1728
    %v1734 = vperm.slane %v1713, 0
    %v1735 = vmul.f32 %v1730, %v1734
    %v1736 = vmul.f32 %v1731, %v1734
    %v1737 = vmul.f32 %v1732, %v1734
    %v1738 = vmul.f32 %v1733, %v1734
    %v1739 = vadd.f32 %v1701, %v1735
    %v1740 = vadd.f32 %v1702, %v1736
    %v1741 = vadd.f32 %v1703, %v1737
    %v1742 = vadd.f32 %v1704, %v1738
    %1743 = vrot.lane.b32.xlu0 %v1612, 12
    %v1744 = vpop.permute.xlu0 %1743
    %1745 = vrot.lane.b32.xlu0 %v1614, 12
    %v1746 = vpop.permute.xlu0 %1745
    %1747 = vrot.lane.b32.xlu0 %v1617, 12
    %v1748 = vpop.permute.xlu0 %1747
    %1749 = vrot.lane.b32.xlu0 %v1619, 12
    %v1750 = vpop.permute.xlu0 %1749
    %v1751 = vld [vmem:[%s2 + $0x3b] sm:$0x1]
    %1752 = vset.pattern.permute.xlu0 3
    %1753 = vperm.xlu0 %1752, %v1629
    %v1754 = vpop.permute.xlu0 %1753
    %1756 = vset.pattern.permute.xlu0 3
    %1757 = vperm.xlu0 %1756, %v1630
    %v1758 = vpop.permute.xlu0 %1757
    %1760 = vset.pattern.permute.xlu0 3
    %1761 = vperm.xlu0 %1760, %v1631
    %v1762 = vpop.permute.xlu0 %1761
    %1764 = vset.pattern.permute.xlu0 3
    %1765 = vperm.xlu0 %1764, %v1632
    %v1766 = vpop.permute.xlu0 %1765
    %v1768 = vmul.f32 %v1744, %v1754
    %v1769 = vmul.f32 %v1746, %v1758
    %v1770 = vmul.f32 %v1748, %v1762
    %v1771 = vmul.f32 %v1750, %v1766
    %v1772 = vperm.slane %v1751, 0
    %v1773 = vmul.f32 %v1768, %v1772
    %v1774 = vmul.f32 %v1769, %v1772
    %v1775 = vmul.f32 %v1770, %v1772
    %v1776 = vmul.f32 %v1771, %v1772
    %v1777 = vadd.f32 %v1739, %v1773
    %v1778 = vadd.f32 %v1740, %v1774
    %v1779 = vadd.f32 %v1741, %v1775
    %v1780 = vadd.f32 %v1742, %v1776
    %1781 = vrot.lane.b32.xlu0 %v1612, 11
    %v1782 = vpop.permute.xlu0 %1781
    %1783 = vrot.lane.b32.xlu0 %v1614, 11
    %v1784 = vpop.permute.xlu0 %1783
    %1785 = vrot.lane.b32.xlu0 %v1617, 11
    %v1786 = vpop.permute.xlu0 %1785
    %1787 = vrot.lane.b32.xlu0 %v1619, 11
    %v1788 = vpop.permute.xlu0 %1787
    %v1789 = vld [vmem:[%s2 + $0x3c] sm:$0x1]
    %1790 = vset.pattern.permute.xlu0 4
    %1791 = vperm.xlu0 %1790, %v1629
    %v1792 = vpop.permute.xlu0 %1791
    %1794 = vset.pattern.permute.xlu0 4
    %1795 = vperm.xlu0 %1794, %v1630
    %v1796 = vpop.permute.xlu0 %1795
    %1798 = vset.pattern.permute.xlu0 4
    %1799 = vperm.xlu0 %1798, %v1631
    %v1800 = vpop.permute.xlu0 %1799
    %1802 = vset.pattern.permute.xlu0 4
    %1803 = vperm.xlu0 %1802, %v1632
    %v1804 = vpop.permute.xlu0 %1803
    %v1806 = vmul.f32 %v1782, %v1792
    %v1807 = vmul.f32 %v1784, %v1796
    %v1808 = vmul.f32 %v1786, %v1800
    %v1809 = vmul.f32 %v1788, %v1804
    %v1810 = vperm.slane %v1789, 0
    %v1811 = vmul.f32 %v1806, %v1810
    %v1812 = vmul.f32 %v1807, %v1810
    %v1813 = vmul.f32 %v1808, %v1810
    %v1814 = vmul.f32 %v1809, %v1810
    %v1815 = vadd.f32 %v1777, %v1811
    %v1816 = vadd.f32 %v1778, %v1812
    %v1817 = vadd.f32 %v1779, %v1813
    %v1818 = vadd.f32 %v1780, %v1814
    %1819 = vrot.lane.b32.xlu0 %v1612, 10
    %v1820 = vpop.permute.xlu0 %1819
    %1821 = vrot.lane.b32.xlu0 %v1614, 10
    %v1822 = vpop.permute.xlu0 %1821
    %1823 = vrot.lane.b32.xlu0 %v1617, 10
    %v1824 = vpop.permute.xlu0 %1823
    %1825 = vrot.lane.b32.xlu0 %v1619, 10
    %v1826 = vpop.permute.xlu0 %1825
    %v1827 = vld [vmem:[%s2 + $0x3d] sm:$0x1]
    %1828 = vset.pattern.permute.xlu0 5
    %1829 = vperm.xlu0 %1828, %v1629
    %v1830 = vpop.permute.xlu0 %1829
    %1832 = vset.pattern.permute.xlu0 5
    %1833 = vperm.xlu0 %1832, %v1630
    %v1834 = vpop.permute.xlu0 %1833
    %1836 = vset.pattern.permute.xlu0 5
    %1837 = vperm.xlu0 %1836, %v1631
    %v1838 = vpop.permute.xlu0 %1837
    %1840 = vset.pattern.permute.xlu0 5
    %1841 = vperm.xlu0 %1840, %v1632
    %v1842 = vpop.permute.xlu0 %1841
    %v1844 = vmul.f32 %v1820, %v1830
    %v1845 = vmul.f32 %v1822, %v1834
    %v1846 = vmul.f32 %v1824, %v1838
    %v1847 = vmul.f32 %v1826, %v1842
    %v1848 = vperm.slane %v1827, 0
    %v1849 = vmul.f32 %v1844, %v1848
    %v1850 = vmul.f32 %v1845, %v1848
    %v1851 = vmul.f32 %v1846, %v1848
    %v1852 = vmul.f32 %v1847, %v1848
    %v1853 = vadd.f32 %v1815, %v1849
    %v1854 = vadd.f32 %v1816, %v1850
    %v1855 = vadd.f32 %v1817, %v1851
    %v1856 = vadd.f32 %v1818, %v1852
    %1857 = vrot.lane.b32.xlu0 %v1612, 9
    %v1858 = vpop.permute.xlu0 %1857
    %1859 = vrot.lane.b32.xlu0 %v1614, 9
    %v1860 = vpop.permute.xlu0 %1859
    %1861 = vrot.lane.b32.xlu0 %v1617, 9
    %v1862 = vpop.permute.xlu0 %1861
    %1863 = vrot.lane.b32.xlu0 %v1619, 9
    %v1864 = vpop.permute.xlu0 %1863
    %v1865 = vld [vmem:[%s2 + $0x3e] sm:$0x1]
    %1866 = vset.pattern.permute.xlu0 6
    %1867 = vperm.xlu0 %1866, %v1629
    %v1868 = vpop.permute.xlu0 %1867
    %1870 = vset.pattern.permute.xlu0 6
    %1871 = vperm.xlu0 %1870, %v1630
    %v1872 = vpop.permute.xlu0 %1871
    %1874 = vset.pattern.permute.xlu0 6
    %1875 = vperm.xlu0 %1874, %v1631
    %v1876 = vpop.permute.xlu0 %1875
    %1878 = vset.pattern.permute.xlu0 6
    %1879 = vperm.xlu0 %1878, %v1632
    %v1880 = vpop.permute.xlu0 %1879
    %v1882 = vmul.f32 %v1858, %v1868
    %v1883 = vmul.f32 %v1860, %v1872
    %v1884 = vmul.f32 %v1862, %v1876
    %v1885 = vmul.f32 %v1864, %v1880
    %v1886 = vperm.slane %v1865, 0
    %v1887 = vmul.f32 %v1882, %v1886
    %v1888 = vmul.f32 %v1883, %v1886
    %v1889 = vmul.f32 %v1884, %v1886
    %v1890 = vmul.f32 %v1885, %v1886
    %v1891 = vadd.f32 %v1853, %v1887
    %v1892 = vadd.f32 %v1854, %v1888
    %v1893 = vadd.f32 %v1855, %v1889
    %v1894 = vadd.f32 %v1856, %v1890
    %v1895 = vld [vmem:[%s2 + $0x3f] sm:$0x1]
    %1896 = vset.pattern.permute.xlu0 7
    %1897 = vperm.xlu0 %1896, %v1629
    %v1898 = vpop.permute.xlu0 %1897
    %1900 = vset.pattern.permute.xlu0 7
    %1901 = vperm.xlu0 %1900, %v1630
    %v1902 = vpop.permute.xlu0 %1901
    %1904 = vset.pattern.permute.xlu0 7
    %1905 = vperm.xlu0 %1904, %v1631
    %v1906 = vpop.permute.xlu0 %1905
    %1908 = vset.pattern.permute.xlu0 7
    %1909 = vperm.xlu0 %1908, %v1632
    %v1910 = vpop.permute.xlu0 %1909
    %v1912 = vmul.f32 %v1782, %v1898
    %v1913 = vmul.f32 %v1784, %v1902
    %v1914 = vmul.f32 %v1786, %v1906
    %v1915 = vmul.f32 %v1788, %v1910
    %v1916 = vperm.slane %v1895, 0
    %v1917 = vmul.f32 %v1912, %v1916
    %v1918 = vmul.f32 %v1913, %v1916
    %v1919 = vmul.f32 %v1914, %v1916
    %v1920 = vmul.f32 %v1915, %v1916
    %v1921 = vadd.f32 %v1891, %v1917
    %v1922 = vadd.f32 %v1892, %v1918
    %v1923 = vadd.f32 %v1893, %v1919
    %v1924 = vadd.f32 %v1894, %v1920
    %v1925 = vld [vmem:[%s2 + $0x40] sm:$0x1]
    %1926 = vset.pattern.permute.xlu0 8
    %1927 = vperm.xlu0 %1926, %v1629
    %v1928 = vpop.permute.xlu0 %1927
    %1930 = vset.pattern.permute.xlu0 8
    %1931 = vperm.xlu0 %1930, %v1630
    %v1932 = vpop.permute.xlu0 %1931
    %1934 = vset.pattern.permute.xlu0 8
    %1935 = vperm.xlu0 %1934, %v1631
    %v1936 = vpop.permute.xlu0 %1935
    %1938 = vset.pattern.permute.xlu0 8
    %1939 = vperm.xlu0 %1938, %v1632
    %v1940 = vpop.permute.xlu0 %1939
    %v1942 = vmul.f32 %v1820, %v1928
    %v1943 = vmul.f32 %v1822, %v1932
    %v1944 = vmul.f32 %v1824, %v1936
    %v1945 = vmul.f32 %v1826, %v1940
    %v1946 = vperm.slane %v1925, 0
    %v1947 = vmul.f32 %v1942, %v1946
    %v1948 = vmul.f32 %v1943, %v1946
    %v1949 = vmul.f32 %v1944, %v1946
    %v1950 = vmul.f32 %v1945, %v1946
    %v1951 = vadd.f32 %v1921, %v1947
    %v1952 = vadd.f32 %v1922, %v1948
    %v1953 = vadd.f32 %v1923, %v1949
    %v1954 = vadd.f32 %v1924, %v1950
    %v1955 = vld [vmem:[%s2 + $0x41] sm:$0x1]
    %1956 = vset.pattern.permute.xlu0 9
    %1957 = vperm.xlu0 %1956, %v1629
    %v1958 = vpop.permute.xlu0 %1957
    %1960 = vset.pattern.permute.xlu0 9
    %1961 = vperm.xlu0 %1960, %v1630
    %v1962 = vpop.permute.xlu0 %1961
    %1964 = vset.pattern.permute.xlu0 9
    %1965 = vperm.xlu0 %1964, %v1631
    %v1966 = vpop.permute.xlu0 %1965
    %1968 = vset.pattern.permute.xlu0 9
    %1969 = vperm.xlu0 %1968, %v1632
    %v1970 = vpop.permute.xlu0 %1969
    %v1972 = vmul.f32 %v1858, %v1958
    %v1973 = vmul.f32 %v1860, %v1962
    %v1974 = vmul.f32 %v1862, %v1966
    %v1975 = vmul.f32 %v1864, %v1970
    %v1976 = vperm.slane %v1955, 0
    %v1977 = vmul.f32 %v1972, %v1976
    %v1978 = vmul.f32 %v1973, %v1976
    %v1979 = vmul.f32 %v1974, %v1976
    %v1980 = vmul.f32 %v1975, %v1976
    %v1981 = vadd.f32 %v1951, %v1977
    %v1982 = vadd.f32 %v1952, %v1978
    %v1983 = vadd.f32 %v1953, %v1979
    %v1984 = vadd.f32 %v1954, %v1980
    %1985 = vrot.lane.b32.xlu0 %v1612, 8
    %v1986 = vpop.permute.xlu0 %1985
    %1987 = vrot.lane.b32.xlu0 %v1614, 8
    %v1988 = vpop.permute.xlu0 %1987
    %1989 = vrot.lane.b32.xlu0 %v1617, 8
    %v1990 = vpop.permute.xlu0 %1989
    %1991 = vrot.lane.b32.xlu0 %v1619, 8
    %v1992 = vpop.permute.xlu0 %1991
    %v1993 = vld [vmem:[%s2 + $0x42] sm:$0x1]
    %1994 = vset.pattern.permute.xlu0 10
    %1995 = vperm.xlu0 %1994, %v1629
    %v1996 = vpop.permute.xlu0 %1995
    %1998 = vset.pattern.permute.xlu0 10
    %1999 = vperm.xlu0 %1998, %v1630
    %v2000 = vpop.permute.xlu0 %1999
    %2002 = vset.pattern.permute.xlu0 10
    %2003 = vperm.xlu0 %2002, %v1631
    %v2004 = vpop.permute.xlu0 %2003
    %2006 = vset.pattern.permute.xlu0 10
    %2007 = vperm.xlu0 %2006, %v1632
    %v2008 = vpop.permute.xlu0 %2007
    %v2010 = vmul.f32 %v1986, %v1996
    %v2011 = vmul.f32 %v1988, %v2000
    %v2012 = vmul.f32 %v1990, %v2004
    %v2013 = vmul.f32 %v1992, %v2008
    %v2014 = vperm.slane %v1993, 0
    %v2015 = vmul.f32 %v2010, %v2014
    %v2016 = vmul.f32 %v2011, %v2014
    %v2017 = vmul.f32 %v2012, %v2014
    %v2018 = vmul.f32 %v2013, %v2014
    %v2019 = vadd.f32 %v1981, %v2015
    %v2020 = vadd.f32 %v1982, %v2016
    %v2021 = vadd.f32 %v1983, %v2017
    %v2022 = vadd.f32 %v1984, %v2018
    %2023 = vrot.lane.b32.xlu0 %v1612, 7
    %v2024 = vpop.permute.xlu0 %2023
    %2025 = vrot.lane.b32.xlu0 %v1614, 7
    %v2026 = vpop.permute.xlu0 %2025
    %2027 = vrot.lane.b32.xlu0 %v1617, 7
    %v2028 = vpop.permute.xlu0 %2027
    %2029 = vrot.lane.b32.xlu0 %v1619, 7
    %v2030 = vpop.permute.xlu0 %2029
    %v2031 = vld [vmem:[%s2 + $0x43] sm:$0x1]
    %2032 = vset.pattern.permute.xlu0 11
    %2033 = vperm.xlu0 %2032, %v1629
    %v2034 = vpop.permute.xlu0 %2033
    %2036 = vset.pattern.permute.xlu0 11
    %2037 = vperm.xlu0 %2036, %v1630
    %v2038 = vpop.permute.xlu0 %2037
    %2040 = vset.pattern.permute.xlu0 11
    %2041 = vperm.xlu0 %2040, %v1631
    %v2042 = vpop.permute.xlu0 %2041
    %2044 = vset.pattern.permute.xlu0 11
    %2045 = vperm.xlu0 %2044, %v1632
    %v2046 = vpop.permute.xlu0 %2045
    %v2048 = vmul.f32 %v2024, %v2034
    %v2049 = vmul.f32 %v2026, %v2038
    %v2050 = vmul.f32 %v2028, %v2042
    %v2051 = vmul.f32 %v2030, %v2046
    %v2052 = vperm.slane %v2031, 0
    %v2053 = vmul.f32 %v2048, %v2052
    %v2054 = vmul.f32 %v2049, %v2052
    %v2055 = vmul.f32 %v2050, %v2052
    %v2056 = vmul.f32 %v2051, %v2052
    %v2057 = vadd.f32 %v2019, %v2053
    %v2058 = vadd.f32 %v2020, %v2054
    %v2059 = vadd.f32 %v2021, %v2055
    %v2060 = vadd.f32 %v2022, %v2056
    %2061 = vrot.lane.b32.xlu0 %v1612, 6
    %v2062 = vpop.permute.xlu0 %2061
    %2063 = vrot.lane.b32.xlu0 %v1614, 6
    %v2064 = vpop.permute.xlu0 %2063
    %2065 = vrot.lane.b32.xlu0 %v1617, 6
    %v2066 = vpop.permute.xlu0 %2065
    %2067 = vrot.lane.b32.xlu0 %v1619, 6
    %v2068 = vpop.permute.xlu0 %2067
    %v2069 = vld [vmem:[%s2 + $0x44] sm:$0x1]
    %2070 = vset.pattern.permute.xlu0 12
    %2071 = vperm.xlu0 %2070, %v1629
    %v2072 = vpop.permute.xlu0 %2071
    %2074 = vset.pattern.permute.xlu0 12
    %2075 = vperm.xlu0 %2074, %v1630
    %v2076 = vpop.permute.xlu0 %2075
    %2078 = vset.pattern.permute.xlu0 12
    %2079 = vperm.xlu0 %2078, %v1631
    %v2080 = vpop.permute.xlu0 %2079
    %2082 = vset.pattern.permute.xlu0 12
    %2083 = vperm.xlu0 %2082, %v1632
    %v2084 = vpop.permute.xlu0 %2083
    %v2086 = vmul.f32 %v2062, %v2072
    %v2087 = vmul.f32 %v2064, %v2076
    %v2088 = vmul.f32 %v2066, %v2080
    %v2089 = vmul.f32 %v2068, %v2084
    %v2090 = vperm.slane %v2069, 0
    %v2091 = vmul.f32 %v2086, %v2090
    %v2092 = vmul.f32 %v2087, %v2090
    %v2093 = vmul.f32 %v2088, %v2090
    %v2094 = vmul.f32 %v2089, %v2090
    %v2095 = vadd.f32 %v2057, %v2091
    %v2096 = vadd.f32 %v2058, %v2092
    %v2097 = vadd.f32 %v2059, %v2093
    %v2098 = vadd.f32 %v2060, %v2094
    %2099 = vrot.lane.b32.xlu0 %v1612, 5
    %v2100 = vpop.permute.xlu0 %2099
    %2101 = vrot.lane.b32.xlu0 %v1614, 5
    %v2102 = vpop.permute.xlu0 %2101
    %2103 = vrot.lane.b32.xlu0 %v1617, 5
    %v2104 = vpop.permute.xlu0 %2103
    %2105 = vrot.lane.b32.xlu0 %v1619, 5
    %v2106 = vpop.permute.xlu0 %2105
    %v2107 = vld [vmem:[%s2 + $0x45] sm:$0x1]
    %2108 = vset.pattern.permute.xlu0 13
    %2109 = vperm.xlu0 %2108, %v1629
    %v2110 = vpop.permute.xlu0 %2109
    %2112 = vset.pattern.permute.xlu0 13
    %2113 = vperm.xlu0 %2112, %v1630
    %v2114 = vpop.permute.xlu0 %2113
    %2116 = vset.pattern.permute.xlu0 13
    %2117 = vperm.xlu0 %2116, %v1631
    %v2118 = vpop.permute.xlu0 %2117
    %2120 = vset.pattern.permute.xlu0 13
    %2121 = vperm.xlu0 %2120, %v1632
    %v2122 = vpop.permute.xlu0 %2121
    %v2124 = vmul.f32 %v2100, %v2110
    %v2125 = vmul.f32 %v2102, %v2114
    %v2126 = vmul.f32 %v2104, %v2118
    %v2127 = vmul.f32 %v2106, %v2122
    %v2128 = vperm.slane %v2107, 0
    %v2129 = vmul.f32 %v2124, %v2128
    %v2130 = vmul.f32 %v2125, %v2128
    %v2131 = vmul.f32 %v2126, %v2128
    %v2132 = vmul.f32 %v2127, %v2128
    %v2133 = vadd.f32 %v2095, %v2129
    %v2134 = vadd.f32 %v2096, %v2130
    %v2135 = vadd.f32 %v2097, %v2131
    %v2136 = vadd.f32 %v2098, %v2132
    %v2137 = vld [vmem:[%s2 + $0x46] sm:$0x1]
    %2138 = vset.pattern.permute.xlu0 14
    %2139 = vperm.xlu0 %2138, %v1629
    %v2140 = vpop.permute.xlu0 %2139
    %2142 = vset.pattern.permute.xlu0 14
    %2143 = vperm.xlu0 %2142, %v1630
    %v2144 = vpop.permute.xlu0 %2143
    %2146 = vset.pattern.permute.xlu0 14
    %2147 = vperm.xlu0 %2146, %v1631
    %v2148 = vpop.permute.xlu0 %2147
    %2150 = vset.pattern.permute.xlu0 14
    %2151 = vperm.xlu0 %2150, %v1632
    %v2152 = vpop.permute.xlu0 %2151
    %v2154 = vmul.f32 %v2024, %v2140
    %v2155 = vmul.f32 %v2026, %v2144
    %v2156 = vmul.f32 %v2028, %v2148
    %v2157 = vmul.f32 %v2030, %v2152
    %v2158 = vperm.slane %v2137, 0
    %v2159 = vmul.f32 %v2154, %v2158
    %v2160 = vmul.f32 %v2155, %v2158
    %v2161 = vmul.f32 %v2156, %v2158
    %v2162 = vmul.f32 %v2157, %v2158
    %v2163 = vadd.f32 %v2133, %v2159
    %v2164 = vadd.f32 %v2134, %v2160
    %v2165 = vadd.f32 %v2135, %v2161
    %v2166 = vadd.f32 %v2136, %v2162
    %v2167 = vld [vmem:[%s2 + $0x47] sm:$0x1]
    %2168 = vset.pattern.permute.xlu0 15
    %2169 = vperm.xlu0 %2168, %v1629
    %v2170 = vpop.permute.xlu0 %2169
    %2172 = vset.pattern.permute.xlu0 15
    %2173 = vperm.xlu0 %2172, %v1630
    %v2174 = vpop.permute.xlu0 %2173
    %2176 = vset.pattern.permute.xlu0 15
    %2177 = vperm.xlu0 %2176, %v1631
    %v2178 = vpop.permute.xlu0 %2177
    %2180 = vset.pattern.permute.xlu0 15
    %2181 = vperm.xlu0 %2180, %v1632
    %v2182 = vpop.permute.xlu0 %2181
    %v2184 = vmul.f32 %v2062, %v2170
    %v2185 = vmul.f32 %v2064, %v2174
    %v2186 = vmul.f32 %v2066, %v2178
    %v2187 = vmul.f32 %v2068, %v2182
    %v2188 = vperm.slane %v2167, 0
    %v2189 = vmul.f32 %v2184, %v2188
    %v2190 = vmul.f32 %v2185, %v2188
    %v2191 = vmul.f32 %v2186, %v2188
    %v2192 = vmul.f32 %v2187, %v2188
    %v2193 = vadd.f32 %v2163, %v2189
    %v2194 = vadd.f32 %v2164, %v2190
    %v2195 = vadd.f32 %v2165, %v2191
    %v2196 = vadd.f32 %v2166, %v2192
    %v2197 = vld [vmem:[%s2 + $0x48] sm:$0x1]
    %2198 = vset.pattern.permute.xlu0 16
    %2199 = vperm.xlu0 %2198, %v1629
    %v2200 = vpop.permute.xlu0 %2199
    %2202 = vset.pattern.permute.xlu0 16
    %2203 = vperm.xlu0 %2202, %v1630
    %v2204 = vpop.permute.xlu0 %2203
    %2206 = vset.pattern.permute.xlu0 16
    %2207 = vperm.xlu0 %2206, %v1631
    %v2208 = vpop.permute.xlu0 %2207
    %2210 = vset.pattern.permute.xlu0 16
    %2211 = vperm.xlu0 %2210, %v1632
    %v2212 = vpop.permute.xlu0 %2211
    %v2214 = vmul.f32 %v2100, %v2200
    %v2215 = vmul.f32 %v2102, %v2204
    %v2216 = vmul.f32 %v2104, %v2208
    %v2217 = vmul.f32 %v2106, %v2212
    %v2218 = vperm.slane %v2197, 0
    %v2219 = vmul.f32 %v2214, %v2218
    %v2220 = vmul.f32 %v2215, %v2218
    %v2221 = vmul.f32 %v2216, %v2218
    %v2222 = vmul.f32 %v2217, %v2218
    %v2223 = vadd.f32 %v2193, %v2219
    %v2224 = vadd.f32 %v2194, %v2220
    %v2225 = vadd.f32 %v2195, %v2221
    %v2226 = vadd.f32 %v2196, %v2222
    %2227 = vrot.lane.b32.xlu0 %v1612, 4
    %v2228 = vpop.permute.xlu0 %2227
    %2229 = vrot.lane.b32.xlu0 %v1614, 4
    %v2230 = vpop.permute.xlu0 %2229
    %2231 = vrot.lane.b32.xlu0 %v1617, 4
    %v2232 = vpop.permute.xlu0 %2231
    %2233 = vrot.lane.b32.xlu0 %v1619, 4
    %v2234 = vpop.permute.xlu0 %2233
    %v2235 = vld [vmem:[%s2 + $0x49] sm:$0x1]
    %2236 = vset.pattern.permute.xlu0 17
    %2237 = vperm.xlu0 %2236, %v1629
    %v2238 = vpop.permute.xlu0 %2237
    %2240 = vset.pattern.permute.xlu0 17
    %2241 = vperm.xlu0 %2240, %v1630
    %v2242 = vpop.permute.xlu0 %2241
    %2244 = vset.pattern.permute.xlu0 17
    %2245 = vperm.xlu0 %2244, %v1631
    %v2246 = vpop.permute.xlu0 %2245
    %2248 = vset.pattern.permute.xlu0 17
    %2249 = vperm.xlu0 %2248, %v1632
    %v2250 = vpop.permute.xlu0 %2249
    %v2252 = vmul.f32 %v2228, %v2238
    %v2253 = vmul.f32 %v2230, %v2242
    %v2254 = vmul.f32 %v2232, %v2246
    %v2255 = vmul.f32 %v2234, %v2250
    %v2256 = vperm.slane %v2235, 0
    %v2257 = vmul.f32 %v2252, %v2256
    %v2258 = vmul.f32 %v2253, %v2256
    %v2259 = vmul.f32 %v2254, %v2256
    %v2260 = vmul.f32 %v2255, %v2256
    %v2261 = vadd.f32 %v2223, %v2257
    %v2262 = vadd.f32 %v2224, %v2258
    %v2263 = vadd.f32 %v2225, %v2259
    %v2264 = vadd.f32 %v2226, %v2260
    %2265 = vrot.lane.b32.xlu0 %v1612, 3
    %v2266 = vpop.permute.xlu0 %2265
    %2267 = vrot.lane.b32.xlu0 %v1614, 3
    %v2268 = vpop.permute.xlu0 %2267
    %2269 = vrot.lane.b32.xlu0 %v1617, 3
    %v2270 = vpop.permute.xlu0 %2269
    %2271 = vrot.lane.b32.xlu0 %v1619, 3
    %v2272 = vpop.permute.xlu0 %2271
    %v2273 = vld [vmem:[%s2 + $0x4a] sm:$0x1]
    %2274 = vset.pattern.permute.xlu0 18
    %2275 = vperm.xlu0 %2274, %v1629
    %v2276 = vpop.permute.xlu0 %2275
    %2278 = vset.pattern.permute.xlu0 18
    %2279 = vperm.xlu0 %2278, %v1630
    %v2280 = vpop.permute.xlu0 %2279
    %2282 = vset.pattern.permute.xlu0 18
    %2283 = vperm.xlu0 %2282, %v1631
    %v2284 = vpop.permute.xlu0 %2283
    %2286 = vset.pattern.permute.xlu0 18
    %2287 = vperm.xlu0 %2286, %v1632
    %v2288 = vpop.permute.xlu0 %2287
    %v2290 = vmul.f32 %v2266, %v2276
    %v2291 = vmul.f32 %v2268, %v2280
    %v2292 = vmul.f32 %v2270, %v2284
    %v2293 = vmul.f32 %v2272, %v2288
    %v2294 = vperm.slane %v2273, 0
    %v2295 = vmul.f32 %v2290, %v2294
    %v2296 = vmul.f32 %v2291, %v2294
    %v2297 = vmul.f32 %v2292, %v2294
    %v2298 = vmul.f32 %v2293, %v2294
    %v2299 = vadd.f32 %v2261, %v2295
    %v2300 = vadd.f32 %v2262, %v2296
    %v2301 = vadd.f32 %v2263, %v2297
    %v2302 = vadd.f32 %v2264, %v2298
    %2303 = vrot.lane.b32.xlu0 %v1612, 2
    %v2304 = vpop.permute.xlu0 %2303
    %2305 = vrot.lane.b32.xlu0 %v1614, 2
    %v2306 = vpop.permute.xlu0 %2305
    %2307 = vrot.lane.b32.xlu0 %v1617, 2
    %v2308 = vpop.permute.xlu0 %2307
    %2309 = vrot.lane.b32.xlu0 %v1619, 2
    %v2310 = vpop.permute.xlu0 %2309
    %v2311 = vld [vmem:[%s2 + $0x4b] sm:$0x1]
    %2312 = vset.pattern.permute.xlu0 19
    %2313 = vperm.xlu0 %2312, %v1629
    %v2314 = vpop.permute.xlu0 %2313
    %2316 = vset.pattern.permute.xlu0 19
    %2317 = vperm.xlu0 %2316, %v1630
    %v2318 = vpop.permute.xlu0 %2317
    %2320 = vset.pattern.permute.xlu0 19
    %2321 = vperm.xlu0 %2320, %v1631
    %v2322 = vpop.permute.xlu0 %2321
    %2324 = vset.pattern.permute.xlu0 19
    %2325 = vperm.xlu0 %2324, %v1632
    %v2326 = vpop.permute.xlu0 %2325
    %v2328 = vmul.f32 %v2304, %v2314
    %v2329 = vmul.f32 %v2306, %v2318
    %v2330 = vmul.f32 %v2308, %v2322
    %v2331 = vmul.f32 %v2310, %v2326
    %v2332 = vperm.slane %v2311, 0
    %v2333 = vmul.f32 %v2328, %v2332
    %v2334 = vmul.f32 %v2329, %v2332
    %v2335 = vmul.f32 %v2330, %v2332
    %v2336 = vmul.f32 %v2331, %v2332
    %v2337 = vadd.f32 %v2299, %v2333
    %v2338 = vadd.f32 %v2300, %v2334
    %v2339 = vadd.f32 %v2301, %v2335
    %v2340 = vadd.f32 %v2302, %v2336
    %2341 = vrot.lane.b32.xlu0 %v1612, 1
    %v2342 = vpop.permute.xlu0 %2341
    %2343 = vrot.lane.b32.xlu0 %v1614, 1
    %v2344 = vpop.permute.xlu0 %2343
    %2345 = vrot.lane.b32.xlu0 %v1617, 1
    %v2346 = vpop.permute.xlu0 %2345
    %2347 = vrot.lane.b32.xlu0 %v1619, 1
    %v2348 = vpop.permute.xlu0 %2347
    %v2349 = vld [vmem:[%s2 + $0x4c] sm:$0x1]
    %2350 = vset.pattern.permute.xlu0 20
    %2351 = vperm.xlu0 %2350, %v1629
    %v2352 = vpop.permute.xlu0 %2351
    %2354 = vset.pattern.permute.xlu0 20
    %2355 = vperm.xlu0 %2354, %v1630
    %v2356 = vpop.permute.xlu0 %2355
    %2358 = vset.pattern.permute.xlu0 20
    %2359 = vperm.xlu0 %2358, %v1631
    %v2360 = vpop.permute.xlu0 %2359
    %2362 = vset.pattern.permute.xlu0 20
    %2363 = vperm.xlu0 %2362, %v1632
    %v2364 = vpop.permute.xlu0 %2363
    %v2366 = vmul.f32 %v2342, %v2352
    %v2367 = vmul.f32 %v2344, %v2356
    %v2368 = vmul.f32 %v2346, %v2360
    %v2369 = vmul.f32 %v2348, %v2364
    %v2370 = vperm.slane %v2349, 0
    %v2371 = vmul.f32 %v2366, %v2370
    %v2372 = vmul.f32 %v2367, %v2370
    %v2373 = vmul.f32 %v2368, %v2370
    %v2374 = vmul.f32 %v2369, %v2370
    %v2375 = vadd.f32 %v2337, %v2371
    %v2376 = vadd.f32 %v2338, %v2372
    %v2377 = vadd.f32 %v2339, %v2373
    %v2378 = vadd.f32 %v2340, %v2374
    %v2379 = vld [vmem:[%s2 + $0x4d] sm:$0x1]
    %2380 = vset.pattern.permute.xlu0 21
    %2381 = vperm.xlu0 %2380, %v1629
    %v2382 = vpop.permute.xlu0 %2381
    %2384 = vset.pattern.permute.xlu0 21
    %2385 = vperm.xlu0 %2384, %v1630
    %v2386 = vpop.permute.xlu0 %2385
    %2388 = vset.pattern.permute.xlu0 21
    %2389 = vperm.xlu0 %2388, %v1631
    %v2390 = vpop.permute.xlu0 %2389
    %2392 = vset.pattern.permute.xlu0 21
    %2393 = vperm.xlu0 %2392, %v1632
    %v2394 = vpop.permute.xlu0 %2393
    %v2396 = vmul.f32 %v2266, %v2382
    %v2397 = vmul.f32 %v2268, %v2386
    %v2398 = vmul.f32 %v2270, %v2390
    %v2399 = vmul.f32 %v2272, %v2394
    %v2400 = vperm.slane %v2379, 0
    %v2401 = vmul.f32 %v2396, %v2400
    %v2402 = vmul.f32 %v2397, %v2400
    %v2403 = vmul.f32 %v2398, %v2400
    %v2404 = vmul.f32 %v2399, %v2400
    %v2405 = vadd.f32 %v2375, %v2401
    %v2406 = vadd.f32 %v2376, %v2402
    %v2407 = vadd.f32 %v2377, %v2403
    %v2408 = vadd.f32 %v2378, %v2404
    %v2409 = vld [vmem:[%s2 + $0x4e] sm:$0x1]
    %2410 = vset.pattern.permute.xlu0 22
    %2411 = vperm.xlu0 %2410, %v1629
    %v2412 = vpop.permute.xlu0 %2411
    %2414 = vset.pattern.permute.xlu0 22
    %2415 = vperm.xlu0 %2414, %v1630
    %v2416 = vpop.permute.xlu0 %2415
    %2418 = vset.pattern.permute.xlu0 22
    %2419 = vperm.xlu0 %2418, %v1631
    %v2420 = vpop.permute.xlu0 %2419
    %2422 = vset.pattern.permute.xlu0 22
    %2423 = vperm.xlu0 %2422, %v1632
    %v2424 = vpop.permute.xlu0 %2423
    %v2426 = vmul.f32 %v2304, %v2412
    %v2427 = vmul.f32 %v2306, %v2416
    %v2428 = vmul.f32 %v2308, %v2420
    %v2429 = vmul.f32 %v2310, %v2424
    %v2430 = vperm.slane %v2409, 0
    %v2431 = vmul.f32 %v2426, %v2430
    %v2432 = vmul.f32 %v2427, %v2430
    %v2433 = vmul.f32 %v2428, %v2430
    %v2434 = vmul.f32 %v2429, %v2430
    %v2435 = vadd.f32 %v2405, %v2431
    %v2436 = vadd.f32 %v2406, %v2432
    %v2437 = vadd.f32 %v2407, %v2433
    %v2438 = vadd.f32 %v2408, %v2434
    %v2439 = vld [vmem:[%s2 + $0x4f] sm:$0x1]
    %2440 = vset.pattern.permute.xlu0 23
    %2441 = vperm.xlu0 %2440, %v1629
    %v2442 = vpop.permute.xlu0 %2441
    %2444 = vset.pattern.permute.xlu0 23
    %2445 = vperm.xlu0 %2444, %v1630
    %v2446 = vpop.permute.xlu0 %2445
    %2448 = vset.pattern.permute.xlu0 23
    %2449 = vperm.xlu0 %2448, %v1631
    %v2450 = vpop.permute.xlu0 %2449
    %2452 = vset.pattern.permute.xlu0 23
    %2453 = vperm.xlu0 %2452, %v1632
    %v2454 = vpop.permute.xlu0 %2453
    %v2456 = vmul.f32 %v2342, %v2442
    %v2457 = vmul.f32 %v2344, %v2446
    %v2458 = vmul.f32 %v2346, %v2450
    %v2459 = vmul.f32 %v2348, %v2454
    %v2460 = vperm.slane %v2439, 0
    %v2461 = vmul.f32 %v2456, %v2460
    %v2462 = vmul.f32 %v2457, %v2460
    %v2463 = vmul.f32 %v2458, %v2460
    %v2464 = vmul.f32 %v2459, %v2460
    %v2465 = vadd.f32 %v2435, %v2461
    %v2466 = vadd.f32 %v2436, %v2462
    %v2467 = vadd.f32 %v2437, %v2463
    %v2468 = vadd.f32 %v2438, %v2464
    %v2469 = vld [vmem:[%s2 + $0x50] sm:$0x1]
    %2470 = vset.pattern.permute.xlu0 24
    %2471 = vperm.xlu0 %2470, %v1629
    %v2472 = vpop.permute.xlu0 %2471
    %2474 = vset.pattern.permute.xlu0 24
    %2475 = vperm.xlu0 %2474, %v1630
    %v2476 = vpop.permute.xlu0 %2475
    %2478 = vset.pattern.permute.xlu0 24
    %2479 = vperm.xlu0 %2478, %v1631
    %v2480 = vpop.permute.xlu0 %2479
    %2482 = vset.pattern.permute.xlu0 24
    %2483 = vperm.xlu0 %2482, %v1632
    %v2484 = vpop.permute.xlu0 %2483
    %v2486 = vmul.f32 %v1612, %v2472
    %v2487 = vmul.f32 %v1614, %v2476
    %v2488 = vmul.f32 %v1617, %v2480
    %v2489 = vmul.f32 %v1619, %v2484
    %v2490 = vperm.slane %v2469, 0
    %v2491 = vmul.f32 %v2486, %v2490
    %v2492 = vmul.f32 %v2487, %v2490
    %v2493 = vmul.f32 %v2488, %v2490
    %v2494 = vmul.f32 %v2489, %v2490
    %v2495 = vadd.f32 %v2465, %v2491
    %v2496 = vadd.f32 %v2466, %v2492
    %v2497 = vadd.f32 %v2467, %v2493
    %v2498 = vadd.f32 %v2468, %v2494
    %2499 = vrot.lane.b32.xlu0 %v1612, 127
    %v2500 = vpop.permute.xlu0 %2499
    %2501 = vrot.lane.b32.xlu0 %v1614, 127
    %v2502 = vpop.permute.xlu0 %2501
    %2503 = vrot.lane.b32.xlu0 %v1617, 127
    %v2504 = vpop.permute.xlu0 %2503
    %2505 = vrot.lane.b32.xlu0 %v1619, 127
    %v2506 = vpop.permute.xlu0 %2505
    %v2507 = vld [vmem:[%s2 + $0x51] sm:$0x1]
    %2508 = vset.pattern.permute.xlu0 25
    %2509 = vperm.xlu0 %2508, %v1629
    %v2510 = vpop.permute.xlu0 %2509
    %2512 = vset.pattern.permute.xlu0 25
    %2513 = vperm.xlu0 %2512, %v1630
    %v2514 = vpop.permute.xlu0 %2513
    %2516 = vset.pattern.permute.xlu0 25
    %2517 = vperm.xlu0 %2516, %v1631
    %v2518 = vpop.permute.xlu0 %2517
    %2520 = vset.pattern.permute.xlu0 25
    %2521 = vperm.xlu0 %2520, %v1632
    %v2522 = vpop.permute.xlu0 %2521
    %v2524 = vmul.f32 %v2500, %v2510
    %v2525 = vmul.f32 %v2502, %v2514
    %v2526 = vmul.f32 %v2504, %v2518
    %v2527 = vmul.f32 %v2506, %v2522
    %v2528 = vperm.slane %v2507, 0
    %v2529 = vmul.f32 %v2524, %v2528
    %v2530 = vmul.f32 %v2525, %v2528
    %v2531 = vmul.f32 %v2526, %v2528
    %v2532 = vmul.f32 %v2527, %v2528
    %v2533 = vadd.f32 %v2495, %v2529
    %v2534 = vadd.f32 %v2496, %v2530
    %v2535 = vadd.f32 %v2497, %v2531
    %v2536 = vadd.f32 %v2498, %v2532
    %2537 = vrot.lane.b32.xlu0 %v1612, 126
    %v2538 = vpop.permute.xlu0 %2537
    %2539 = vrot.lane.b32.xlu0 %v1614, 126
    %v2540 = vpop.permute.xlu0 %2539
    %2541 = vrot.lane.b32.xlu0 %v1617, 126
    %v2542 = vpop.permute.xlu0 %2541
    %2543 = vrot.lane.b32.xlu0 %v1619, 126
    %v2544 = vpop.permute.xlu0 %2543
    %v2545 = vld [vmem:[%s2 + $0x52] sm:$0x1]
    %2546 = vset.pattern.permute.xlu0 26
    %2547 = vperm.xlu0 %2546, %v1629
    %v2548 = vpop.permute.xlu0 %2547
    %2550 = vset.pattern.permute.xlu0 26
    %2551 = vperm.xlu0 %2550, %v1630
    %v2552 = vpop.permute.xlu0 %2551
    %2554 = vset.pattern.permute.xlu0 26
    %2555 = vperm.xlu0 %2554, %v1631
    %v2556 = vpop.permute.xlu0 %2555
    %2558 = vset.pattern.permute.xlu0 26
    %2559 = vperm.xlu0 %2558, %v1632
    %v2560 = vpop.permute.xlu0 %2559
    %v2562 = vmul.f32 %v2538, %v2548
    %v2563 = vmul.f32 %v2540, %v2552
    %v2564 = vmul.f32 %v2542, %v2556
    %v2565 = vmul.f32 %v2544, %v2560
    %v2566 = vperm.slane %v2545, 0
    %v2567 = vmul.f32 %v2562, %v2566
    %v2568 = vmul.f32 %v2563, %v2566
    %v2569 = vmul.f32 %v2564, %v2566
    %v2570 = vmul.f32 %v2565, %v2566
    %v2571 = vadd.f32 %v2533, %v2567
    %v2572 = vadd.f32 %v2534, %v2568
    %v2573 = vadd.f32 %v2535, %v2569
    %v2574 = vadd.f32 %v2536, %v2570
    %2575 = vrot.lane.b32.xlu0 %v1612, 125
    %v2576 = vpop.permute.xlu0 %2575
    %2577 = vrot.lane.b32.xlu0 %v1614, 125
    %v2578 = vpop.permute.xlu0 %2577
    %2579 = vrot.lane.b32.xlu0 %v1617, 125
    %v2580 = vpop.permute.xlu0 %2579
    %2581 = vrot.lane.b32.xlu0 %v1619, 125
    %v2582 = vpop.permute.xlu0 %2581
    %v2583 = vld [vmem:[%s2 + $0x53] sm:$0x1]
    %2584 = vset.pattern.permute.xlu0 27
    %2585 = vperm.xlu0 %2584, %v1629
    %v2586 = vpop.permute.xlu0 %2585
    %2588 = vset.pattern.permute.xlu0 27
    %2589 = vperm.xlu0 %2588, %v1630
    %v2590 = vpop.permute.xlu0 %2589
    %2592 = vset.pattern.permute.xlu0 27
    %2593 = vperm.xlu0 %2592, %v1631
    %v2594 = vpop.permute.xlu0 %2593
    %2596 = vset.pattern.permute.xlu0 27
    %2597 = vperm.xlu0 %2596, %v1632
    %v2598 = vpop.permute.xlu0 %2597
    %v2600 = vmul.f32 %v2576, %v2586
    %v2601 = vmul.f32 %v2578, %v2590
    %v2602 = vmul.f32 %v2580, %v2594
    %v2603 = vmul.f32 %v2582, %v2598
    %v2604 = vperm.slane %v2583, 0
    %v2605 = vmul.f32 %v2600, %v2604
    %v2606 = vmul.f32 %v2601, %v2604
    %v2607 = vmul.f32 %v2602, %v2604
    %v2608 = vmul.f32 %v2603, %v2604
    %v2609 = vadd.f32 %v2571, %v2605
    %v2610 = vadd.f32 %v2572, %v2606
    %v2611 = vadd.f32 %v2573, %v2607
    %v2612 = vadd.f32 %v2574, %v2608
    %v2613 = vld [vmem:[%s2 + $0x54] sm:$0x1]
    %2614 = vset.pattern.permute.xlu0 28
    %2615 = vperm.xlu0 %2614, %v1629
    %v2616 = vpop.permute.xlu0 %2615
    %2618 = vset.pattern.permute.xlu0 28
    %2619 = vperm.xlu0 %2618, %v1630
    %v2620 = vpop.permute.xlu0 %2619
    %2622 = vset.pattern.permute.xlu0 28
    %2623 = vperm.xlu0 %2622, %v1631
    %v2624 = vpop.permute.xlu0 %2623
    %2626 = vset.pattern.permute.xlu0 28
    %2627 = vperm.xlu0 %2626, %v1632
    %v2628 = vpop.permute.xlu0 %2627
    %v2630 = vmul.f32 %v2500, %v2616
    %v2631 = vmul.f32 %v2502, %v2620
    %v2632 = vmul.f32 %v2504, %v2624
    %v2633 = vmul.f32 %v2506, %v2628
    %v2634 = vperm.slane %v2613, 0
    %v2635 = vmul.f32 %v2630, %v2634
    %v2636 = vmul.f32 %v2631, %v2634
    %v2637 = vmul.f32 %v2632, %v2634
    %v2638 = vmul.f32 %v2633, %v2634
    %v2639 = vadd.f32 %v2609, %v2635
    %v2640 = vadd.f32 %v2610, %v2636
    %v2641 = vadd.f32 %v2611, %v2637
    %v2642 = vadd.f32 %v2612, %v2638
    %v2643 = vld [vmem:[%s2 + $0x55] sm:$0x1]
    %2644 = vset.pattern.permute.xlu0 29
    %2645 = vperm.xlu0 %2644, %v1629
    %v2646 = vpop.permute.xlu0 %2645
    %2648 = vset.pattern.permute.xlu0 29
    %2649 = vperm.xlu0 %2648, %v1630
    %v2650 = vpop.permute.xlu0 %2649
    %2652 = vset.pattern.permute.xlu0 29
    %2653 = vperm.xlu0 %2652, %v1631
    %v2654 = vpop.permute.xlu0 %2653
    %2656 = vset.pattern.permute.xlu0 29
    %2657 = vperm.xlu0 %2656, %v1632
    %v2658 = vpop.permute.xlu0 %2657
    %v2660 = vmul.f32 %v2538, %v2646
    %v2661 = vmul.f32 %v2540, %v2650
    %v2662 = vmul.f32 %v2542, %v2654
    %v2663 = vmul.f32 %v2544, %v2658
    %v2664 = vperm.slane %v2643, 0
    %v2665 = vmul.f32 %v2660, %v2664
    %v2666 = vmul.f32 %v2661, %v2664
    %v2667 = vmul.f32 %v2662, %v2664
    %v2668 = vmul.f32 %v2663, %v2664
    %v2669 = vadd.f32 %v2639, %v2665
    %v2670 = vadd.f32 %v2640, %v2666
    %v2671 = vadd.f32 %v2641, %v2667
    %v2672 = vadd.f32 %v2642, %v2668
    %v2673 = vld [vmem:[%s2 + $0x56] sm:$0x1]
    %2674 = vset.pattern.permute.xlu0 30
    %2675 = vperm.xlu0 %2674, %v1629
    %v2676 = vpop.permute.xlu0 %2675
    %2678 = vset.pattern.permute.xlu0 30
    %2679 = vperm.xlu0 %2678, %v1630
    %v2680 = vpop.permute.xlu0 %2679
    %2682 = vset.pattern.permute.xlu0 30
    %2683 = vperm.xlu0 %2682, %v1631
    %v2684 = vpop.permute.xlu0 %2683
    %2686 = vset.pattern.permute.xlu0 30
    %2687 = vperm.xlu0 %2686, %v1632
    %v2688 = vpop.permute.xlu0 %2687
    %v2690 = vmul.f32 %v2576, %v2676
    %v2691 = vmul.f32 %v2578, %v2680
    %v2692 = vmul.f32 %v2580, %v2684
    %v2693 = vmul.f32 %v2582, %v2688
    %v2694 = vperm.slane %v2673, 0
    %v2695 = vmul.f32 %v2690, %v2694
    %v2696 = vmul.f32 %v2691, %v2694
    %v2697 = vmul.f32 %v2692, %v2694
    %v2698 = vmul.f32 %v2693, %v2694
    %v2699 = vadd.f32 %v2669, %v2695
    %v2700 = vadd.f32 %v2670, %v2696
    %v2701 = vadd.f32 %v2671, %v2697
    %v2702 = vadd.f32 %v2672, %v2698
    %2703 = vrot.lane.b32.xlu0 %v1612, 124
    %v2704 = vpop.permute.xlu0 %2703
    %2705 = vrot.lane.b32.xlu0 %v1614, 124
    %v2706 = vpop.permute.xlu0 %2705
    %2707 = vrot.lane.b32.xlu0 %v1617, 124
    %v2708 = vpop.permute.xlu0 %2707
    %2709 = vrot.lane.b32.xlu0 %v1619, 124
    %v2710 = vpop.permute.xlu0 %2709
    %v2711 = vld [vmem:[%s2 + $0x57] sm:$0x1]
    %2712 = vset.pattern.permute.xlu0 31
    %2713 = vperm.xlu0 %2712, %v1629
    %v2714 = vpop.permute.xlu0 %2713
    %2716 = vset.pattern.permute.xlu0 31
    %2717 = vperm.xlu0 %2716, %v1630
    %v2718 = vpop.permute.xlu0 %2717
    %2720 = vset.pattern.permute.xlu0 31
    %2721 = vperm.xlu0 %2720, %v1631
    %v2722 = vpop.permute.xlu0 %2721
    %2724 = vset.pattern.permute.xlu0 31
    %2725 = vperm.xlu0 %2724, %v1632
    %v2726 = vpop.permute.xlu0 %2725
    %v2728 = vmul.f32 %v2704, %v2714
    %v2729 = vmul.f32 %v2706, %v2718
    %v2730 = vmul.f32 %v2708, %v2722
    %v2731 = vmul.f32 %v2710, %v2726
    %v2732 = vperm.slane %v2711, 0
    %v2733 = vmul.f32 %v2728, %v2732
    %v2734 = vmul.f32 %v2729, %v2732
    %v2735 = vmul.f32 %v2730, %v2732
    %v2736 = vmul.f32 %v2731, %v2732
    %v2737 = vadd.f32 %v2699, %v2733
    %v2738 = vadd.f32 %v2700, %v2734
    %v2739 = vadd.f32 %v2701, %v2735
    %v2740 = vadd.f32 %v2702, %v2736
    %2741 = vrot.lane.b32.xlu0 %v1612, 123
    %v2742 = vpop.permute.xlu0 %2741
    %2743 = vrot.lane.b32.xlu0 %v1614, 123
    %v2744 = vpop.permute.xlu0 %2743
    %2745 = vrot.lane.b32.xlu0 %v1617, 123
    %v2746 = vpop.permute.xlu0 %2745
    %2747 = vrot.lane.b32.xlu0 %v1619, 123
    %v2748 = vpop.permute.xlu0 %2747
    %v2749 = vld [vmem:[%s2 + $0x58] sm:$0x1]
    %2750 = vset.pattern.permute.xlu0 32
    %2751 = vperm.xlu0 %2750, %v1629
    %v2752 = vpop.permute.xlu0 %2751
    %2754 = vset.pattern.permute.xlu0 32
    %2755 = vperm.xlu0 %2754, %v1630
    %v2756 = vpop.permute.xlu0 %2755
    %2758 = vset.pattern.permute.xlu0 32
    %2759 = vperm.xlu0 %2758, %v1631
    %v2760 = vpop.permute.xlu0 %2759
    %2762 = vset.pattern.permute.xlu0 32
    %2763 = vperm.xlu0 %2762, %v1632
    %v2764 = vpop.permute.xlu0 %2763
    %v2766 = vmul.f32 %v2742, %v2752
    %v2767 = vmul.f32 %v2744, %v2756
    %v2768 = vmul.f32 %v2746, %v2760
    %v2769 = vmul.f32 %v2748, %v2764
    %v2770 = vperm.slane %v2749, 0
    %v2771 = vmul.f32 %v2766, %v2770
    %v2772 = vmul.f32 %v2767, %v2770
    %v2773 = vmul.f32 %v2768, %v2770
    %v2774 = vmul.f32 %v2769, %v2770
    %v2775 = vadd.f32 %v2737, %v2771
    %v2776 = vadd.f32 %v2738, %v2772
    %v2777 = vadd.f32 %v2739, %v2773
    %v2778 = vadd.f32 %v2740, %v2774
    %2779 = vrot.lane.b32.xlu0 %v1612, 122
    %v2780 = vpop.permute.xlu0 %2779
    %2781 = vrot.lane.b32.xlu0 %v1614, 122
    %v2782 = vpop.permute.xlu0 %2781
    %2783 = vrot.lane.b32.xlu0 %v1617, 122
    %v2784 = vpop.permute.xlu0 %2783
    %2785 = vrot.lane.b32.xlu0 %v1619, 122
    %v2786 = vpop.permute.xlu0 %2785
    %v2787 = vld [vmem:[%s2 + $0x59] sm:$0x1]
    %2788 = vset.pattern.permute.xlu0 33
    %2789 = vperm.xlu0 %2788, %v1629
    %v2790 = vpop.permute.xlu0 %2789
    %2792 = vset.pattern.permute.xlu0 33
    %2793 = vperm.xlu0 %2792, %v1630
    %v2794 = vpop.permute.xlu0 %2793
    %2796 = vset.pattern.permute.xlu0 33
    %2797 = vperm.xlu0 %2796, %v1631
    %v2798 = vpop.permute.xlu0 %2797
    %2800 = vset.pattern.permute.xlu0 33
    %2801 = vperm.xlu0 %2800, %v1632
    %v2802 = vpop.permute.xlu0 %2801
    %v2804 = vmul.f32 %v2780, %v2790
    %v2805 = vmul.f32 %v2782, %v2794
    %v2806 = vmul.f32 %v2784, %v2798
    %v2807 = vmul.f32 %v2786, %v2802
    %v2808 = vperm.slane %v2787, 0
    %v2809 = vmul.f32 %v2804, %v2808
    %v2810 = vmul.f32 %v2805, %v2808
    %v2811 = vmul.f32 %v2806, %v2808
    %v2812 = vmul.f32 %v2807, %v2808
    %v2813 = vadd.f32 %v2775, %v2809
    %v2814 = vadd.f32 %v2776, %v2810
    %v2815 = vadd.f32 %v2777, %v2811
    %v2816 = vadd.f32 %v2778, %v2812
    %2817 = vrot.lane.b32.xlu0 %v1612, 121
    %v2818 = vpop.permute.xlu0 %2817
    %2819 = vrot.lane.b32.xlu0 %v1614, 121
    %v2820 = vpop.permute.xlu0 %2819
    %2821 = vrot.lane.b32.xlu0 %v1617, 121
    %v2822 = vpop.permute.xlu0 %2821
    %2823 = vrot.lane.b32.xlu0 %v1619, 121
    %v2824 = vpop.permute.xlu0 %2823
    %v2825 = vld [vmem:[%s2 + $0x5a] sm:$0x1]
    %2826 = vset.pattern.permute.xlu0 34
    %2827 = vperm.xlu0 %2826, %v1629
    %v2828 = vpop.permute.xlu0 %2827
    %2830 = vset.pattern.permute.xlu0 34
    %2831 = vperm.xlu0 %2830, %v1630
    %v2832 = vpop.permute.xlu0 %2831
    %2834 = vset.pattern.permute.xlu0 34
    %2835 = vperm.xlu0 %2834, %v1631
    %v2836 = vpop.permute.xlu0 %2835
    %2838 = vset.pattern.permute.xlu0 34
    %2839 = vperm.xlu0 %2838, %v1632
    %v2840 = vpop.permute.xlu0 %2839
    %v2842 = vmul.f32 %v2818, %v2828
    %v2843 = vmul.f32 %v2820, %v2832
    %v2844 = vmul.f32 %v2822, %v2836
    %v2845 = vmul.f32 %v2824, %v2840
    %v2846 = vperm.slane %v2825, 0
    %v2847 = vmul.f32 %v2842, %v2846
    %v2848 = vmul.f32 %v2843, %v2846
    %v2849 = vmul.f32 %v2844, %v2846
    %v2850 = vmul.f32 %v2845, %v2846
    %v2851 = vadd.f32 %v2813, %v2847
    %v2852 = vadd.f32 %v2814, %v2848
    %v2853 = vadd.f32 %v2815, %v2849
    %v2854 = vadd.f32 %v2816, %v2850
    %v2855 = vld [vmem:[%s2 + $0x5b] sm:$0x1]
    %2856 = vset.pattern.permute.xlu0 35
    %2857 = vperm.xlu0 %2856, %v1629
    %v2858 = vpop.permute.xlu0 %2857
    %2860 = vset.pattern.permute.xlu0 35
    %2861 = vperm.xlu0 %2860, %v1630
    %v2862 = vpop.permute.xlu0 %2861
    %2864 = vset.pattern.permute.xlu0 35
    %2865 = vperm.xlu0 %2864, %v1631
    %v2866 = vpop.permute.xlu0 %2865
    %2868 = vset.pattern.permute.xlu0 35
    %2869 = vperm.xlu0 %2868, %v1632
    %v2870 = vpop.permute.xlu0 %2869
    %v2872 = vmul.f32 %v2742, %v2858
    %v2873 = vmul.f32 %v2744, %v2862
    %v2874 = vmul.f32 %v2746, %v2866
    %v2875 = vmul.f32 %v2748, %v2870
    %v2876 = vperm.slane %v2855, 0
    %v2877 = vmul.f32 %v2872, %v2876
    %v2878 = vmul.f32 %v2873, %v2876
    %v2879 = vmul.f32 %v2874, %v2876
    %v2880 = vmul.f32 %v2875, %v2876
    %v2881 = vadd.f32 %v2851, %v2877
    %v2882 = vadd.f32 %v2852, %v2878
    %v2883 = vadd.f32 %v2853, %v2879
    %v2884 = vadd.f32 %v2854, %v2880
    %v2885 = vld [vmem:[%s2 + $0x5c] sm:$0x1]
    %2886 = vset.pattern.permute.xlu0 36
    %2887 = vperm.xlu0 %2886, %v1629
    %v2888 = vpop.permute.xlu0 %2887
    %2890 = vset.pattern.permute.xlu0 36
    %2891 = vperm.xlu0 %2890, %v1630
    %v2892 = vpop.permute.xlu0 %2891
    %2894 = vset.pattern.permute.xlu0 36
    %2895 = vperm.xlu0 %2894, %v1631
    %v2896 = vpop.permute.xlu0 %2895
    %2898 = vset.pattern.permute.xlu0 36
    %2899 = vperm.xlu0 %2898, %v1632
    %v2900 = vpop.permute.xlu0 %2899
    %v2902 = vmul.f32 %v2780, %v2888
    %v2903 = vmul.f32 %v2782, %v2892
    %v2904 = vmul.f32 %v2784, %v2896
    %v2905 = vmul.f32 %v2786, %v2900
    %v2906 = vperm.slane %v2885, 0
    %v2907 = vmul.f32 %v2902, %v2906
    %v2908 = vmul.f32 %v2903, %v2906
    %v2909 = vmul.f32 %v2904, %v2906
    %v2910 = vmul.f32 %v2905, %v2906
    %v2911 = vadd.f32 %v2881, %v2907
    %v2912 = vadd.f32 %v2882, %v2908
    %v2913 = vadd.f32 %v2883, %v2909
    %v2914 = vadd.f32 %v2884, %v2910
    %v2915 = vld [vmem:[%s2 + $0x5d] sm:$0x1]
    %2916 = vset.pattern.permute.xlu0 37
    %2917 = vperm.xlu0 %2916, %v1629
    %v2918 = vpop.permute.xlu0 %2917
    %2920 = vset.pattern.permute.xlu0 37
    %2921 = vperm.xlu0 %2920, %v1630
    %v2922 = vpop.permute.xlu0 %2921
    %2924 = vset.pattern.permute.xlu0 37
    %2925 = vperm.xlu0 %2924, %v1631
    %v2926 = vpop.permute.xlu0 %2925
    %2928 = vset.pattern.permute.xlu0 37
    %2929 = vperm.xlu0 %2928, %v1632
    %v2930 = vpop.permute.xlu0 %2929
    %v2932 = vmul.f32 %v2818, %v2918
    %v2933 = vmul.f32 %v2820, %v2922
    %v2934 = vmul.f32 %v2822, %v2926
    %v2935 = vmul.f32 %v2824, %v2930
    %v2936 = vperm.slane %v2915, 0
    %v2937 = vmul.f32 %v2932, %v2936
    %v2938 = vmul.f32 %v2933, %v2936
    %v2939 = vmul.f32 %v2934, %v2936
    %v2940 = vmul.f32 %v2935, %v2936
    %v2941 = vadd.f32 %v2911, %v2937
    %v2942 = vadd.f32 %v2912, %v2938
    %v2943 = vadd.f32 %v2913, %v2939
    %v2944 = vadd.f32 %v2914, %v2940
    %2945 = vrot.lane.b32.xlu0 %v1612, 120
    %v2946 = vpop.permute.xlu0 %2945
    %2947 = vrot.lane.b32.xlu0 %v1614, 120
    %v2948 = vpop.permute.xlu0 %2947
    %2949 = vrot.lane.b32.xlu0 %v1617, 120
    %v2950 = vpop.permute.xlu0 %2949
    %2951 = vrot.lane.b32.xlu0 %v1619, 120
    %v2952 = vpop.permute.xlu0 %2951
    %v2953 = vld [vmem:[%s2 + $0x5e] sm:$0x1]
    %2954 = vset.pattern.permute.xlu0 38
    %2955 = vperm.xlu0 %2954, %v1629
    %v2956 = vpop.permute.xlu0 %2955
    %2958 = vset.pattern.permute.xlu0 38
    %2959 = vperm.xlu0 %2958, %v1630
    %v2960 = vpop.permute.xlu0 %2959
    %2962 = vset.pattern.permute.xlu0 38
    %2963 = vperm.xlu0 %2962, %v1631
    %v2964 = vpop.permute.xlu0 %2963
    %2966 = vset.pattern.permute.xlu0 38
    %2967 = vperm.xlu0 %2966, %v1632
    %v2968 = vpop.permute.xlu0 %2967
    %v2970 = vmul.f32 %v2946, %v2956
    %v2971 = vmul.f32 %v2948, %v2960
    %v2972 = vmul.f32 %v2950, %v2964
    %v2973 = vmul.f32 %v2952, %v2968
    %v2974 = vperm.slane %v2953, 0
    %v2975 = vmul.f32 %v2970, %v2974
    %v2976 = vmul.f32 %v2971, %v2974
    %v2977 = vmul.f32 %v2972, %v2974
    %v2978 = vmul.f32 %v2973, %v2974
    %v2979 = vadd.f32 %v2941, %v2975
    %v2980 = vadd.f32 %v2942, %v2976
    %v2981 = vadd.f32 %v2943, %v2977
    %v2982 = vadd.f32 %v2944, %v2978
    %2983 = vrot.lane.b32.xlu0 %v1612, 119
    %v2984 = vpop.permute.xlu0 %2983
    %2985 = vrot.lane.b32.xlu0 %v1614, 119
    %v2986 = vpop.permute.xlu0 %2985
    %2987 = vrot.lane.b32.xlu0 %v1617, 119
    %v2988 = vpop.permute.xlu0 %2987
    %2989 = vrot.lane.b32.xlu0 %v1619, 119
    %v2990 = vpop.permute.xlu0 %2989
    %v2991 = vld [vmem:[%s2 + $0x5f] sm:$0x1]
    %2992 = vset.pattern.permute.xlu0 39
    %2993 = vperm.xlu0 %2992, %v1629
    %v2994 = vpop.permute.xlu0 %2993
    %2996 = vset.pattern.permute.xlu0 39
    %2997 = vperm.xlu0 %2996, %v1630
    %v2998 = vpop.permute.xlu0 %2997
    %3000 = vset.pattern.permute.xlu0 39
    %3001 = vperm.xlu0 %3000, %v1631
    %v3002 = vpop.permute.xlu0 %3001
    %3004 = vset.pattern.permute.xlu0 39
    %3005 = vperm.xlu0 %3004, %v1632
    %v3006 = vpop.permute.xlu0 %3005
    %v3008 = vmul.f32 %v2984, %v2994
    %v3009 = vmul.f32 %v2986, %v2998
    %v3010 = vmul.f32 %v2988, %v3002
    %v3011 = vmul.f32 %v2990, %v3006
    %v3012 = vperm.slane %v2991, 0
    %v3013 = vmul.f32 %v3008, %v3012
    %v3014 = vmul.f32 %v3009, %v3012
    %v3015 = vmul.f32 %v3010, %v3012
    %v3016 = vmul.f32 %v3011, %v3012
    %v3017 = vadd.f32 %v2979, %v3013
    %v3018 = vadd.f32 %v2980, %v3014
    %v3019 = vadd.f32 %v2981, %v3015
    %v3020 = vadd.f32 %v2982, %v3016
    %3021 = vrot.lane.b32.xlu0 %v1612, 118
    %v3022 = vpop.permute.xlu0 %3021
    %3023 = vrot.lane.b32.xlu0 %v1614, 118
    %v3024 = vpop.permute.xlu0 %3023
    %3025 = vrot.lane.b32.xlu0 %v1617, 118
    %v3026 = vpop.permute.xlu0 %3025
    %3027 = vrot.lane.b32.xlu0 %v1619, 118
    %v3028 = vpop.permute.xlu0 %3027
    %v3029 = vld [vmem:[%s2 + $0x60] sm:$0x1]
    %3030 = vset.pattern.permute.xlu0 40
    %3031 = vperm.xlu0 %3030, %v1629
    %v3032 = vpop.permute.xlu0 %3031
    %3034 = vset.pattern.permute.xlu0 40
    %3035 = vperm.xlu0 %3034, %v1630
    %v3036 = vpop.permute.xlu0 %3035
    %3038 = vset.pattern.permute.xlu0 40
    %3039 = vperm.xlu0 %3038, %v1631
    %v3040 = vpop.permute.xlu0 %3039
    %3042 = vset.pattern.permute.xlu0 40
    %3043 = vperm.xlu0 %3042, %v1632
    %v3044 = vpop.permute.xlu0 %3043
    %v3046 = vmul.f32 %v3022, %v3032
    %v3047 = vmul.f32 %v3024, %v3036
    %v3048 = vmul.f32 %v3026, %v3040
    %v3049 = vmul.f32 %v3028, %v3044
    %v3050 = vperm.slane %v3029, 0
    %v3051 = vmul.f32 %v3046, %v3050
    %v3052 = vmul.f32 %v3047, %v3050
    %v3053 = vmul.f32 %v3048, %v3050
    %v3054 = vmul.f32 %v3049, %v3050
    %v3055 = vadd.f32 %v3017, %v3051
    %v3056 = vadd.f32 %v3018, %v3052
    %v3057 = vadd.f32 %v3019, %v3053
    %v3058 = vadd.f32 %v3020, %v3054
    %3059 = vrot.lane.b32.xlu0 %v1612, 117
    %v3060 = vpop.permute.xlu0 %3059
    %3061 = vrot.lane.b32.xlu0 %v1614, 117
    %v3062 = vpop.permute.xlu0 %3061
    %3063 = vrot.lane.b32.xlu0 %v1617, 117
    %v3064 = vpop.permute.xlu0 %3063
    %3065 = vrot.lane.b32.xlu0 %v1619, 117
    %v3066 = vpop.permute.xlu0 %3065
    %v3067 = vld [vmem:[%s2 + $0x61] sm:$0x1]
    %3068 = vset.pattern.permute.xlu0 41
    %3069 = vperm.xlu0 %3068, %v1629
    %v3070 = vpop.permute.xlu0 %3069
    %3072 = vset.pattern.permute.xlu0 41
    %3073 = vperm.xlu0 %3072, %v1630
    %v3074 = vpop.permute.xlu0 %3073
    %3076 = vset.pattern.permute.xlu0 41
    %3077 = vperm.xlu0 %3076, %v1631
    %v3078 = vpop.permute.xlu0 %3077
    %3080 = vset.pattern.permute.xlu0 41
    %3081 = vperm.xlu0 %3080, %v1632
    %v3082 = vpop.permute.xlu0 %3081
    %v3084 = vmul.f32 %v3060, %v3070
    %v3085 = vmul.f32 %v3062, %v3074
    %v3086 = vmul.f32 %v3064, %v3078
    %v3087 = vmul.f32 %v3066, %v3082
    %v3088 = vperm.slane %v3067, 0
    %v3089 = vmul.f32 %v3084, %v3088
    %v3090 = vmul.f32 %v3085, %v3088
    %v3091 = vmul.f32 %v3086, %v3088
    %v3092 = vmul.f32 %v3087, %v3088
    %v3093 = vadd.f32 %v3055, %v3089
    %v3094 = vadd.f32 %v3056, %v3090
    %v3095 = vadd.f32 %v3057, %v3091
    %v3096 = vadd.f32 %v3058, %v3092
    %v3097 = vld [vmem:[%s2 + $0x62] sm:$0x1]
    %3098 = vset.pattern.permute.xlu0 42
    %3099 = vperm.xlu0 %3098, %v1629
    %v3100 = vpop.permute.xlu0 %3099
    %3102 = vset.pattern.permute.xlu0 42
    %3103 = vperm.xlu0 %3102, %v1630
    %v3104 = vpop.permute.xlu0 %3103
    %3106 = vset.pattern.permute.xlu0 42
    %3107 = vperm.xlu0 %3106, %v1631
    %v3108 = vpop.permute.xlu0 %3107
    %3110 = vset.pattern.permute.xlu0 42
    %3111 = vperm.xlu0 %3110, %v1632
    %v3112 = vpop.permute.xlu0 %3111
    %v3114 = vmul.f32 %v2984, %v3100
    %v3115 = vmul.f32 %v2986, %v3104
    %v3116 = vmul.f32 %v2988, %v3108
    %v3117 = vmul.f32 %v2990, %v3112
    %v3118 = vperm.slane %v3097, 0
    %v3119 = vmul.f32 %v3114, %v3118
    %v3120 = vmul.f32 %v3115, %v3118
    %v3121 = vmul.f32 %v3116, %v3118
    %v3122 = vmul.f32 %v3117, %v3118
    %v3123 = vadd.f32 %v3093, %v3119
    %v3124 = vadd.f32 %v3094, %v3120
    %v3125 = vadd.f32 %v3095, %v3121
    %v3126 = vadd.f32 %v3096, %v3122
    %v3127 = vld [vmem:[%s2 + $0x63] sm:$0x1]
    %3128 = vset.pattern.permute.xlu0 43
    %3129 = vperm.xlu0 %3128, %v1629
    %v3130 = vpop.permute.xlu0 %3129
    %3132 = vset.pattern.permute.xlu0 43
    %3133 = vperm.xlu0 %3132, %v1630
    %v3134 = vpop.permute.xlu0 %3133
    %3136 = vset.pattern.permute.xlu0 43
    %3137 = vperm.xlu0 %3136, %v1631
    %v3138 = vpop.permute.xlu0 %3137
    %3140 = vset.pattern.permute.xlu0 43
    %3141 = vperm.xlu0 %3140, %v1632
    %v3142 = vpop.permute.xlu0 %3141
    %v3144 = vmul.f32 %v3022, %v3130
    %v3145 = vmul.f32 %v3024, %v3134
    %v3146 = vmul.f32 %v3026, %v3138
    %v3147 = vmul.f32 %v3028, %v3142
    %v3148 = vperm.slane %v3127, 0
    %v3149 = vmul.f32 %v3144, %v3148
    %v3150 = vmul.f32 %v3145, %v3148
    %v3151 = vmul.f32 %v3146, %v3148
    %v3152 = vmul.f32 %v3147, %v3148
    %v3153 = vadd.f32 %v3123, %v3149
    %v3154 = vadd.f32 %v3124, %v3150
    %v3155 = vadd.f32 %v3125, %v3151
    %v3156 = vadd.f32 %v3126, %v3152
    %v3157 = vld [vmem:[%s2 + $0x64] sm:$0x1]
    %3158 = vset.pattern.permute.xlu0 44
    %3159 = vperm.xlu0 %3158, %v1629
    %v3160 = vpop.permute.xlu0 %3159
    %3162 = vset.pattern.permute.xlu0 44
    %3163 = vperm.xlu0 %3162, %v1630
    %v3164 = vpop.permute.xlu0 %3163
    %3166 = vset.pattern.permute.xlu0 44
    %3167 = vperm.xlu0 %3166, %v1631
    %v3168 = vpop.permute.xlu0 %3167
    %3170 = vset.pattern.permute.xlu0 44
    %3171 = vperm.xlu0 %3170, %v1632
    %v3172 = vpop.permute.xlu0 %3171
    %v3174 = vmul.f32 %v3060, %v3160
    %v3175 = vmul.f32 %v3062, %v3164
    %v3176 = vmul.f32 %v3064, %v3168
    %v3177 = vmul.f32 %v3066, %v3172
    %v3178 = vperm.slane %v3157, 0
    %v3179 = vmul.f32 %v3174, %v3178
    %v3180 = vmul.f32 %v3175, %v3178
    %v3181 = vmul.f32 %v3176, %v3178
    %v3182 = vmul.f32 %v3177, %v3178
    %v3183 = vadd.f32 %v3153, %v3179
    %v3184 = vadd.f32 %v3154, %v3180
    %v3185 = vadd.f32 %v3155, %v3181
    %v3186 = vadd.f32 %v3156, %v3182
    %3187 = vrot.lane.b32.xlu0 %v1612, 116
    %v3188 = vpop.permute.xlu0 %3187
    %3189 = vrot.lane.b32.xlu0 %v1614, 116
    %v3190 = vpop.permute.xlu0 %3189
    %3191 = vrot.lane.b32.xlu0 %v1617, 116
    %v3192 = vpop.permute.xlu0 %3191
    %3193 = vrot.lane.b32.xlu0 %v1619, 116
    %v3194 = vpop.permute.xlu0 %3193
    %v3195 = vld [vmem:[%s2 + $0x65] sm:$0x1]
    %3196 = vset.pattern.permute.xlu0 45
    %3197 = vperm.xlu0 %3196, %v1629
    %v3198 = vpop.permute.xlu0 %3197
    %3200 = vset.pattern.permute.xlu0 45
    %3201 = vperm.xlu0 %3200, %v1630
    %v3202 = vpop.permute.xlu0 %3201
    %3204 = vset.pattern.permute.xlu0 45
    %3205 = vperm.xlu0 %3204, %v1631
    %v3206 = vpop.permute.xlu0 %3205
    %3208 = vset.pattern.permute.xlu0 45
    %3209 = vperm.xlu0 %3208, %v1632
    %v3210 = vpop.permute.xlu0 %3209
    %v3212 = vmul.f32 %v3188, %v3198
    %v3213 = vmul.f32 %v3190, %v3202
    %v3214 = vmul.f32 %v3192, %v3206
    %v3215 = vmul.f32 %v3194, %v3210
    %v3216 = vperm.slane %v3195, 0
    %v3217 = vmul.f32 %v3212, %v3216
    %v3218 = vmul.f32 %v3213, %v3216
    %v3219 = vmul.f32 %v3214, %v3216
    %v3220 = vmul.f32 %v3215, %v3216
    %v3221 = vadd.f32 %v3183, %v3217
    %v3222 = vadd.f32 %v3184, %v3218
    %v3223 = vadd.f32 %v3185, %v3219
    %v3224 = vadd.f32 %v3186, %v3220
    %3225 = vrot.lane.b32.xlu0 %v1612, 115
    %v3226 = vpop.permute.xlu0 %3225
    %3227 = vrot.lane.b32.xlu0 %v1614, 115
    %v3228 = vpop.permute.xlu0 %3227
    %3229 = vrot.lane.b32.xlu0 %v1617, 115
    %v3230 = vpop.permute.xlu0 %3229
    %3231 = vrot.lane.b32.xlu0 %v1619, 115
    %v3232 = vpop.permute.xlu0 %3231
    %v3233 = vld [vmem:[%s2 + $0x66] sm:$0x1]
    %3234 = vset.pattern.permute.xlu0 46
    %3235 = vperm.xlu0 %3234, %v1629
    %v3236 = vpop.permute.xlu0 %3235
    %3238 = vset.pattern.permute.xlu0 46
    %3239 = vperm.xlu0 %3238, %v1630
    %v3240 = vpop.permute.xlu0 %3239
    %3242 = vset.pattern.permute.xlu0 46
    %3243 = vperm.xlu0 %3242, %v1631
    %v3244 = vpop.permute.xlu0 %3243
    %3246 = vset.pattern.permute.xlu0 46
    %3247 = vperm.xlu0 %3246, %v1632
    %v3248 = vpop.permute.xlu0 %3247
    %v3250 = vmul.f32 %v3226, %v3236
    %v3251 = vmul.f32 %v3228, %v3240
    %v3252 = vmul.f32 %v3230, %v3244
    %v3253 = vmul.f32 %v3232, %v3248
    %v3254 = vperm.slane %v3233, 0
    %v3255 = vmul.f32 %v3250, %v3254
    %v3256 = vmul.f32 %v3251, %v3254
    %v3257 = vmul.f32 %v3252, %v3254
    %v3258 = vmul.f32 %v3253, %v3254
    %v3259 = vadd.f32 %v3221, %v3255
    %v3260 = vadd.f32 %v3222, %v3256
    %v3261 = vadd.f32 %v3223, %v3257
    %v3262 = vadd.f32 %v3224, %v3258
    %3263 = vrot.lane.b32.xlu0 %v1612, 114
    %v3264 = vpop.permute.xlu0 %3263
    %3265 = vrot.lane.b32.xlu0 %v1614, 114
    %v3266 = vpop.permute.xlu0 %3265
    %3267 = vrot.lane.b32.xlu0 %v1617, 114
    %v3268 = vpop.permute.xlu0 %3267
    %3269 = vrot.lane.b32.xlu0 %v1619, 114
    %v3270 = vpop.permute.xlu0 %3269
    %v3271 = vld [vmem:[%s2 + $0x67] sm:$0x1]
    %3272 = vset.pattern.permute.xlu0 47
    %3273 = vperm.xlu0 %3272, %v1629
    %v3274 = vpop.permute.xlu0 %3273
    %3276 = vset.pattern.permute.xlu0 47
    %3277 = vperm.xlu0 %3276, %v1630
    %v3278 = vpop.permute.xlu0 %3277
    %3280 = vset.pattern.permute.xlu0 47
    %3281 = vperm.xlu0 %3280, %v1631
    %v3282 = vpop.permute.xlu0 %3281
    %3284 = vset.pattern.permute.xlu0 47
    %3285 = vperm.xlu0 %3284, %v1632
    %v3286 = vpop.permute.xlu0 %3285
    %v3288 = vmul.f32 %v3264, %v3274
    %v3289 = vmul.f32 %v3266, %v3278
    %v3290 = vmul.f32 %v3268, %v3282
    %v3291 = vmul.f32 %v3270, %v3286
    %v3292 = vperm.slane %v3271, 0
    %v3293 = vmul.f32 %v3288, %v3292
    %v3294 = vmul.f32 %v3289, %v3292
    %v3295 = vmul.f32 %v3290, %v3292
    %v3296 = vmul.f32 %v3291, %v3292
    %v3297 = vadd.f32 %v3259, %v3293
    %v3298 = vadd.f32 %v3260, %v3294
    %v3299 = vadd.f32 %v3261, %v3295
    %v3300 = vadd.f32 %v3262, %v3296
    %3301 = vrot.lane.b32.xlu0 %v1612, 113
    %v3302 = vpop.permute.xlu0 %3301
    %3303 = vrot.lane.b32.xlu0 %v1614, 113
    %v3304 = vpop.permute.xlu0 %3303
    %3305 = vrot.lane.b32.xlu0 %v1617, 113
    %v3306 = vpop.permute.xlu0 %3305
    %3307 = vrot.lane.b32.xlu0 %v1619, 113
    %v3308 = vpop.permute.xlu0 %3307
    %v3309 = vld [vmem:[%s2 + $0x68] sm:$0x1]
    %3310 = vset.pattern.permute.xlu0 48
    %3311 = vperm.xlu0 %3310, %v1629
    %v3312 = vpop.permute.xlu0 %3311
    %3314 = vset.pattern.permute.xlu0 48
    %3315 = vperm.xlu0 %3314, %v1630
    %v3316 = vpop.permute.xlu0 %3315
    %3318 = vset.pattern.permute.xlu0 48
    %3319 = vperm.xlu0 %3318, %v1631
    %v3320 = vpop.permute.xlu0 %3319
    %3322 = vset.pattern.permute.xlu0 48
    %3323 = vperm.xlu0 %3322, %v1632
    %v3324 = vpop.permute.xlu0 %3323
    %v3326 = vmul.f32 %v3302, %v3312
    %v3327 = vmul.f32 %v3304, %v3316
    %v3328 = vmul.f32 %v3306, %v3320
    %v3329 = vmul.f32 %v3308, %v3324
    %v3330 = vperm.slane %v3309, 0
    %v3331 = vmul.f32 %v3326, %v3330
    %v3332 = vmul.f32 %v3327, %v3330
    %v3333 = vmul.f32 %v3328, %v3330
    %v3334 = vmul.f32 %v3329, %v3330
    %v3335 = vadd.f32 %v3297, %v3331
    %v3336 = vadd.f32 %v3298, %v3332
    %v3337 = vadd.f32 %v3299, %v3333
    %v3338 = vadd.f32 %v3300, %v3334
    %3339 = vset.pattern.permute.xlu0 11
    %3340 = vperm.xlu0 %3339, %v1530
    %v3341 = vpop.permute.xlu0 %3340
    %3343 = vset.pattern.permute.xlu0 11
    %3344 = vperm.xlu0 %3343, %v1531
    %v3345 = vpop.permute.xlu0 %3344
    %3347 = vset.pattern.permute.xlu0 11
    %3348 = vperm.xlu0 %3347, %v1532
    %v3349 = vpop.permute.xlu0 %3348
    %3351 = vset.pattern.permute.xlu0 11
    %3352 = vperm.xlu0 %3351, %v1533
    %v3353 = vpop.permute.xlu0 %3352
    %v3355 = vadd.f32 %v3335, %v3341
    %v3356 = vadd.f32 %v3336, %v3345
    %v3357 = vadd.f32 %v3337, %v3349
    %v3358 = vadd.f32 %v3338, %v3353
    %v3359 = vadd.f32 %v3355, %v3356
    %v3360 = vadd.f32 %v3359, %v3357
    %v3361 = vadd.f32 %v3360, %v3358
    %v3362 = vrot.slane %v3361, 4
    %v3363 = vadd.f32 %v3361, %v3362
    %v3364 = vrot.slane %v3363, 2
    %v3365 = vadd.f32 %v3363, %v3364
    %v3366 = vrot.slane %v3365, 1
    %v3367 = vadd.f32 %v3365, %v3366
    %v3368 = vrcp.pop 32.0
    %v3369 = vmul.f32 32.0, %v3368
    %v3370 = vsub.f32 1.0, %v3369
    %v3371 = vmul.f32 %v3368, %v3370
    %v3372 = vadd.f32 %v3368, %v3371
    %vm3373 = vweird.f32 %v3368
    %v3374 = vsel %vm3373, %v3368, %v3372
    %v3375 = vmul.f32 %v3367, %v3374
    %v3376 = vsub.f32 %v3355, %v3375
    %v3377 = vsub.f32 %v3356, %v3375
    %v3378 = vsub.f32 %v3357, %v3375
    %v3379 = vsub.f32 %v3358, %v3375
    %v3380 = vmul.f32 %v3376, %v3376
    %v3381 = vmul.f32 %v3377, %v3377
    %v3382 = vmul.f32 %v3378, %v3378
    %v3383 = vmul.f32 %v3379, %v3379
    %v3384 = vadd.f32 %v3380, %v3381
    %v3385 = vadd.f32 %v3384, %v3382
    %v3386 = vadd.f32 %v3385, %v3383
    %v3387 = vrot.slane %v3386, 4
    %v3388 = vadd.f32 %v3386, %v3387
    %v3389 = vrot.slane %v3388, 2
    %v3390 = vadd.f32 %v3388, %v3389
    %v3391 = vrot.slane %v3390, 1
    %v3392 = vadd.f32 %v3390, %v3391
    %v3393 = vmul.f32 %v3392, %v3374
    %v3394 = vadd.f32 %v3393, 1e-06
    %v3395 = vrsqrt.pop %v3394
    %v3396 = vmul.f32 %v3395, %v3394
    %v3397 = vmul.f32 %v3396, %v3395
    %v3398 = vmul.f32 0.5, %v3397
    %v3399 = vsub.f32 1.5, %v3398
    %v3400 = vmul.f32 %v3395, %v3399
    %vm3401 = vweird.f32 %v3394
    %vm3402 = vweird.f32 %v3395
    %vm3403 = vmor %vm3401, %vm3402
    %v3404 = vsel %vm3403, %v3395, %v3400
    %v3405 = vmul.f32 %v3376, %v3404
    %v3406 = vmul.f32 %v3377, %v3404
    %v3407 = vmul.f32 %v3378, %v3404
    %v3408 = vmul.f32 %v3379, %v3404
    %3409 = vset.pattern.permute.xlu0 12
    %3410 = vperm.xlu0 %3409, %v1530
    %v3411 = vpop.permute.xlu0 %3410
    %3413 = vset.pattern.permute.xlu0 12
    %3414 = vperm.xlu0 %3413, %v1531
    %v3415 = vpop.permute.xlu0 %3414
    %3417 = vset.pattern.permute.xlu0 12
    %3418 = vperm.xlu0 %3417, %v1532
    %v3419 = vpop.permute.xlu0 %3418
    %3421 = vset.pattern.permute.xlu0 12
    %3422 = vperm.xlu0 %3421, %v1533
    %v3423 = vpop.permute.xlu0 %3422
    %v3425 = vmul.f32 %v3405, %v3411
    %v3426 = vmul.f32 %v3406, %v3415
    %v3427 = vmul.f32 %v3407, %v3419
    %v3428 = vmul.f32 %v3408, %v3423
    %3429 = vset.pattern.permute.xlu0 13
    %3430 = vperm.xlu0 %3429, %v1530
    %v3431 = vpop.permute.xlu0 %3430
    %3433 = vset.pattern.permute.xlu0 13
    %3434 = vperm.xlu0 %3433, %v1531
    %v3435 = vpop.permute.xlu0 %3434
    %3437 = vset.pattern.permute.xlu0 13
    %3438 = vperm.xlu0 %3437, %v1532
    %v3439 = vpop.permute.xlu0 %3438
    %3441 = vset.pattern.permute.xlu0 13
    %3442 = vperm.xlu0 %3441, %v1533
    %v3443 = vpop.permute.xlu0 %3442
    %v3445 = vadd.f32 %v3425, %v3431
    %v3446 = vadd.f32 %v3426, %v3435
    %v3447 = vadd.f32 %v3427, %v3439
    %v3448 = vadd.f32 %v3428, %v3443
    %v3449 = vld [vmem:[%s4 + $0x100] sm:$0xf]
    %v3450 = vld [vmem:[%s4 + $0x108] sm:$0xf]
    %v3451 = vld [vmem:[%s4 + $0x110] sm:$0xf]
    %v3452 = vld [vmem:[%s4 + $0x118] sm:$0xf]
    %v3453 = vld [vmem:[%s4 + $0x120] sm:$0xf]
    %v3454 = vld [vmem:[%s4 + $0x128] sm:$0xf]
    %v3455 = vld [vmem:[%s4 + $0x130] sm:$0xf]
    %v3456 = vld [vmem:[%s4 + $0x138] sm:$0xf]
    %v3457 = vld [vmem:[%s4 + $0x140] sm:$0xf]
    %v3458 = vld [vmem:[%s4 + $0x148] sm:$0xf]
    %v3459 = vld [vmem:[%s4 + $0x150] sm:$0xf]
    %v3460 = vld [vmem:[%s4 + $0x158] sm:$0xf]
    %v3461 = vld [vmem:[%s4 + $0x160] sm:$0xf]
    %v3462 = vld [vmem:[%s4 + $0x168] sm:$0xf]
    %v3463 = vld [vmem:[%s4 + $0x170] sm:$0xf]
    %v3464 = vld [vmem:[%s4 + $0x178] sm:$0xf]
    %v3465 = vpack.c.bf16 %v3446, %v3445
    %v3466 = vpack.c.bf16 %v3448, %v3447
    %v3467 = vld [vmem:[%s1] sm:$0xff]
    %v3468 = vld [vmem:[%s1 + $0x8] sm:$0xff]
    %v3469 = vld [vmem:[%s1 + $0x10] sm:$0xff]
    %v3470 = vld [vmem:[%s1 + $0x18] sm:$0xff]
    %v3471 = vld [vmem:[%s1 + $0x20] sm:$0xff]
    %v3472 = vld [vmem:[%s1 + $0x28] sm:$0xff]
    %v3473 = vld [vmem:[%s1 + $0x30] sm:$0xff]
    %v3474 = vld [vmem:[%s1 + $0x38] sm:$0xff]
    %v3475 = vld [vmem:[%s1 + $0x40] sm:$0xff]
    %v3476 = vld [vmem:[%s1 + $0x48] sm:$0xff]
    %v3477 = vld [vmem:[%s1 + $0x50] sm:$0xff]
    %v3478 = vld [vmem:[%s1 + $0x58] sm:$0xff]
    %v3479 = vld [vmem:[%s1 + $0x60] sm:$0xff]
    %v3480 = vld [vmem:[%s1 + $0x68] sm:$0xff]
    %v3481 = vld [vmem:[%s1 + $0x70] sm:$0xff]
    %v3482 = vld [vmem:[%s1 + $0x78] sm:$0xff]
    %3484 = vset.pattern.permute.xlu0 17
    %3485 = vperm.xlu0 %3484, %v3467
    %v3486 = vpop.permute.xlu0 %3485
    %3489 = vset.pattern.permute.xlu0 17
    %3490 = vperm.xlu0 %3489, %v3468
    %v3491 = vpop.permute.xlu0 %3490
    %3494 = vset.pattern.permute.xlu0 17
    %3495 = vperm.xlu0 %3494, %v3469
    %v3496 = vpop.permute.xlu0 %3495
    %3499 = vset.pattern.permute.xlu0 17
    %3500 = vperm.xlu0 %3499, %v3470
    %v3501 = vpop.permute.xlu0 %3500
    %3504 = vset.pattern.permute.xlu0 17
    %3505 = vperm.xlu0 %3504, %v3471
    %v3506 = vpop.permute.xlu0 %3505
    %3509 = vset.pattern.permute.xlu0 17
    %3510 = vperm.xlu0 %3509, %v3472
    %v3511 = vpop.permute.xlu0 %3510
    %3514 = vset.pattern.permute.xlu0 17
    %3515 = vperm.xlu0 %3514, %v3473
    %v3516 = vpop.permute.xlu0 %3515
    %3519 = vset.pattern.permute.xlu0 17
    %3520 = vperm.xlu0 %3519, %v3474
    %v3521 = vpop.permute.xlu0 %3520
    %3524 = vset.pattern.permute.xlu0 17
    %3525 = vperm.xlu0 %3524, %v3475
    %v3526 = vpop.permute.xlu0 %3525
    %3529 = vset.pattern.permute.xlu0 17
    %3530 = vperm.xlu0 %3529, %v3476
    %v3531 = vpop.permute.xlu0 %3530
    %3534 = vset.pattern.permute.xlu0 17
    %3535 = vperm.xlu0 %3534, %v3477
    %v3536 = vpop.permute.xlu0 %3535
    %3539 = vset.pattern.permute.xlu0 17
    %3540 = vperm.xlu0 %3539, %v3478
    %v3541 = vpop.permute.xlu0 %3540
    %3544 = vset.pattern.permute.xlu0 17
    %3545 = vperm.xlu0 %3544, %v3479
    %v3546 = vpop.permute.xlu0 %3545
    %3549 = vset.pattern.permute.xlu0 17
    %3550 = vperm.xlu0 %3549, %v3480
    %v3551 = vpop.permute.xlu0 %3550
    %3554 = vset.pattern.permute.xlu0 17
    %3555 = vperm.xlu0 %3554, %v3481
    %v3556 = vpop.permute.xlu0 %3555
    %3559 = vset.pattern.permute.xlu0 17
    %3560 = vperm.xlu0 %3559, %v3482
    %v3561 = vpop.permute.xlu0 %3560
    %v3579 = vunpack.c.l.b16 %v3449
    %v3580 = vunpack.c.l.b16 %v3450
    %v3581 = vunpack.c.l.b16 %v3451
    %v3582 = vunpack.c.l.b16 %v3452
    %v3583 = vunpack.c.l.b16 %v3453
    %v3584 = vunpack.c.l.b16 %v3454
    %v3585 = vunpack.c.l.b16 %v3455
    %v3586 = vunpack.c.l.b16 %v3456
    %v3587 = vunpack.c.l.b16 %v3457
    %v3588 = vunpack.c.l.b16 %v3458
    %v3589 = vunpack.c.l.b16 %v3459
    %v3590 = vunpack.c.l.b16 %v3460
    %v3591 = vunpack.c.l.b16 %v3461
    %v3592 = vunpack.c.l.b16 %v3462
    %v3593 = vunpack.c.l.b16 %v3463
    %v3594 = vunpack.c.l.b16 %v3464
    %v3595 = vpack.c.b16 %v3580, %v3579
    %v3596 = vpack.c.b16 %v3582, %v3581
    %v3597 = vpack.c.b16 %v3584, %v3583
    %v3598 = vpack.c.b16 %v3586, %v3585
    %v3599 = vpack.c.b16 %v3588, %v3587
    %v3600 = vpack.c.b16 %v3590, %v3589
    %v3601 = vpack.c.b16 %v3592, %v3591
    %v3602 = vpack.c.b16 %v3594, %v3593
    %vm3603 = vcmask 261120
    %v3605 = vsel %vm3603, %v3595, 0
    %v3608 = vsel %vm3603, %v3596, 0
    %v3611 = vsel %vm3603, %v3597, 0
    %v3614 = vsel %vm3603, %v3598, 0
    %v3617 = vsel %vm3603, %v3599, 0
    %v3620 = vsel %vm3603, %v3600, 0
    %v3623 = vsel %vm3603, %v3601, 0
    %v3626 = vsel %vm3603, %v3602, 0
    %3628 = vmatpush.bf16.msra.mxu0 0
    %3629 = vmatpush.bf16.msra.mxu0 0
    %3630 = vmatpush.bf16.msra.mxu0 0
    %3631 = vmatpush.bf16.msra.mxu0 0
    %3632 = vmatpush.bf16.msra.mxu0 0
    %3633 = vmatpush.bf16.msra.mxu0 0
    %3634 = vmatpush.bf16.msra.mxu0 %v3466
    %3635 = vmatpush.bf16.msra.mxu0 %v3465
    %3636 = vmatmul.bf16.gmra.mxu0 %v3605
    %v3637 = vpop.f32.mrf.mxu0
    %v3638 = vadd.f32 %v3486, %v3637
    %v3639 = vpop.f32.mrf.mxu0
    %v3640 = vadd.f32 %v3491, %v3639
    %3641 = vmatmul.bf16.gmra.mxu0 %v3608
    %v3642 = vpop.f32.mrf.mxu0
    %v3643 = vadd.f32 %v3496, %v3642
    %v3644 = vpop.f32.mrf.mxu0
    %v3645 = vadd.f32 %v3501, %v3644
    %3646 = vmatmul.bf16.gmra.mxu0 %v3611
    %v3647 = vpop.f32.mrf.mxu0
    %v3648 = vadd.f32 %v3506, %v3647
    %v3649 = vpop.f32.mrf.mxu0
    %v3650 = vadd.f32 %v3511, %v3649
    %3651 = vmatmul.bf16.gmra.mxu0 %v3614
    %v3652 = vpop.f32.mrf.mxu0
    %v3653 = vadd.f32 %v3516, %v3652
    %v3654 = vpop.f32.mrf.mxu0
    %v3655 = vadd.f32 %v3521, %v3654
    %3656 = vmatmul.bf16.gmra.mxu0 %v3617
    %v3657 = vpop.f32.mrf.mxu0
    %v3658 = vadd.f32 %v3526, %v3657
    %v3659 = vpop.f32.mrf.mxu0
    %v3660 = vadd.f32 %v3531, %v3659
    %3661 = vmatmul.bf16.gmra.mxu0 %v3620
    %v3662 = vpop.f32.mrf.mxu0
    %v3663 = vadd.f32 %v3536, %v3662
    %v3664 = vpop.f32.mrf.mxu0
    %v3665 = vadd.f32 %v3541, %v3664
    %3666 = vmatmul.bf16.gmra.mxu0 %v3623
    %v3667 = vpop.f32.mrf.mxu0
    %v3668 = vadd.f32 %v3546, %v3667
    %v3669 = vpop.f32.mrf.mxu0
    %v3670 = vadd.f32 %v3551, %v3669
    %3671 = vmatmul.bf16.gmra.mxu0 %v3626
    %v3672 = vpop.f32.mrf.mxu0
    %v3673 = vadd.f32 %v3556, %v3672
    %v3674 = vpop.f32.mrf.mxu0
    %v3675 = vadd.f32 %v3561, %v3674
    %3676 = vdwg.mxu0
    %v3677 = vmul.f32 %v3638, 0.5
    %v3678 = vmul.f32 %v3640, 0.5
    %v3679 = vmul.f32 %v3643, 0.5
    %v3680 = vmul.f32 %v3645, 0.5
    %v3681 = vmul.f32 %v3648, 0.5
    %v3682 = vmul.f32 %v3650, 0.5
    %v3683 = vmul.f32 %v3653, 0.5
    %v3684 = vmul.f32 %v3655, 0.5
    %v3685 = vmul.f32 %v3658, 0.5
    %v3686 = vmul.f32 %v3660, 0.5
    %v3687 = vmul.f32 %v3663, 0.5
    %v3688 = vmul.f32 %v3665, 0.5
    %v3689 = vmul.f32 %v3668, 0.5
    %v3690 = vmul.f32 %v3670, 0.5
    %v3691 = vmul.f32 %v3673, 0.5
    %v3692 = vmul.f32 %v3675, 0.5
    %v3693 = vmul.f32 %v3638, 0.044715
    %v3694 = vmul.f32 %v3640, 0.044715
    %v3695 = vmul.f32 %v3643, 0.044715
    %v3696 = vmul.f32 %v3645, 0.044715
    %v3697 = vmul.f32 %v3648, 0.044715
    %v3698 = vmul.f32 %v3650, 0.044715
    %v3699 = vmul.f32 %v3653, 0.044715
    %v3700 = vmul.f32 %v3655, 0.044715
    %v3701 = vmul.f32 %v3658, 0.044715
    %v3702 = vmul.f32 %v3660, 0.044715
    %v3703 = vmul.f32 %v3663, 0.044715
    %v3704 = vmul.f32 %v3665, 0.044715
    %v3705 = vmul.f32 %v3668, 0.044715
    %v3706 = vmul.f32 %v3670, 0.044715
    %v3707 = vmul.f32 %v3673, 0.044715
    %v3708 = vmul.f32 %v3675, 0.044715
    %v3709 = vmul.f32 %v3693, %v3638
    %v3710 = vmul.f32 %v3694, %v3640
    %v3711 = vmul.f32 %v3695, %v3643
    %v3712 = vmul.f32 %v3696, %v3645
    %v3713 = vmul.f32 %v3697, %v3648
    %v3714 = vmul.f32 %v3698, %v3650
    %v3715 = vmul.f32 %v3699, %v3653
    %v3716 = vmul.f32 %v3700, %v3655
    %v3717 = vmul.f32 %v3701, %v3658
    %v3718 = vmul.f32 %v3702, %v3660
    %v3719 = vmul.f32 %v3703, %v3663
    %v3720 = vmul.f32 %v3704, %v3665
    %v3721 = vmul.f32 %v3705, %v3668
    %v3722 = vmul.f32 %v3706, %v3670
    %v3723 = vmul.f32 %v3707, %v3673
    %v3724 = vmul.f32 %v3708, %v3675
    %v3725 = vmul.f32 %v3709, %v3638
    %v3726 = vmul.f32 %v3710, %v3640
    %v3727 = vmul.f32 %v3711, %v3643
    %v3728 = vmul.f32 %v3712, %v3645
    %v3729 = vmul.f32 %v3713, %v3648
    %v3730 = vmul.f32 %v3714, %v3650
    %v3731 = vmul.f32 %v3715, %v3653
    %v3732 = vmul.f32 %v3716, %v3655
    %v3733 = vmul.f32 %v3717, %v3658
    %v3734 = vmul.f32 %v3718, %v3660
    %v3735 = vmul.f32 %v3719, %v3663
    %v3736 = vmul.f32 %v3720, %v3665
    %v3737 = vmul.f32 %v3721, %v3668
    %v3738 = vmul.f32 %v3722, %v3670
    %v3739 = vmul.f32 %v3723, %v3673
    %v3740 = vmul.f32 %v3724, %v3675
    %v3741 = vadd.f32 %v3638, %v3725
    %v3742 = vadd.f32 %v3640, %v3726
    %v3743 = vadd.f32 %v3643, %v3727
    %v3744 = vadd.f32 %v3645, %v3728
    %v3745 = vadd.f32 %v3648, %v3729
    %v3746 = vadd.f32 %v3650, %v3730
    %v3747 = vadd.f32 %v3653, %v3731
    %v3748 = vadd.f32 %v3655, %v3732
    %v3749 = vadd.f32 %v3658, %v3733
    %v3750 = vadd.f32 %v3660, %v3734
    %v3751 = vadd.f32 %v3663, %v3735
    %v3752 = vadd.f32 %v3665, %v3736
    %v3753 = vadd.f32 %v3668, %v3737
    %v3754 = vadd.f32 %v3670, %v3738
    %v3755 = vadd.f32 %v3673, %v3739
    %v3756 = vadd.f32 %v3675, %v3740
    %v3757 = vmul.f32 %v3741, 0.7978846
    %v3758 = vmul.f32 %v3742, 0.7978846
    %v3759 = vmul.f32 %v3743, 0.7978846
    %v3760 = vmul.f32 %v3744, 0.7978846
    %v3761 = vmul.f32 %v3745, 0.7978846
    %v3762 = vmul.f32 %v3746, 0.7978846
    %v3763 = vmul.f32 %v3747, 0.7978846
    %v3764 = vmul.f32 %v3748, 0.7978846
    %v3765 = vmul.f32 %v3749, 0.7978846
    %v3766 = vmul.f32 %v3750, 0.7978846
    %v3767 = vmul.f32 %v3751, 0.7978846
    %v3768 = vmul.f32 %v3752, 0.7978846
    %v3769 = vmul.f32 %v3753, 0.7978846
    %v3770 = vmul.f32 %v3754, 0.7978846
    %v3771 = vmul.f32 %v3755, 0.7978846
    %v3772 = vmul.f32 %v3756, 0.7978846
    %v3773 = vtanh.pop %v3757
    %v3774 = vtanh.pop %v3758
    %v3775 = vtanh.pop %v3759
    %v3776 = vtanh.pop %v3760
    %v3777 = vtanh.pop %v3761
    %v3778 = vtanh.pop %v3762
    %v3779 = vtanh.pop %v3763
    %v3780 = vtanh.pop %v3764
    %v3781 = vtanh.pop %v3765
    %v3782 = vtanh.pop %v3766
    %v3783 = vtanh.pop %v3767
    %v3784 = vtanh.pop %v3768
    %v3785 = vtanh.pop %v3769
    %v3786 = vtanh.pop %v3770
    %v3787 = vtanh.pop %v3771
    %v3788 = vtanh.pop %v3772
    %v3789 = vadd.f32 %v3773, 1.0
    %v3790 = vadd.f32 %v3774, 1.0
    %v3791 = vadd.f32 %v3775, 1.0
    %v3792 = vadd.f32 %v3776, 1.0
    %v3793 = vadd.f32 %v3777, 1.0
    %v3794 = vadd.f32 %v3778, 1.0
    %v3795 = vadd.f32 %v3779, 1.0
    %v3796 = vadd.f32 %v3780, 1.0
    %v3797 = vadd.f32 %v3781, 1.0
    %v3798 = vadd.f32 %v3782, 1.0
    %v3799 = vadd.f32 %v3783, 1.0
    %v3800 = vadd.f32 %v3784, 1.0
    %v3801 = vadd.f32 %v3785, 1.0
    %v3802 = vadd.f32 %v3786, 1.0
    %v3803 = vadd.f32 %v3787, 1.0
    %v3804 = vadd.f32 %v3788, 1.0
    %v3805 = vmul.f32 %v3677, %v3789
    %v3806 = vmul.f32 %v3678, %v3790
    %v3807 = vmul.f32 %v3679, %v3791
    %v3808 = vmul.f32 %v3680, %v3792
    %v3809 = vmul.f32 %v3681, %v3793
    %v3810 = vmul.f32 %v3682, %v3794
    %v3811 = vmul.f32 %v3683, %v3795
    %v3812 = vmul.f32 %v3684, %v3796
    %v3813 = vmul.f32 %v3685, %v3797
    %v3814 = vmul.f32 %v3686, %v3798
    %v3815 = vmul.f32 %v3687, %v3799
    %v3816 = vmul.f32 %v3688, %v3800
    %v3817 = vmul.f32 %v3689, %v3801
    %v3818 = vmul.f32 %v3690, %v3802
    %v3819 = vmul.f32 %v3691, %v3803
    %v3820 = vmul.f32 %v3692, %v3804
    %v3821 = vld [vmem:[%s4 + $0x180] sm:$0xf]
    %v3822 = vld [vmem:[%s4 + $0x188] sm:$0xf]
    %v3823 = vld [vmem:[%s4 + $0x190] sm:$0xf]
    %v3824 = vld [vmem:[%s4 + $0x198] sm:$0xf]
    %v3825 = vpack.c.bf16 %v3806, %v3805
    %v3826 = vpack.c.bf16 %v3808, %v3807
    %v3827 = vpack.c.bf16 %v3810, %v3809
    %v3828 = vpack.c.bf16 %v3812, %v3811
    %v3829 = vpack.c.bf16 %v3814, %v3813
    %v3830 = vpack.c.bf16 %v3816, %v3815
    %v3831 = vpack.c.bf16 %v3818, %v3817
    %v3832 = vpack.c.bf16 %v3820, %v3819
    %3833 = vset.pattern.permute.xlu0 14
    %3834 = vperm.xlu0 %3833, %v1530
    %v3835 = vpop.permute.xlu0 %3834
    %3837 = vset.pattern.permute.xlu0 14
    %3838 = vperm.xlu0 %3837, %v1531
    %v3839 = vpop.permute.xlu0 %3838
    %3841 = vset.pattern.permute.xlu0 14
    %3842 = vperm.xlu0 %3841, %v1532
    %v3843 = vpop.permute.xlu0 %3842
    %3845 = vset.pattern.permute.xlu0 14
    %3846 = vperm.xlu0 %3845, %v1533
    %v3847 = vpop.permute.xlu0 %3846
    %v3853 = vunpack.c.l.b16 %v3821
    %v3854 = vunpack.c.l.b16 %v3822
    %v3855 = vunpack.c.l.b16 %v3823
    %v3856 = vunpack.c.l.b16 %v3824
    %v3857 = vpack.c.b16 %v3854, %v3853
    %v3858 = vpack.c.b16 %v3856, %v3855
    %3861 = vmatpush.bf16.msra.mxu0 %v3832
    %3862 = vmatpush.bf16.msra.mxu0 %v3831
    %3863 = vmatpush.bf16.msra.mxu0 %v3830
    %3864 = vmatpush.bf16.msra.mxu0 %v3829
    %3865 = vmatpush.bf16.msra.mxu0 %v3828
    %3866 = vmatpush.bf16.msra.mxu0 %v3827
    %3867 = vmatpush.bf16.msra.mxu0 %v3826
    %3868 = vmatpush.bf16.msra.mxu0 %v3825
    %3869 = vmatmul.bf16.gmra.mxu0 %v3857
    %v3870 = vpop.f32.mrf.mxu0
    %v3871 = vadd.f32 %v3835, %v3870
    %v3872 = vpop.f32.mrf.mxu0
    %v3873 = vadd.f32 %v3839, %v3872
    %3874 = vmatmul.bf16.gmra.mxu0 %v3858
    %v3875 = vpop.f32.mrf.mxu0
    %v3876 = vadd.f32 %v3843, %v3875
    %v3877 = vpop.f32.mrf.mxu0
    %v3878 = vadd.f32 %v3847, %v3877
    %3879 = vdwg.mxu0
    %3880 = vset.pattern.permute.xlu0 15
    %3881 = vperm.xlu0 %3880, %v1530
    %v3882 = vpop.permute.xlu0 %3881
    %3884 = vset.pattern.permute.xlu0 15
    %3885 = vperm.xlu0 %3884, %v1531
    %v3886 = vpop.permute.xlu0 %3885
    %3888 = vset.pattern.permute.xlu0 15
    %3889 = vperm.xlu0 %3888, %v1532
    %v3890 = vpop.permute.xlu0 %3889
    %3892 = vset.pattern.permute.xlu0 15
    %3893 = vperm.xlu0 %3892, %v1533
    %v3894 = vpop.permute.xlu0 %3893
    %v3896 = vmul.f32 %v3882, %v3871
    %v3897 = vmul.f32 %v3886, %v3873
    %v3898 = vmul.f32 %v3890, %v3876
    %v3899 = vmul.f32 %v3894, %v3878
    %v3900 = vadd.f32 %v1612, %v3896
    %v3901 = vadd.f32 %v1614, %v3897
    %v3902 = vadd.f32 %v1617, %v3898
    %v3903 = vadd.f32 %v1619, %v3899
    %v3904 = vld [vmem:[%s4 + $0x1a0] sm:$0x1]
    %v3905 = vpack.c.bf16 %v3901, %v3900
    %v3906 = vpack.c.bf16 %v3903, %v3902
    %3907 = vmatpush.bf16.xpose.msra.mxu0 0
    %3908 = vmatpush.bf16.xpose.msra.mxu0 0
    %3909 = vmatpush.bf16.xpose.msra.mxu0 0
    %3910 = vmatpush.bf16.xpose.msra.mxu0 0
    %3911 = vmatpush.bf16.xpose.msra.mxu0 0
    %3912 = vmatpush.bf16.xpose.msra.mxu0 0
    %3913 = vmatpush.bf16.xpose.msra.mxu0 %v3906
    %3914 = vmatpush.bf16.xpose.msra.mxu0 %v3905
    %3915 = vmatmul.bf16.gmra.mxu0 %v3904
    %v3916 = vpop.f32.mrf.mxu0
    %v3917 = vadd.f32 0.0, %v3916
    %v3918 = vpop.f32.mrf.mxu0
    %3919 = vdwg.mxu0
    %v3920 = vld [vmem:[%s2 + $0x70] sm:$0x1]
    %v3921 = vld [vmem:[%s2 + $0x71] sm:$0x1]
    %vm3922 = vcmask 254976
    %v3923 = vsel %vm3922, %v3917, 0.0
    %3924 = vadd.xlane.f32.xlu0 %v3923
    %v3925 = vpop.xlane.xlu0 %3924
    %v3926 = vmul.f32 %v3925, %v3374
    %v3927 = vsub.f32 %v3917, %v3926
    %v3928 = vmul.f32 %v3927, %v3927
    %v3929 = vsel %vm3922, %v3928, 0.0
    %3930 = vadd.xlane.f32.xlu0 %v3929
    %v3931 = vpop.xlane.xlu0 %3930
    %v3932 = vmul.f32 %v3931, %v3374
    %v3933 = vadd.f32 %v3932, 1e-06
    %v3934 = vrsqrt.pop %v3933
    %v3935 = vmul.f32 %v3934, %v3933
    %v3936 = vmul.f32 %v3935, %v3934
    %v3937 = vmul.f32 0.5, %v3936
    %v3938 = vsub.f32 1.5, %v3937
    %v3939 = vmul.f32 %v3934, %v3938
    %vm3940 = vweird.f32 %v3933
    %vm3941 = vweird.f32 %v3934
    %vm3942 = vmor %vm3940, %vm3941
    %v3943 = vsel %vm3942, %v3934, %v3939
    %v3944 = vmul.f32 %v3927, %v3943
    %v3945 = vperm.slane %v3920, 0
    %v3946 = vmul.f32 %v3944, %v3945
    %v3947 = vperm.slane %v3921, 0
    %v3948 = vadd.f32 %v3946, %v3947
    %v3949 = vld [vmem:[%s2 + $0x72] sm:$0x1]
    %v3950 = vld [vmem:[%s2 + $0x73] sm:$0x1]
    %v3951 = vld [vmem:[%s4 + $0x1b0] sm:$0xff]
    %v3952 = vld [vmem:[%s4 + $0x1b8] sm:$0xff]
    %v3953 = vld [vmem:[%s4 + $0x1c0] sm:$0xff]
    %v3954 = vld [vmem:[%s4 + $0x1c8] sm:$0xff]
    %v3955 = vpack.c.bf16 %v3948, %v3948
    %v3956 = vperm.slane %v3949, 0
    %v3957 = vperm.slane %v3950, 0
    %v3962 = vunpack.c.l.b16 %v3951
    %v3963 = vunpack.c.h.b16 %v3951
    %v3964 = vunpack.c.l.b16 %v3952
    %v3965 = vunpack.c.h.b16 %v3952
    %v3966 = vunpack.c.l.b16 %v3953
    %v3967 = vunpack.c.h.b16 %v3953
    %v3968 = vunpack.c.l.b16 %v3954
    %v3969 = vunpack.c.h.b16 %v3954
    %v3970 = vpack.c.b16 %v3964, %v3962
    %v3971 = vpack.c.b16 %v3965, %v3963
    %v3972 = vpack.c.b16 %v3968, %v3966
    %v3973 = vpack.c.b16 %v3969, %v3967
    %v3979 = vsel %vm3603, %v3955, 0
    %3981 = vmatpush.bf16.msra.mxu0 0
    %3982 = vmatpush.bf16.msra.mxu0 0
    %3983 = vmatpush.bf16.msra.mxu0 0
    %3984 = vmatpush.bf16.msra.mxu0 0
    %3985 = vmatpush.bf16.msra.mxu0 0
    %3986 = vmatpush.bf16.msra.mxu0 0
    %3987 = vmatpush.bf16.msra.mxu0 %v3972
    %3988 = vmatpush.bf16.msra.mxu0 %v3970
    %3989 = vmatmul.bf16.gmra.mxu0 %v3979
    %v3990 = vpop.f32.mrf.mxu0
    %v3991 = vadd.f32 %v3956, %v3990
    %v3992 = vpop.f32.mrf.mxu0
    %3993 = vdwg.mxu0
    %3994 = vmatpush.bf16.msra.mxu0 0
    %3995 = vmatpush.bf16.msra.mxu0 0
    %3996 = vmatpush.bf16.msra.mxu0 0
    %3997 = vmatpush.bf16.msra.mxu0 0
    %3998 = vmatpush.bf16.msra.mxu0 0
    %3999 = vmatpush.bf16.msra.mxu0 0
    %4000 = vmatpush.bf16.msra.mxu0 %v3973
    %4001 = vmatpush.bf16.msra.mxu0 %v3971
    %4002 = vmatmul.bf16.gmra.mxu0 %v3979
    %v4003 = vpop.f32.mrf.mxu0
    %v4004 = vadd.f32 %v3957, %v4003
    %v4005 = vpop.f32.mrf.mxu0
    %4006 = vdwg.mxu0
    %v4007 = vmul.f32 %v3991, 0.5
    %v4008 = vmul.f32 %v4004, 0.5
    %v4009 = vtanh.pop %v4007
    %v4010 = vtanh.pop %v4008
    %v4011 = vadd.f32 %v4009, 1.0
    %v4012 = vadd.f32 %v4010, 1.0
    %v4013 = vmul.f32 %v4011, 0.5
    %v4014 = vmul.f32 %v4012, 0.5
    %v4017 = vrot.slane %v4014, 6
    %vm4018 = vcmask 1041408
    %v4019 = vsel %vm4018, %v4013, %v4017
    %4021 = vst [vmem:[#allocation2] sm:$0xf] %v4019
    // Predicated region
    $region22: #{convnext_bird_forward.1} parent=1 // pred_check
      _
    $region23: #{convnext_bird_forward.1} parent=1 // pred_check_branch
      %4023 = sbr.rel (0) target = $region25
    $region24: #{convnext_bird_forward.1} parent=1 // pred_region
      %4025 = vsyncadd [#allocation3], 0
      %s4027 = sshll.u32 [#allocation2], 4
      %s4028 = int_to_ptr.vmem [resolvable:$true] %s4027
      %s4029 = sshll.u32 %s5, 4
      %s4030 = int_to_ptr.hbm [resolvable:$true] %s4029
      %4032 = dma.vmem_to_hbm [thread:$0]  %s4028, 64, %s4030, [#allocation3]
    $region25: #{convnext_bird_forward.1} parent=1 // pred_fallthru
      _
    // Predicated region
    $region26: #{convnext_bird_forward.1} parent=1 // pred_check
      _
    $region27: #{convnext_bird_forward.1} parent=1 // pred_check_branch
      %4034 = sbr.rel (0) target = $region29
    $region28: #{convnext_bird_forward.1} parent=1 // pred_region
      %4036 = dma.done [#allocation3], 64
    $region29: #{convnext_bird_forward.1} parent=1 // pred_fallthru
      _
    %4037 = vsyncpa [#allocation3], 1

</llo_original>
